<compile_context>
chip_gen: v7x
topology: tpu7x:2x2x1
jax: 0.10.0
libtpu: 0.0.40
codegen_flags: <defaults>
</compile_context>

<pallas_src>
import functools

import jax
import jax.numpy as jnp
import numpy as np
from jax.experimental import pallas as pl
from jax.experimental.pallas import tpu as pltpu

EPS = 1e-5  # nn.BatchNorm2d default eps


# ----------------------------------------------------------------------------
# In-kernel helpers
# ----------------------------------------------------------------------------
def _conv3x3_grouped(src, w_ref, acc_ref, h, w):
    """3x3 'same' conv as 3 MXU matmuls with K = 3*Cin.

    src:     (TB, H+2, W+2, Cin) bf16 value (1-pixel zero halo already present)
    w_ref:   (3, 3*Cin, Cout) bf16 ref, contraction index = kw*Cin + cin
    acc_ref: (TB*H*W, Cout) f32 VMEM scratch (overwritten, then accumulated).
    """
    tb, _, _, cin = src.shape
    mt = tb * h * w
    for kh in range(3):
        # Group the three kw taps along the channel axis -> K = 3*Cin per push.
        tap = jnp.concatenate(
            [src[:, kh:kh + h, kw:kw + w, :] for kw in range(3)],
            axis=-1).reshape(mt, 3 * cin)
        contrib = jnp.dot(tap, w_ref[kh], preferred_element_type=jnp.float32)
        if kh == 0:
            acc_ref[...] = contrib          # first tap: no zero-init pass
        else:
            acc_ref[...] += contrib


def _partial_stats(y, mt):
    """Per-tile sum and *centered* sum of squares (for Chan's combine)."""
    s = jnp.sum(y, axis=0, keepdims=True)                     # (1, P)
    mu = s * (1.0 / mt)
    m2 = jnp.sum(jnp.square(y - mu), axis=0, keepdims=True)   # (1, P)
    return jnp.concatenate([s, m2], axis=0)                   # (2, P)


# ----------------------------------------------------------------------------
# Pass A: conv1 + per-tile BN1 partial stats
# ----------------------------------------------------------------------------
def _conv1_kernel(xpad_ref, w1_ref, y1_ref, st1_ref, acc_ref, *, tb, h, w, p):
    mt = tb * h * w
    _conv3x3_grouped(xpad_ref[...], w1_ref, acc_ref, h, w)
    y = acc_ref[...]                                  # (mt, P) f32 pre-BN conv1
    y1_ref[...] = y
    st1_ref[...] = _partial_stats(y, mt).reshape(1, 2, p)


# ----------------------------------------------------------------------------
# Pass B: bn1 + relu -> conv2 + per-tile BN2 partial stats
# ----------------------------------------------------------------------------
def _bn1_relu_conv2_kernel(y1_ref, s1_ref, b1_ref, w2_ref, y2_ref, st2_ref,
                           hpad_ref, acc_ref, *, tb, h, w, p):
    mt = tb * h * w
    # bn1 (folded scale/bias) + relu in f32; cast to bf16 only at the store.
    a1 = jnp.maximum(y1_ref[...] * s1_ref[...] + b1_ref[...], 0.0)   # (mt, P)

    # Zero only the 1-pixel halo ring (interior is overwritten right after).
    zrow = jnp.zeros((tb, 1, w + 2, p), jnp.bfloat16)
    zcol = jnp.zeros((tb, h, 1, p), jnp.bfloat16)
    hpad_ref[:, 0:1, :, :] = zrow
    hpad_ref[:, h + 1:h + 2, :, :] = zrow
    hpad_ref[:, 1:h + 1, 0:1, :] = zcol
    hpad_ref[:, 1:h + 1, w + 1:w + 2, :] = zcol
    hpad_ref[:, 1:h + 1, 1:w + 1, :] = a1.reshape(tb, h, w, p).astype(jnp.bfloat16)

    _conv3x3_grouped(hpad_ref[...], w2_ref, acc_ref, h, w)
    y = acc_ref[...]                                  # (mt, P) f32 pre-BN conv2
    y2_ref[...] = y
    st2_ref[...] = _partial_stats(y, mt).reshape(1, 2, p)


# ----------------------------------------------------------------------------
# Pass C: bn2 + residual add + relu
# ----------------------------------------------------------------------------
def _bn2_add_relu_kernel(y2_ref, xid_ref, s2_ref, b2_ref, out_ref):
    out_ref[...] = jnp.maximum(
        y2_ref[...] * s2_ref[...] + b2_ref[...] + xid_ref[...], 0.0)


# ----------------------------------------------------------------------------
# Wrapper-side glue: combine per-tile partial stats into BN scale/bias
# ----------------------------------------------------------------------------
def _fold_bn(stats, gamma, beta, m_tile, m_total):
    """Chan's parallel-variance combine of per-tile (sum, centered M2)."""
    tile_sum = stats[:, 0, :]                          # (NT, P)
    tile_m2 = stats[:, 1, :]
    tile_mean = tile_sum / m_tile
    mean = jnp.sum(tile_sum, axis=0) / m_total
    m2 = jnp.sum(tile_m2, axis=0) + m_tile * jnp.sum(
        jnp.square(tile_mean - mean), axis=0)
    var = m2 / m_total                                 # biased (training-mode BN)
    scale = gamma * jax.lax.rsqrt(var + EPS)
    bias = beta - mean * scale
    return scale.reshape(1, -1), bias.reshape(1, -1)


# ----------------------------------------------------------------------------
# Forward
# ----------------------------------------------------------------------------
def basic_block_forward(x_nchw, params, *, batch_tile=1):
    """ResNet BasicBlock forward (stride=1, downsample=None), training-mode BN."""
    x = jnp.transpose(x_nchw, (0, 2, 3, 1)).astype(jnp.float32)   # NCHW -> NHWC
    n, h, w, c = x.shape
    p = params["w1"].shape[-1]
    assert c == p, "downsample=None requires inplanes == planes"
    assert n % batch_tile == 0
    tb = batch_tile
    nt = n // tb
    mt = tb * h * w
    m = n * h * w

    # bf16 MXU operands (activations + weights); accumulation stays f32.
    xpad = jnp.pad(x, ((0, 0), (1, 1), (1, 1), (0, 0))).astype(jnp.bfloat16)
    w1 = params["w1"].astype(jnp.bfloat16).reshape(3, 3 * c, p)   # (kh, kw*Cin+cin, Cout)
    w2 = params["w2"].astype(jnp.bfloat16).reshape(3, 3 * p, p)

    # <= ~48 MiB leaves headroom on v7x (64 MiB physical VMEM); on v5e/v6e
    # (128 MiB) raise this together with batch_tile for bigger tiles.
    cparams = pltpu.CompilerParams(
        dimension_semantics=("parallel",),
        vmem_limit_bytes=48 * 1024 * 1024)

    # ---------------- pass A: conv1 + BN1 partial stats ----------------------
    y1, st1 = pl.pallas_call(
        functools.partial(_conv1_kernel, tb=tb, h=h, w=w, p=p),
        out_shape=(jax.ShapeDtypeStruct((m, p), jnp.float32),
                   jax.ShapeDtypeStruct((nt, 2, p), jnp.float32)),
        grid_spec=pltpu.PrefetchScalarGridSpec(
            num_scalar_prefetch=0, grid=(nt,),
            in_specs=[pl.BlockSpec((tb, h + 2, w + 2, c), lambda i: (i, 0, 0, 0)),
                      pl.BlockSpec((3, 3 * c, p), lambda i: (0, 0, 0))],
            out_specs=[pl.BlockSpec((mt, p), lambda i: (i, 0)),
                       pl.BlockSpec((1, 2, p), lambda i: (i, 0, 0))],
            scratch_shapes=[pltpu.VMEM((mt, p), jnp.float32)]),
        compiler_params=cparams,
        cost_estimate=pl.CostEstimate(flops=2 * m * 9 * c * p, transcendentals=0,
                                      bytes_accessed=2 * xpad.size + 4 * m * p),
    )(xpad, w1)

    scale1, bias1 = _fold_bn(st1, params["gamma1"].astype(jnp.float32),
                             params["beta1"].astype(jnp.float32), mt, m)

    # ---------------- pass B: bn1 + relu -> conv2 + BN2 partial stats --------
    y2, st2 = pl.pallas_call(
        functools.partial(_bn1_relu_conv2_kernel, tb=tb, h=h, w=w, p=p),
        out_shape=(jax.ShapeDtypeStruct((m, p), jnp.float32),
                   jax.ShapeDtypeStruct((nt, 2, p), jnp.float32)),
        grid_spec=pltpu.PrefetchScalarGridSpec(
            num_scalar_prefetch=0, grid=(nt,),
            in_specs=[pl.BlockSpec((mt, p), lambda i: (i, 0)),
                      pl.BlockSpec((1, p), lambda i: (0, 0)),
                      pl.BlockSpec((1, p), lambda i: (0, 0)),
                      pl.BlockSpec((3, 3 * p, p), lambda i: (0, 0, 0))],
            out_specs=[pl.BlockSpec((mt, p), lambda i: (i, 0)),
                       pl.BlockSpec((1, 2, p), lambda i: (i, 0, 0))],
            scratch_shapes=[pltpu.VMEM((tb, h + 2, w + 2, p), jnp.bfloat16),
                            pltpu.VMEM((mt, p), jnp.float32)]),
        compiler_params=cparams,
        cost_estimate=pl.CostEstimate(flops=2 * m * 9 * p * p + 4 * m * p,
                                      transcendentals=0,
                                      bytes_accessed=12 * m * p),
    )(y1, scale1, bias1, w2)

    scale2, bias2 = _fold_bn(st2, params["gamma2"].astype(jnp.float32),
                             params["beta2"].astype(jnp.float32), mt, m)

    # ---------------- pass C: bn2 + residual add + relu ----------------------
    xid = x.reshape(m, c)                              # identity (inplanes == planes)
    out = pl.pallas_call(
        _bn2_add_relu_kernel,
        out_shape=jax.ShapeDtypeStruct((m, p), jnp.float32),
        grid_spec=pltpu.PrefetchScalarGridSpec(
            num_scalar_prefetch=0, grid=(nt,),
            in_specs=[pl.BlockSpec((mt, p), lambda i: (i, 0)),
                      pl.BlockSpec((mt, c), lambda i: (i, 0)),
                      pl.BlockSpec((1, p), lambda i: (0, 0)),
                      pl.BlockSpec((1, p), lambda i: (0, 0))],
            out_specs=pl.BlockSpec((mt, p), lambda i: (i, 0))),
        compiler_params=cparams,
    )(y2, xid, scale2, bias2)

    return jnp.transpose(out.reshape(n, h, w, p), (0, 3, 1, 2))    # NHWC -> NCHW


# ----------------------------------------------------------------------------
# Pure-JAX f32 reference (training-mode BN), used to validate the kernels.
# ----------------------------------------------------------------------------
def _reference(x_nchw, params):
    x = jnp.transpose(x_nchw, (0, 2, 3, 1)).astype(jnp.float32)

    def conv(inp, wgt):  # NHWC x HWIO, stride 1, pad 1, no bias
        return jax.lax.conv_general_dilated(
            inp, wgt, (1, 1), ((1, 1), (1, 1)),
            dimension_numbers=("NHWC", "HWIO", "NHWC"))

    def bn(y, g, b):
        mean = jnp.mean(y, axis=(0, 1, 2))
        var = jnp.mean(jnp.square(y - mean), axis=(0, 1, 2))  # biased
        return g * (y - mean) * jax.lax.rsqrt(var + EPS) + b

    h1 = jnp.maximum(bn(conv(x, params["w1"]), params["gamma1"], params["beta1"]), 0.0)
    h2 = bn(conv(h1, params["w2"]), params["gamma2"], params["beta2"]) + x
    return jnp.transpose(jnp.maximum(h2, 0.0), (0, 3, 1, 2))


# ----------------------------------------------------------------------------
# Deterministic synthetic parameters + example run
# ----------------------------------------------------------------------------
def _q_bf16(a):
    # Round values onto the bf16 grid (kept in f32) so the bf16 MXU path and
    # the f32 reference see identical inputs; the remaining kernel/reference
    # deviation then comes only from the bf16 cast of the intermediate
    # activation feeding conv2 (bounded well below the test tolerance).
    return a.astype(jnp.bfloat16).astype(jnp.float32)


if __name__ == "__main__":
    N, C, H, W = 2, 4, 16, 16          # batch=2, channels=4, spatial=16
    planes = C                          # inplanes == planes (downsample=None)

    key = jax.random.PRNGKey(0)
    kx, kw1, kw2, kg1, kb1, kg2, kb2 = jax.random.split(key, 7)

    x = _q_bf16(jax.random.normal(kx, (N, C, H, W), dtype=jnp.float32))

    params = {
        # conv weights in HWIO layout (3, 3, Cin, Cout); conv3x3 has bias=False.
        "w1": _q_bf16(0.1 * jax.random.normal(kw1, (3, 3, C, planes), jnp.float32)),
        "w2": _q_bf16(0.1 * jax.random.normal(kw2, (3, 3, planes, planes), jnp.float32)),
        # BatchNorm affine params (perturbed so the affine path is exercised).
        "gamma1": 1.0 + 0.1 * jax.random.normal(kg1, (planes,), jnp.float32),
        "beta1": 0.1 * jax.random.normal(kb1, (planes,), jnp.float32),
        "gamma2": 1.0 + 0.1 * jax.random.normal(kg2, (planes,), jnp.float32),
        "beta2": 0.1 * jax.random.normal(kb2, (planes,), jnp.float32),
    }

    out = jax.jit(basic_block_forward)(x, params)
    out = jax.block_until_ready(out)

    assert out.shape == (N, planes, H, W), out.shape
    assert out.dtype == jnp.float32
    assert bool(jnp.all(out >= 0.0))          # final ReLU
    assert bool(jnp.all(jnp.isfinite(out)))

    ref = jax.block_until_ready(_reference(x, params))
    # bf16 MXU operands (bf16 cast of the conv2 input activation) bound the
    # deviation vs. the all-f32 reference; 2e-2 leaves ample margin.
    np.testing.assert_allclose(np.asarray(out), np.asarray(ref),
                               rtol=2e-2, atol=2e-2)

    print("KERNEL_OK")
</pallas_src>

<mosaic_0001>
module attributes {stable_mosaic.version = 11 : i64} {
  func.func @_conv1_kernel(%arg0: i32, %arg1: memref<1x18x18x4xbf16, #tpu.memory_space<vmem>>, %arg2: memref<3x12x4xbf16, #tpu.memory_space<vmem>>, %arg3: memref<256x4xf32, #tpu.memory_space<vmem>>, %arg4: memref<1x2x4xf32, #tpu.memory_space<vmem>>, %arg5: memref<256x4xf32, #tpu.memory_space<vmem>>) attributes {dimension_semantics = [#tpu.dimension_semantics<parallel>], iteration_bounds = array<i64: 2>, scalar_prefetch = 0 : i64, scratch_operands = 1 : i64, tpu.core_type = #tpu.core_type<tc>, window_params = [{transform_indices = @transform_0, window_bounds = array<i64: 1, 18, 18, 4>}, {pipeline_mode = #tpu.pipeline_mode<synchronous>, transform_indices = @transform_1, window_bounds = array<i64: 3, 12, 4>}, {transform_indices = @transform_2, window_bounds = array<i64: 256, 4>}, {transform_indices = @transform_3, window_bounds = array<i64: 1, 2, 4>}]} {
    %c0 = arith.constant 0 : index
    %c0_0 = arith.constant 0 : index
    %c0_1 = arith.constant 0 : index
    %c0_2 = arith.constant 0 : index
    %0 = vector.load %arg1[%c0, %c0_0, %c0_1, %c0_2] : memref<1x18x18x4xbf16, #tpu.memory_space<vmem>>, vector<1x18x18x4xbf16>
    %1 = vector.extract_strided_slice %0 {offsets = [0, 0, 0, 0], sizes = [1, 16, 16, 4], strides = [1, 1, 1, 1]} : vector<1x18x18x4xbf16> to vector<1x16x16x4xbf16>
    %2 = vector.extract_strided_slice %0 {offsets = [0, 0, 1, 0], sizes = [1, 16, 16, 4], strides = [1, 1, 1, 1]} : vector<1x18x18x4xbf16> to vector<1x16x16x4xbf16>
    %3 = vector.extract_strided_slice %0 {offsets = [0, 0, 2, 0], sizes = [1, 16, 16, 4], strides = [1, 1, 1, 1]} : vector<1x18x18x4xbf16> to vector<1x16x16x4xbf16>
    %4 = tpu.concatenate %1, %2, %3 in 3 : vector<1x16x16x4xbf16>, vector<1x16x16x4xbf16>, vector<1x16x16x4xbf16> -> vector<1x16x16x12xbf16>
    %5 = vector.shape_cast %4 : vector<1x16x16x12xbf16> to vector<256x12xbf16>
    %c0_3 = arith.constant 0 : index
    %c0_4 = arith.constant 0 : index
    %c0_5 = arith.constant 0 : index
    %6 = vector.load %arg2[%c0_3, %c0_4, %c0_5] : memref<3x12x4xbf16, #tpu.memory_space<vmem>>, vector<1x12x4xbf16>
    %7 = vector.shape_cast %6 : vector<1x12x4xbf16> to vector<12x4xbf16>
    %cst = arith.constant dense<0.000000e+00> : vector<256x4xf32>
    %8 = tpu.matmul %5, %7, %cst {dimension_numbers = #tpu.dot_dimension_numbers<[1], [0], [0], [1], [0, 0, 1, 1], [], []>} : vector<256x12xbf16>, vector<12x4xbf16>, vector<256x4xf32> -> vector<256x4xf32>
    %c0_6 = arith.constant 0 : index
    %c0_7 = arith.constant 0 : index
    %9 = vector.load %arg5[%c0_6, %c0_7] : memref<256x4xf32, #tpu.memory_space<vmem>>, vector<256x4xf32>
    tpu.vector_store %arg5[%c0_6, %c0_7], %8 {strides = array<i32>} : memref<256x4xf32, #tpu.memory_space<vmem>>, vector<256x4xf32>,
    %10 = vector.extract_strided_slice %0 {offsets = [0, 1, 0, 0], sizes = [1, 16, 16, 4], strides = [1, 1, 1, 1]} : vector<1x18x18x4xbf16> to vector<1x16x16x4xbf16>
    %11 = vector.extract_strided_slice %0 {offsets = [0, 1, 1, 0], sizes = [1, 16, 16, 4], strides = [1, 1, 1, 1]} : vector<1x18x18x4xbf16> to vector<1x16x16x4xbf16>
    %12 = vector.extract_strided_slice %0 {offsets = [0, 1, 2, 0], sizes = [1, 16, 16, 4], strides = [1, 1, 1, 1]} : vector<1x18x18x4xbf16> to vector<1x16x16x4xbf16>
    %13 = tpu.concatenate %10, %11, %12 in 3 : vector<1x16x16x4xbf16>, vector<1x16x16x4xbf16>, vector<1x16x16x4xbf16> -> vector<1x16x16x12xbf16>
    %14 = vector.shape_cast %13 : vector<1x16x16x12xbf16> to vector<256x12xbf16>
    %c1 = arith.constant 1 : index
    %c0_8 = arith.constant 0 : index
    %c0_9 = arith.constant 0 : index
    %15 = vector.load %arg2[%c1, %c0_8, %c0_9] : memref<3x12x4xbf16, #tpu.memory_space<vmem>>, vector<1x12x4xbf16>
    %16 = vector.shape_cast %15 : vector<1x12x4xbf16> to vector<12x4xbf16>
    %cst_10 = arith.constant dense<0.000000e+00> : vector<256x4xf32>
    %17 = tpu.matmul %14, %16, %cst_10 {dimension_numbers = #tpu.dot_dimension_numbers<[1], [0], [0], [1], [0, 0, 1, 1], [], []>} : vector<256x12xbf16>, vector<12x4xbf16>, vector<256x4xf32> -> vector<256x4xf32>
    %c0_11 = arith.constant 0 : index
    %c0_12 = arith.constant 0 : index
    %18 = vector.load %arg5[%c0_11, %c0_12] : memref<256x4xf32, #tpu.memory_space<vmem>>, vector<256x4xf32>
    %19 = arith.addf %18, %17 : vector<256x4xf32>
    %c0_13 = arith.constant 0 : index
    %c0_14 = arith.constant 0 : index
    %20 = vector.load %arg5[%c0_13, %c0_14] : memref<256x4xf32, #tpu.memory_space<vmem>>, vector<256x4xf32>
    tpu.vector_store %arg5[%c0_13, %c0_14], %19 {strides = array<i32>} : memref<256x4xf32, #tpu.memory_space<vmem>>, vector<256x4xf32>,
    %21 = vector.extract_strided_slice %0 {offsets = [0, 2, 0, 0], sizes = [1, 16, 16, 4], strides = [1, 1, 1, 1]} : vector<1x18x18x4xbf16> to vector<1x16x16x4xbf16>
    %22 = vector.extract_strided_slice %0 {offsets = [0, 2, 1, 0], sizes = [1, 16, 16, 4], strides = [1, 1, 1, 1]} : vector<1x18x18x4xbf16> to vector<1x16x16x4xbf16>
    %23 = vector.extract_strided_slice %0 {offsets = [0, 2, 2, 0], sizes = [1, 16, 16, 4], strides = [1, 1, 1, 1]} : vector<1x18x18x4xbf16> to vector<1x16x16x4xbf16>
    %24 = tpu.concatenate %21, %22, %23 in 3 : vector<1x16x16x4xbf16>, vector<1x16x16x4xbf16>, vector<1x16x16x4xbf16> -> vector<1x16x16x12xbf16>
    %25 = vector.shape_cast %24 : vector<1x16x16x12xbf16> to vector<256x12xbf16>
    %c2 = arith.constant 2 : index
    %c0_15 = arith.constant 0 : index
    %c0_16 = arith.constant 0 : index
    %26 = vector.load %arg2[%c2, %c0_15, %c0_16] : memref<3x12x4xbf16, #tpu.memory_space<vmem>>, vector<1x12x4xbf16>
    %27 = vector.shape_cast %26 : vector<1x12x4xbf16> to vector<12x4xbf16>
    %cst_17 = arith.constant dense<0.000000e+00> : vector<256x4xf32>
    %28 = tpu.matmul %25, %27, %cst_17 {dimension_numbers = #tpu.dot_dimension_numbers<[1], [0], [0], [1], [0, 0, 1, 1], [], []>} : vector<256x12xbf16>, vector<12x4xbf16>, vector<256x4xf32> -> vector<256x4xf32>
    %c0_18 = arith.constant 0 : index
    %c0_19 = arith.constant 0 : index
    %29 = vector.load %arg5[%c0_18, %c0_19] : memref<256x4xf32, #tpu.memory_space<vmem>>, vector<256x4xf32>
    %30 = arith.addf %29, %28 : vector<256x4xf32>
    %c0_20 = arith.constant 0 : index
    %c0_21 = arith.constant 0 : index
    %31 = vector.load %arg5[%c0_20, %c0_21] : memref<256x4xf32, #tpu.memory_space<vmem>>, vector<256x4xf32>
    tpu.vector_store %arg5[%c0_20, %c0_21], %30 {strides = array<i32>} : memref<256x4xf32, #tpu.memory_space<vmem>>, vector<256x4xf32>,
    %c0_22 = arith.constant 0 : index
    %c0_23 = arith.constant 0 : index
    %32 = vector.load %arg5[%c0_22, %c0_23] : memref<256x4xf32, #tpu.memory_space<vmem>>, vector<256x4xf32>
    %c0_24 = arith.constant 0 : index
    %c0_25 = arith.constant 0 : index
    %33 = vector.load %arg3[%c0_24, %c0_25] : memref<256x4xf32, #tpu.memory_space<vmem>>, vector<256x4xf32>
    tpu.vector_store %arg3[%c0_24, %c0_25], %32 {strides = array<i32>} : memref<256x4xf32, #tpu.memory_space<vmem>>, vector<256x4xf32>,
    %cst_26 = arith.constant dense<0.000000e+00> : vector<4xf32>
    %34 = vector.multi_reduction <add>, %32, %cst_26 [0] : vector<256x4xf32> to vector<4xf32>
    %35 = vector.shape_cast %34 : vector<4xf32> to vector<1x4xf32>
    %cst_27 = arith.constant 3.906250e-03 : f32
    %36 = vector.broadcast %cst_27 : f32 to vector<1x4xf32>
    %37 = arith.mulf %35, %36 : vector<1x4xf32>
    %38 = vector.broadcast %37 : vector<1x4xf32> to vector<256x4xf32>
    %39 = arith.subf %32, %38 : vector<256x4xf32>
    %40 = arith.mulf %39, %39 : vector<256x4xf32>
    %cst_28 = arith.constant dense<0.000000e+00> : vector<4xf32>
    %41 = vector.multi_reduction <add>, %40, %cst_28 [0] : vector<256x4xf32> to vector<4xf32>
    %42 = vector.shape_cast %41 : vector<4xf32> to vector<1x4xf32>
    %43 = tpu.concatenate %35, %42 in 0 : vector<1x4xf32>, vector<1x4xf32> -> vector<2x4xf32>
    %44 = vector.shape_cast %43 : vector<2x4xf32> to vector<1x2x4xf32>
    %c0_29 = arith.constant 0 : index
    %c0_30 = arith.constant 0 : index
    %c0_31 = arith.constant 0 : index
    %45 = vector.load %arg4[%c0_29, %c0_30, %c0_31] : memref<1x2x4xf32, #tpu.memory_space<vmem>>, vector<1x2x4xf32>
    tpu.vector_store %arg4[%c0_29, %c0_30, %c0_31], %44 {strides = array<i32>} : memref<1x2x4xf32, #tpu.memory_space<vmem>>, vector<1x2x4xf32>,
    return
  }
  func.func @transform_0(%arg0: i32) -> (i32, i32, i32, i32) {
    %c0_i32 = arith.constant 0 : i32
    %c0_i32_0 = arith.constant 0 : i32
    %c0_i32_1 = arith.constant 0 : i32
    %c0_i32_2 = arith.constant 0 : i32
    return %arg0, %c0_i32, %c0_i32_0, %c0_i32_1 : i32, i32, i32, i32
  }
  func.func @transform_1(%arg0: i32) -> (i32, i32, i32) {
    %c0_i32 = arith.constant 0 : i32
    %c0_i32_0 = arith.constant 0 : i32
    %c0_i32_1 = arith.constant 0 : i32
    %c0_i32_2 = arith.constant 0 : i32
    return %c0_i32, %c0_i32_0, %c0_i32_1 : i32, i32, i32
  }
  func.func @transform_2(%arg0: i32) -> (i32, i32) {
    %c0_i32 = arith.constant 0 : i32
    %c0_i32_0 = arith.constant 0 : i32
    return %arg0, %c0_i32 : i32, i32
  }
  func.func @transform_3(%arg0: i32) -> (i32, i32, i32) {
    %c0_i32 = arith.constant 0 : i32
    %c0_i32_0 = arith.constant 0 : i32
    %c0_i32_1 = arith.constant 0 : i32
    return %arg0, %c0_i32, %c0_i32_0 : i32, i32, i32
  }
}

module attributes {stable_mosaic.version = 11 : i64} {
  func.func @_bn2_add_relu_kernel(%arg0: i32, %arg1: memref<256x4xf32, #tpu.memory_space<vmem>>, %arg2: memref<256x4xf32, #tpu.memory_space<vmem>>, %arg3: memref<1x4xf32, #tpu.memory_space<vmem>>, %arg4: memref<1x4xf32, #tpu.memory_space<vmem>>, %arg5: memref<256x4xf32, #tpu.memory_space<vmem>>) attributes {dimension_semantics = [#tpu.dimension_semantics<parallel>], iteration_bounds = array<i64: 2>, scalar_prefetch = 0 : i64, scratch_operands = 0 : i64, tpu.core_type = #tpu.core_type<tc>, window_params = [{transform_indices = @transform_0, window_bounds = array<i64: 256, 4>}, {transform_indices = @transform_1, window_bounds = array<i64: 256, 4>}, {pipeline_mode = #tpu.pipeline_mode<synchronous>, transform_indices = @transform_2, window_bounds = array<i64: 1, 4>}, {pipeline_mode = #tpu.pipeline_mode<synchronous>, transform_indices = @transform_3, window_bounds = array<i64: 1, 4>}, {transform_indices = @transform_4, window_bounds = array<i64: 256, 4>}]} {
    %c0 = arith.constant 0 : index
    %c0_0 = arith.constant 0 : index
    %0 = vector.load %arg1[%c0, %c0_0] : memref<256x4xf32, #tpu.memory_space<vmem>>, vector<256x4xf32>
    %c0_1 = arith.constant 0 : index
    %c0_2 = arith.constant 0 : index
    %1 = vector.load %arg3[%c0_1, %c0_2] : memref<1x4xf32, #tpu.memory_space<vmem>>, vector<1x4xf32>
    %2 = vector.broadcast %1 : vector<1x4xf32> to vector<256x4xf32>
    %3 = arith.mulf %0, %2 : vector<256x4xf32>
    %c0_3 = arith.constant 0 : index
    %c0_4 = arith.constant 0 : index
    %4 = vector.load %arg4[%c0_3, %c0_4] : memref<1x4xf32, #tpu.memory_space<vmem>>, vector<1x4xf32>
    %5 = vector.broadcast %4 : vector<1x4xf32> to vector<256x4xf32>
    %6 = arith.addf %3, %5 : vector<256x4xf32>
    %c0_5 = arith.constant 0 : index
    %c0_6 = arith.constant 0 : index
    %7 = vector.load %arg2[%c0_5, %c0_6] : memref<256x4xf32, #tpu.memory_space<vmem>>, vector<256x4xf32>
    %8 = arith.addf %6, %7 : vector<256x4xf32>
    %cst = arith.constant 0.000000e+00 : f32
    %9 = vector.broadcast %cst : f32 to vector<256x4xf32>
    %10 = arith.maximumf %8, %9 : vector<256x4xf32>
    %c0_7 = arith.constant 0 : index
    %c0_8 = arith.constant 0 : index
    %11 = vector.load %arg5[%c0_7, %c0_8] : memref<256x4xf32, #tpu.memory_space<vmem>>, vector<256x4xf32>
    tpu.vector_store %arg5[%c0_7, %c0_8], %10 {strides = array<i32>} : memref<256x4xf32, #tpu.memory_space<vmem>>, vector<256x4xf32>,
    return
  }
  func.func @transform_0(%arg0: i32) -> (i32, i32) {
    %c0_i32 = arith.constant 0 : i32
    %c0_i32_0 = arith.constant 0 : i32
    return %arg0, %c0_i32 : i32, i32
  }
  func.func @transform_1(%arg0: i32) -> (i32, i32) {
    %c0_i32 = arith.constant 0 : i32
    %c0_i32_0 = arith.constant 0 : i32
    return %arg0, %c0_i32 : i32, i32
  }
  func.func @transform_2(%arg0: i32) -> (i32, i32) {
    %c0_i32 = arith.constant 0 : i32
    %c0_i32_0 = arith.constant 0 : i32
    %c0_i32_1 = arith.constant 0 : i32
    return %c0_i32, %c0_i32_0 : i32, i32
  }
  func.func @transform_3(%arg0: i32) -> (i32, i32) {
    %c0_i32 = arith.constant 0 : i32
    %c0_i32_0 = arith.constant 0 : i32
    %c0_i32_1 = arith.constant 0 : i32
    return %c0_i32, %c0_i32_0 : i32, i32
  }
  func.func @transform_4(%arg0: i32) -> (i32, i32) {
    %c0_i32 = arith.constant 0 : i32
    %c0_i32_0 = arith.constant 0 : i32
    return %arg0, %c0_i32 : i32, i32
  }
}

module attributes {stable_mosaic.version = 11 : i64} {
  func.func @_bn1_relu_conv2_kernel(%arg0: i32, %arg1: memref<256x4xf32, #tpu.memory_space<vmem>>, %arg2: memref<1x4xf32, #tpu.memory_space<vmem>>, %arg3: memref<1x4xf32, #tpu.memory_space<vmem>>, %arg4: memref<3x12x4xbf16, #tpu.memory_space<vmem>>, %arg5: memref<256x4xf32, #tpu.memory_space<vmem>>, %arg6: memref<1x2x4xf32, #tpu.memory_space<vmem>>, %arg7: memref<1x18x18x4xbf16, #tpu.memory_space<vmem>>, %arg8: memref<256x4xf32, #tpu.memory_space<vmem>>) attributes {dimension_semantics = [#tpu.dimension_semantics<parallel>], iteration_bounds = array<i64: 2>, scalar_prefetch = 0 : i64, scratch_operands = 2 : i64, tpu.core_type = #tpu.core_type<tc>, window_params = [{transform_indices = @transform_0, window_bounds = array<i64: 256, 4>}, {pipeline_mode = #tpu.pipeline_mode<synchronous>, transform_indices = @transform_1, window_bounds = array<i64: 1, 4>}, {pipeline_mode = #tpu.pipeline_mode<synchronous>, transform_indices = @transform_2, window_bounds = array<i64: 1, 4>}, {pipeline_mode = #tpu.pipeline_mode<synchronous>, transform_indices = @transform_3, window_bounds = array<i64: 3, 12, 4>}, {transform_indices = @transform_4, window_bounds = array<i64: 256, 4>}, {transform_indices = @transform_5, window_bounds = array<i64: 1, 2, 4>}]} {
    %c0 = arith.constant 0 : index
    %c0_0 = arith.constant 0 : index
    %0 = vector.load %arg1[%c0, %c0_0] : memref<256x4xf32, #tpu.memory_space<vmem>>, vector<256x4xf32>
    %c0_1 = arith.constant 0 : index
    %c0_2 = arith.constant 0 : index
    %1 = vector.load %arg2[%c0_1, %c0_2] : memref<1x4xf32, #tpu.memory_space<vmem>>, vector<1x4xf32>
    %2 = vector.broadcast %1 : vector<1x4xf32> to vector<256x4xf32>
    %3 = arith.mulf %0, %2 : vector<256x4xf32>
    %c0_3 = arith.constant 0 : index
    %c0_4 = arith.constant 0 : index
    %4 = vector.load %arg3[%c0_3, %c0_4] : memref<1x4xf32, #tpu.memory_space<vmem>>, vector<1x4xf32>
    %5 = vector.broadcast %4 : vector<1x4xf32> to vector<256x4xf32>
    %6 = arith.addf %3, %5 : vector<256x4xf32>
    %cst = arith.constant 0.000000e+00 : f32
    %7 = vector.broadcast %cst : f32 to vector<256x4xf32>
    %8 = arith.maximumf %6, %7 : vector<256x4xf32>
    %cst_5 = arith.constant 0.000000e+00 : bf16
    %9 = vector.broadcast %cst_5 : bf16 to vector<1x1x18x4xbf16>
    %cst_6 = arith.constant 0.000000e+00 : bf16
    %10 = vector.broadcast %cst_6 : bf16 to vector<1x16x1x4xbf16>
    %c0_7 = arith.constant 0 : index
    %c0_8 = arith.constant 0 : index
    %c0_9 = arith.constant 0 : index
    %c0_10 = arith.constant 0 : index
    %11 = vector.load %arg7[%c0_7, %c0_8, %c0_9, %c0_10] : memref<1x18x18x4xbf16, #tpu.memory_space<vmem>>, vector<1x1x18x4xbf16>
    tpu.vector_store %arg7[%c0_7, %c0_8, %c0_9, %c0_10], %9 {strides = array<i32>} : memref<1x18x18x4xbf16, #tpu.memory_space<vmem>>, vector<1x1x18x4xbf16>,
    %c0_11 = arith.constant 0 : index
    %c17 = arith.constant 17 : index
    %c0_12 = arith.constant 0 : index
    %c0_13 = arith.constant 0 : index
    %12 = vector.load %arg7[%c0_11, %c17, %c0_12, %c0_13] : memref<1x18x18x4xbf16, #tpu.memory_space<vmem>>, vector<1x1x18x4xbf16>
    tpu.vector_store %arg7[%c0_11, %c17, %c0_12, %c0_13], %9 {strides = array<i32>} : memref<1x18x18x4xbf16, #tpu.memory_space<vmem>>, vector<1x1x18x4xbf16>,
    %c0_14 = arith.constant 0 : index
    %c1 = arith.constant 1 : index
    %c0_15 = arith.constant 0 : index
    %c0_16 = arith.constant 0 : index
    %13 = vector.load %arg7[%c0_14, %c1, %c0_15, %c0_16] : memref<1x18x18x4xbf16, #tpu.memory_space<vmem>>, vector<1x16x1x4xbf16>
    tpu.vector_store %arg7[%c0_14, %c1, %c0_15, %c0_16], %10 {strides = array<i32>} : memref<1x18x18x4xbf16, #tpu.memory_space<vmem>>, vector<1x16x1x4xbf16>,
    %c0_17 = arith.constant 0 : index
    %c1_18 = arith.constant 1 : index
    %c17_19 = arith.constant 17 : index
    %c0_20 = arith.constant 0 : index
    %14 = vector.load %arg7[%c0_17, %c1_18, %c17_19, %c0_20] : memref<1x18x18x4xbf16, #tpu.memory_space<vmem>>, vector<1x16x1x4xbf16>
    tpu.vector_store %arg7[%c0_17, %c1_18, %c17_19, %c0_20], %10 {strides = array<i32>} : memref<1x18x18x4xbf16, #tpu.memory_space<vmem>>, vector<1x16x1x4xbf16>,
    %15 = vector.shape_cast %8 : vector<256x4xf32> to vector<1x16x16x4xf32>
    %16 = arith.truncf %15 : vector<1x16x16x4xf32> to vector<1x16x16x4xbf16>
    %c0_21 = arith.constant 0 : index
    %c1_22 = arith.constant 1 : index
    %c1_23 = arith.constant 1 : index
    %c0_24 = arith.constant 0 : index
    %17 = vector.load %arg7[%c0_21, %c1_22, %c1_23, %c0_24] : memref<1x18x18x4xbf16, #tpu.memory_space<vmem>>, vector<1x16x16x4xbf16>
    tpu.vector_store %arg7[%c0_21, %c1_22, %c1_23, %c0_24], %16 {strides = array<i32>} : memref<1x18x18x4xbf16, #tpu.memory_space<vmem>>, vector<1x16x16x4xbf16>,
    %c0_25 = arith.constant 0 : index
    %c0_26 = arith.constant 0 : index
    %c0_27 = arith.constant 0 : index
    %c0_28 = arith.constant 0 : index
    %18 = vector.load %arg7[%c0_25, %c0_26, %c0_27, %c0_28] : memref<1x18x18x4xbf16, #tpu.memory_space<vmem>>, vector<1x18x18x4xbf16>
    %19 = vector.extract_strided_slice %18 {offsets = [0, 0, 0, 0], sizes = [1, 16, 16, 4], strides = [1, 1, 1, 1]} : vector<1x18x18x4xbf16> to vector<1x16x16x4xbf16>
    %20 = vector.extract_strided_slice %18 {offsets = [0, 0, 1, 0], sizes = [1, 16, 16, 4], strides = [1, 1, 1, 1]} : vector<1x18x18x4xbf16> to vector<1x16x16x4xbf16>
    %21 = vector.extract_strided_slice %18 {offsets = [0, 0, 2, 0], sizes = [1, 16, 16, 4], strides = [1, 1, 1, 1]} : vector<1x18x18x4xbf16> to vector<1x16x16x4xbf16>
    %22 = tpu.concatenate %19, %20, %21 in 3 : vector<1x16x16x4xbf16>, vector<1x16x16x4xbf16>, vector<1x16x16x4xbf16> -> vector<1x16x16x12xbf16>
    %23 = vector.shape_cast %22 : vector<1x16x16x12xbf16> to vector<256x12xbf16>
    %c0_29 = arith.constant 0 : index
    %c0_30 = arith.constant 0 : index
    %c0_31 = arith.constant 0 : index
    %24 = vector.load %arg4[%c0_29, %c0_30, %c0_31] : memref<3x12x4xbf16, #tpu.memory_space<vmem>>, vector<1x12x4xbf16>
    %25 = vector.shape_cast %24 : vector<1x12x4xbf16> to vector<12x4xbf16>
    %cst_32 = arith.constant dense<0.000000e+00> : vector<256x4xf32>
    %26 = tpu.matmul %23, %25, %cst_32 {dimension_numbers = #tpu.dot_dimension_numbers<[1], [0], [0], [1], [0, 0, 1, 1], [], []>} : vector<256x12xbf16>, vector<12x4xbf16>, vector<256x4xf32> -> vector<256x4xf32>
    %c0_33 = arith.constant 0 : index
    %c0_34 = arith.constant 0 : index
    %27 = vector.load %arg8[%c0_33, %c0_34] : memref<256x4xf32, #tpu.memory_space<vmem>>, vector<256x4xf32>
    tpu.vector_store %arg8[%c0_33, %c0_34], %26 {strides = array<i32>} : memref<256x4xf32, #tpu.memory_space<vmem>>, vector<256x4xf32>,
    %28 = vector.extract_strided_slice %18 {offsets = [0, 1, 0, 0], sizes = [1, 16, 16, 4], strides = [1, 1, 1, 1]} : vector<1x18x18x4xbf16> to vector<1x16x16x4xbf16>
    %29 = vector.extract_strided_slice %18 {offsets = [0, 1, 1, 0], sizes = [1, 16, 16, 4], strides = [1, 1, 1, 1]} : vector<1x18x18x4xbf16> to vector<1x16x16x4xbf16>
    %30 = vector.extract_strided_slice %18 {offsets = [0, 1, 2, 0], sizes = [1, 16, 16, 4], strides = [1, 1, 1, 1]} : vector<1x18x18x4xbf16> to vector<1x16x16x4xbf16>
    %31 = tpu.concatenate %28, %29, %30 in 3 : vector<1x16x16x4xbf16>, vector<1x16x16x4xbf16>, vector<1x16x16x4xbf16> -> vector<1x16x16x12xbf16>
    %32 = vector.shape_cast %31 : vector<1x16x16x12xbf16> to vector<256x12xbf16>
    %c1_35 = arith.constant 1 : index
    %c0_36 = arith.constant 0 : index
    %c0_37 = arith.constant 0 : index
    %33 = vector.load %arg4[%c1_35, %c0_36, %c0_37] : memref<3x12x4xbf16, #tpu.memory_space<vmem>>, vector<1x12x4xbf16>
    %34 = vector.shape_cast %33 : vector<1x12x4xbf16> to vector<12x4xbf16>
    %cst_38 = arith.constant dense<0.000000e+00> : vector<256x4xf32>
    %35 = tpu.matmul %32, %34, %cst_38 {dimension_numbers = #tpu.dot_dimension_numbers<[1], [0], [0], [1], [0, 0, 1, 1], [], []>} : vector<256x12xbf16>, vector<12x4xbf16>, vector<256x4xf32> -> vector<256x4xf32>
    %c0_39 = arith.constant 0 : index
    %c0_40 = arith.constant 0 : index
    %36 = vector.load %arg8[%c0_39, %c0_40] : memref<256x4xf32, #tpu.memory_space<vmem>>, vector<256x4xf32>
    %37 = arith.addf %36, %35 : vector<256x4xf32>
    %c0_41 = arith.constant 0 : index
    %c0_42 = arith.constant 0 : index
    %38 = vector.load %arg8[%c0_41, %c0_42] : memref<256x4xf32, #tpu.memory_space<vmem>>, vector<256x4xf32>
    tpu.vector_store %arg8[%c0_41, %c0_42], %37 {strides = array<i32>} : memref<256x4xf32, #tpu.memory_space<vmem>>, vector<256x4xf32>,
    %39 = vector.extract_strided_slice %18 {offsets = [0, 2, 0, 0], sizes = [1, 16, 16, 4], strides = [1, 1, 1, 1]} : vector<1x18x18x4xbf16> to vector<1x16x16x4xbf16>
    %40 = vector.extract_strided_slice %18 {offsets = [0, 2, 1, 0], sizes = [1, 16, 16, 4], strides = [1, 1, 1, 1]} : vector<1x18x18x4xbf16> to vector<1x16x16x4xbf16>
    %41 = vector.extract_strided_slice %18 {offsets = [0, 2, 2, 0], sizes = [1, 16, 16, 4], strides = [1, 1, 1, 1]} : vector<1x18x18x4xbf16> to vector<1x16x16x4xbf16>
    %42 = tpu.concatenate %39, %40, %41 in 3 : vector<1x16x16x4xbf16>, vector<1x16x16x4xbf16>, vector<1x16x16x4xbf16> -> vector<1x16x16x12xbf16>
    %43 = vector.shape_cast %42 : vector<1x16x16x12xbf16> to vector<256x12xbf16>
    %c2 = arith.constant 2 : index
    %c0_43 = arith.constant 0 : index
    %c0_44 = arith.constant 0 : index
    %44 = vector.load %arg4[%c2, %c0_43, %c0_44] : memref<3x12x4xbf16, #tpu.memory_space<vmem>>, vector<1x12x4xbf16>
    %45 = vector.shape_cast %44 : vector<1x12x4xbf16> to vector<12x4xbf16>
    %cst_45 = arith.constant dense<0.000000e+00> : vector<256x4xf32>
    %46 = tpu.matmul %43, %45, %cst_45 {dimension_numbers = #tpu.dot_dimension_numbers<[1], [0], [0], [1], [0, 0, 1, 1], [], []>} : vector<256x12xbf16>, vector<12x4xbf16>, vector<256x4xf32> -> vector<256x4xf32>
    %c0_46 = arith.constant 0 : index
    %c0_47 = arith.constant 0 : index
    %47 = vector.load %arg8[%c0_46, %c0_47] : memref<256x4xf32, #tpu.memory_space<vmem>>, vector<256x4xf32>
    %48 = arith.addf %47, %46 : vector<256x4xf32>
    %c0_48 = arith.constant 0 : index
    %c0_49 = arith.constant 0 : index
    %49 = vector.load %arg8[%c0_48, %c0_49] : memref<256x4xf32, #tpu.memory_space<vmem>>, vector<256x4xf32>
    tpu.vector_store %arg8[%c0_48, %c0_49], %48 {strides = array<i32>} : memref<256x4xf32, #tpu.memory_space<vmem>>, vector<256x4xf32>,
    %c0_50 = arith.constant 0 : index
    %c0_51 = arith.constant 0 : index
    %50 = vector.load %arg8[%c0_50, %c0_51] : memref<256x4xf32, #tpu.memory_space<vmem>>, vector<256x4xf32>
    %c0_52 = arith.constant 0 : index
    %c0_53 = arith.constant 0 : index
    %51 = vector.load %arg5[%c0_52, %c0_53] : memref<256x4xf32, #tpu.memory_space<vmem>>, vector<256x4xf32>
    tpu.vector_store %arg5[%c0_52, %c0_53], %50 {strides = array<i32>} : memref<256x4xf32, #tpu.memory_space<vmem>>, vector<256x4xf32>,
    %cst_54 = arith.constant dense<0.000000e+00> : vector<4xf32>
    %52 = vector.multi_reduction <add>, %50, %cst_54 [0] : vector<256x4xf32> to vector<4xf32>
    %53 = vector.shape_cast %52 : vector<4xf32> to vector<1x4xf32>
    %cst_55 = arith.constant 3.906250e-03 : f32
    %54 = vector.broadcast %cst_55 : f32 to vector<1x4xf32>
    %55 = arith.mulf %53, %54 : vector<1x4xf32>
    %56 = vector.broadcast %55 : vector<1x4xf32> to vector<256x4xf32>
    %57 = arith.subf %50, %56 : vector<256x4xf32>
    %58 = arith.mulf %57, %57 : vector<256x4xf32>
    %cst_56 = arith.constant dense<0.000000e+00> : vector<4xf32>
    %59 = vector.multi_reduction <add>, %58, %cst_56 [0] : vector<256x4xf32> to vector<4xf32>
    %60 = vector.shape_cast %59 : vector<4xf32> to vector<1x4xf32>
    %61 = tpu.concatenate %53, %60 in 0 : vector<1x4xf32>, vector<1x4xf32> -> vector<2x4xf32>
    %62 = vector.shape_cast %61 : vector<2x4xf32> to vector<1x2x4xf32>
    %c0_57 = arith.constant 0 : index
    %c0_58 = arith.constant 0 : index
    %c0_59 = arith.constant 0 : index
    %63 = vector.load %arg6[%c0_57, %c0_58, %c0_59] : memref<1x2x4xf32, #tpu.memory_space<vmem>>, vector<1x2x4xf32>
    tpu.vector_store %arg6[%c0_57, %c0_58, %c0_59], %62 {strides = array<i32>} : memref<1x2x4xf32, #tpu.memory_space<vmem>>, vector<1x2x4xf32>,
    return
  }
  func.func @transform_0(%arg0: i32) -> (i32, i32) {
    %c0_i32 = arith.constant 0 : i32
    %c0_i32_0 = arith.constant 0 : i32
    return %arg0, %c0_i32 : i32, i32
  }
  func.func @transform_1(%arg0: i32) -> (i32, i32) {
    %c0_i32 = arith.constant 0 : i32
    %c0_i32_0 = arith.constant 0 : i32
    %c0_i32_1 = arith.constant 0 : i32
    return %c0_i32, %c0_i32_0 : i32, i32
  }
  func.func @transform_2(%arg0: i32) -> (i32, i32) {
    %c0_i32 = arith.constant 0 : i32
    %c0_i32_0 = arith.constant 0 : i32
    %c0_i32_1 = arith.constant 0 : i32
    return %c0_i32, %c0_i32_0 : i32, i32
  }
  func.func @transform_3(%arg0: i32) -> (i32, i32, i32) {
    %c0_i32 = arith.constant 0 : i32
    %c0_i32_0 = arith.constant 0 : i32
    %c0_i32_1 = arith.constant 0 : i32
    %c0_i32_2 = arith.constant 0 : i32
    return %c0_i32, %c0_i32_0, %c0_i32_1 : i32, i32, i32
  }
  func.func @transform_4(%arg0: i32) -> (i32, i32) {
    %c0_i32 = arith.constant 0 : i32
    %c0_i32_0 = arith.constant 0 : i32
    return %arg0, %c0_i32 : i32, i32
  }
  func.func @transform_5(%arg0: i32) -> (i32, i32, i32) {
    %c0_i32 = arith.constant 0 : i32
    %c0_i32_0 = arith.constant 0 : i32
    %c0_i32_1 = arith.constant 0 : i32
    return %arg0, %c0_i32, %c0_i32_0 : i32, i32, i32
  }
}

</mosaic_0001>

<llo_original>
// kernel: basic_block_forward.5
$region0: #{basic_block_forward.5}
  #allocation0 [shape = 'u32[]', space=smem, size = 0x4, offset = 0x4, fixed_abs, tag = 'smem constant byte address 0x4 - core index']
  #allocation1 [shape = 'u32[144,128]{1,0:T(1,128)}', space=vmem, size = 0x12000, scoped, tag = 'internal scratch']
  %s0 = inlined_call_operand.vmem [shape: f32[512,4], index: 0, kind: input, shape index: {}]
  %s1 = inlined_call_operand.vmem [shape: f32[512,4], index: 1, kind: input, shape index: {}]
  %s2 = inlined_call_operand.vmem [shape: f32[1,4], index: 2, kind: input, shape index: {}]
  %s3 = inlined_call_operand.vmem [shape: f32[1,4], index: 3, kind: input, shape index: {}]
  %s4 = inlined_call_operand.vmem [shape: f32[512,4], index: 4, kind: output, shape index: {}]
  %s5 = sld [smem:[#allocation0]]
  $region49: #{basic_block_forward.5} parent=0
    _
  %s7 = ssub.s32 1, %s5
  %s8 = scalar_select 0, %s7, %s5
  loop: start=0, step=1, limit=4
  $region2: #{basic_block_forward.5} parent=0 // loop_pre_header
    _
  $region3: #{basic_block_forward.5} parent=0 // loop_header
    %s10 = sphi 0, %s14
    %p11 = scmp.ge.s32.totalorder %s10, 4
    %s20 = sphi 0, %s22
    %s23 = sphi 0, %s20
    %s24 = sphi 0, %s23
    %s40 = sphi 0, %s24
    %s46 = sphi 0, %s48
    %s49 = sphi 0, %s46
    %s50 = sphi 0, %s49
    %s66 = sphi 0, %s50
    %s70 = sphi 0, %s70
    %s72 = sphi 0, %s70
    %s73 = sphi 0, %s72
    %s87 = sphi 0, %s73
    %s91 = sphi 0, %s91
    %s93 = sphi 0, %s91
    %s94 = sphi 0, %s93
    %s108 = sphi 0, %s94
    %s114 = sphi 0, %s116
    %s117 = sphi 0, %s114
    %s118 = sphi 0, %s117
    %s134 = sphi 0, %s118
  $region4: #{basic_block_forward.5} parent=0 // loop_header_branch
    %13 = sbr.rel (%p11) target = $region8
  $region5: #{basic_block_forward.5} parent=0 // loop_body
    %s15 = ssub.s32 %s10, 1
    %s16 = ssub.s32 %s10, 2
    %s17 = sadd.s32 %s10, 1
    %s18 = ssub.s32 %s10, %s17
    %p19 = scmp.eq.s32.totalorder %s18, 0
    %s21 = sadd.s32 %s20, 1
    %s22 = scalar_select %p19, %s20, %s21
    %p25 = pneg %p19
    %p26 = scmp.eq.s32.totalorder %s10, 1
    %p27 = por %p25, %p26
    %p28 = scmp.ne.s32.totalorder %s20, %s23
    %p29 = scmp.eq.s32.totalorder %s10, 0
    %p30 = por %p28, %p29
    %p31 = scmp.ne.s32.totalorder %s20, %s23
    %p32 = scmp.eq.s32.totalorder %s15, 1
    %p33 = por %p31, %p32
    %p34 = scmp.ne.s32.totalorder %s23, %s24
    %p35 = scmp.eq.s32.totalorder %s15, 0
    %p36 = por %p34, %p35
    %p37 = scmp.ne.s32.totalorder %s23, %s24
    %p38 = scmp.eq.s32.totalorder %s16, 1
    %p39 = por %p37, %p38
    %p41 = scmp.ne.s32.totalorder %s24, %s40
    %p42 = scmp.eq.s32.totalorder %s16, 0
    %p43 = por %p41, %p42
    %s44 = ssub.s32 %s10, %s17
    %p45 = scmp.eq.s32.totalorder %s44, 0
    %s47 = sadd.s32 %s46, 1
    %s48 = scalar_select %p45, %s46, %s47
    %p51 = pneg %p45
    %p52 = scmp.eq.s32.totalorder %s10, 1
    %p53 = por %p51, %p52
    %p54 = scmp.ne.s32.totalorder %s46, %s49
    %p55 = scmp.eq.s32.totalorder %s10, 0
    %p56 = por %p54, %p55
    %p57 = scmp.ne.s32.totalorder %s46, %s49
    %p58 = scmp.eq.s32.totalorder %s15, 1
    %p59 = por %p57, %p58
    %p60 = scmp.ne.s32.totalorder %s49, %s50
    %p61 = scmp.eq.s32.totalorder %s15, 0
    %p62 = por %p60, %p61
    %p63 = scmp.ne.s32.totalorder %s49, %s50
    %p64 = scmp.eq.s32.totalorder %s16, 1
    %p65 = por %p63, %p64
    %p67 = scmp.ne.s32.totalorder %s50, %s66
    %p68 = scmp.eq.s32.totalorder %s16, 0
    %p69 = por %p67, %p68
    %s71 = sadd.s32 %s70, 1
    %p74 = scmp.eq.s32.totalorder %s10, 1
    %p75 = scmp.ne.s32.totalorder %s70, %s72
    %p76 = scmp.eq.s32.totalorder %s10, 0
    %p77 = por %p75, %p76
    %p78 = scmp.ne.s32.totalorder %s70, %s72
    %p79 = scmp.eq.s32.totalorder %s15, 1
    %p80 = por %p78, %p79
    %p81 = scmp.ne.s32.totalorder %s72, %s73
    %p82 = scmp.eq.s32.totalorder %s15, 0
    %p83 = por %p81, %p82
    %p84 = scmp.ne.s32.totalorder %s72, %s73
    %p85 = scmp.eq.s32.totalorder %s16, 1
    %p86 = por %p84, %p85
    %p88 = scmp.ne.s32.totalorder %s73, %s87
    %p89 = scmp.eq.s32.totalorder %s16, 0
    %p90 = por %p88, %p89
    %s92 = sadd.s32 %s91, 1
    %p95 = scmp.eq.s32.totalorder %s10, 1
    %p96 = scmp.ne.s32.totalorder %s91, %s93
    %p97 = scmp.eq.s32.totalorder %s10, 0
    %p98 = por %p96, %p97
    %p99 = scmp.ne.s32.totalorder %s91, %s93
    %p100 = scmp.eq.s32.totalorder %s15, 1
    %p101 = por %p99, %p100
    %p102 = scmp.ne.s32.totalorder %s93, %s94
    %p103 = scmp.eq.s32.totalorder %s15, 0
    %p104 = por %p102, %p103
    %p105 = scmp.ne.s32.totalorder %s93, %s94
    %p106 = scmp.eq.s32.totalorder %s16, 1
    %p107 = por %p105, %p106
    %p109 = scmp.ne.s32.totalorder %s94, %s108
    %p110 = scmp.eq.s32.totalorder %s16, 0
    %p111 = por %p109, %p110
    %s112 = ssub.s32 %s10, %s17
    %p113 = scmp.eq.s32.totalorder %s112, 0
    %s115 = sadd.s32 %s114, 1
    %s116 = scalar_select %p113, %s114, %s115
    %p119 = pneg %p113
    %p120 = scmp.eq.s32.totalorder %s10, 1
    %p121 = por %p119, %p120
    %p122 = scmp.ne.s32.totalorder %s114, %s117
    %p123 = scmp.eq.s32.totalorder %s10, 0
    %p124 = por %p122, %p123
    %p125 = scmp.ne.s32.totalorder %s114, %s117
    %p126 = scmp.eq.s32.totalorder %s15, 1
    %p127 = por %p125, %p126
    %p128 = scmp.ne.s32.totalorder %s117, %s118
    %p129 = scmp.eq.s32.totalorder %s15, 0
    %p130 = por %p128, %p129
    %p131 = scmp.ne.s32.totalorder %s117, %s118
    %p132 = scmp.eq.s32.totalorder %s16, 1
    %p133 = por %p131, %p132
    %p135 = scmp.ne.s32.totalorder %s118, %s134
    %p136 = scmp.eq.s32.totalorder %s16, 0
    %p137 = por %p135, %p136
    %p138 = scmp.le.s32.totalorder 1, %s10
    %p139 = scmp.lt.s32.totalorder %s10, 3
    %p140 = pnand %p138, %p139
    %p141 = pneg %p140
    // Predicated region
    $region9: #{basic_block_forward.5} parent=5 // pred_check
      _
    $region10: #{basic_block_forward.5} parent=5 // pred_check_branch
      %143 = sbr.rel (%p140) target = $region12
    $region11: #{basic_block_forward.5} parent=5 // pred_region
      %s144 = ssub.s32 %s10, 1
      // Predicated region
      $region13: #{basic_block_forward.5} parent=11 // pred_check
        %p145 = pneg %p83
      $region14: #{basic_block_forward.5} parent=11 // pred_check_branch
        %147 = sbr.rel (%p145) target = $region16
      $region15: #{basic_block_forward.5} parent=11 // pred_region
        _
      $region16: #{basic_block_forward.5} parent=11 // pred_fallthru
        _
      // Predicated region
      $region17: #{basic_block_forward.5} parent=11 // pred_check
        %p148 = pneg %p104
      $region18: #{basic_block_forward.5} parent=11 // pred_check_branch
        %150 = sbr.rel (%p148) target = $region20
      $region19: #{basic_block_forward.5} parent=11 // pred_region
        _
      $region20: #{basic_block_forward.5} parent=11 // pred_fallthru
        _
    $region12: #{basic_block_forward.5} parent=5 // pred_fallthru
      _
    %p151 = scmp.lt.s32.totalorder %s10, 2
    // Predicated region
    $region21: #{basic_block_forward.5} parent=5 // pred_check
      %p152 = pneg %p151
    $region22: #{basic_block_forward.5} parent=5 // pred_check_branch
      %154 = sbr.rel (%p152) target = $region24
    $region23: #{basic_block_forward.5} parent=5 // pred_region
      // Predicated region
      $region25: #{basic_block_forward.5} parent=23 // pred_check
        %p155 = pneg %p30
      $region26: #{basic_block_forward.5} parent=23 // pred_check_branch
        %157 = sbr.rel (%p155) target = $region28
      $region27: #{basic_block_forward.5} parent=23 // pred_region
        %s158 = smul.u32 32, %s10
        %p159 = scmp.lt.s32.totalorder %s158, 63
        %s160 = scalar_select %p159, %s158, 63
        %s161 = smul.addr %s160, 8
        %s162 = scalar_lea.vmem %s0, %s161
        %s163 = smul.u32 32, %s10
      $region28: #{basic_block_forward.5} parent=23 // pred_fallthru
        _
      // Predicated region
      $region29: #{basic_block_forward.5} parent=23 // pred_check
        %p164 = pneg %p56
      $region30: #{basic_block_forward.5} parent=23 // pred_check_branch
        %166 = sbr.rel (%p164) target = $region32
      $region31: #{basic_block_forward.5} parent=23 // pred_region
        %s167 = smul.u32 32, %s10
        %p168 = scmp.lt.s32.totalorder %s167, 63
        %s169 = scalar_select %p168, %s167, 63
        %s170 = smul.addr %s169, 8
        %s171 = scalar_lea.vmem %s1, %s170
        %s172 = smul.u32 32, %s10
      $region32: #{basic_block_forward.5} parent=23 // pred_fallthru
        _
    $region24: #{basic_block_forward.5} parent=5 // pred_fallthru
      _
    %p173 = scmp.le.s32.totalorder 1, %s10
    %p174 = scmp.lt.s32.totalorder %s10, 3
    %p175 = pnand %p173, %p174
    %p176 = pneg %p175
    // Predicated region
    $region33: #{basic_block_forward.5} parent=5 // pred_check
      _
    $region34: #{basic_block_forward.5} parent=5 // pred_check_branch
      %178 = sbr.rel (%p175) target = $region36
    $region35: #{basic_block_forward.5} parent=5 // pred_region
      %s179 = ssub.s32 %s10, 1
      %s180 = smul.u32 32, %s15
      %p181 = scmp.lt.s32.totalorder %s180, 63
      %s182 = scalar_select %p181, %s180, 63
      %s183 = smul.addr %s182, 8
      %s184 = scalar_lea.vmem %s0, %s183
      %p185 = pneg %p36
      %p186 = pneg %p33
      %s187 = smul.u32 32, %s15
      %p188 = scmp.lt.s32.totalorder %s187, 63
      %s189 = scalar_select %p188, %s187, 63
      %s190 = smul.addr %s189, 8
      %s191 = scalar_lea.vmem %s1, %s190
      %p192 = pneg %p62
      %p193 = pneg %p59
      %p194 = pneg %p83
      %p195 = pneg %p80
      %p196 = pneg %p104
      %p197 = pneg %p101
      %p198 = pneg %p130
      %p199 = pneg %p127
      %s200 = smul.u32 32, %s15
      %p201 = scmp.lt.s32.totalorder %s200, 63
      %s202 = scalar_select %p201, %s200, 63
      %s203 = smul.addr %s202, 8
      %s204 = scalar_lea.vmem %s4, %s203
      %s205 = smul.u32 32, %s15
      %p206 = scmp.lt.s32.totalorder %s205, 63
      %s207 = scalar_select %p206, %s205, 63
      %s208 = smul.addr %s207, 8
      %s209 = scalar_lea.vmem %s0, %s208
      %s210 = smul.u32 32, %s15
      %s211 = smul.u32 32, %s15
      %p212 = scmp.lt.s32.totalorder %s211, 63
      %s213 = scalar_select %p212, %s211, 63
      %s214 = smul.addr %s213, 8
      %s215 = scalar_lea.vmem %s1, %s214
      %s216 = smul.u32 32, %s15
      %s217 = smul.u32 32, %s15
      %p218 = scmp.lt.s32.totalorder %s217, 63
      %s219 = scalar_select %p218, %s217, 63
      %s220 = smul.addr %s219, 8
      %s221 = scalar_lea.vmem %s4, %s220
      %s222 = smul.u32 32, %s15
      %v223 = vld [vmem:[%s209] sm:$0xff]
      %v224 = vld [vmem:[%s209 + $0x8] sm:$0xff]
      %v225 = vld [vmem:[%s209 + $0x10] sm:$0xff]
      %v226 = vld [vmem:[%s209 + $0x18] sm:$0xff]
      %v227 = vld [vmem:[%s209 + $0x20] sm:$0xff]
      %v228 = vld [vmem:[%s209 + $0x28] sm:$0xff]
      %v229 = vld [vmem:[%s209 + $0x30] sm:$0xff]
      %v230 = vld [vmem:[%s209 + $0x38] sm:$0xff]
      %v231 = vld [vmem:[%s209 + $0x40] sm:$0xff]
      %v232 = vld [vmem:[%s209 + $0x48] sm:$0xff]
      %v233 = vld [vmem:[%s209 + $0x50] sm:$0xff]
      %v234 = vld [vmem:[%s209 + $0x58] sm:$0xff]
      %v235 = vld [vmem:[%s209 + $0x60] sm:$0xff]
      %v236 = vld [vmem:[%s209 + $0x68] sm:$0xff]
      %v237 = vld [vmem:[%s209 + $0x70] sm:$0xff]
      %v238 = vld [vmem:[%s209 + $0x78] sm:$0xff]
      %v239 = vld [vmem:[%s209 + $0x80] sm:$0xff]
      %v240 = vld [vmem:[%s209 + $0x88] sm:$0xff]
      %v241 = vld [vmem:[%s209 + $0x90] sm:$0xff]
      %v242 = vld [vmem:[%s209 + $0x98] sm:$0xff]
      %v243 = vld [vmem:[%s209 + $0xa0] sm:$0xff]
      %v244 = vld [vmem:[%s209 + $0xa8] sm:$0xff]
      %v245 = vld [vmem:[%s209 + $0xb0] sm:$0xff]
      %v246 = vld [vmem:[%s209 + $0xb8] sm:$0xff]
      %v247 = vld [vmem:[%s209 + $0xc0] sm:$0xff]
      %v248 = vld [vmem:[%s209 + $0xc8] sm:$0xff]
      %v249 = vld [vmem:[%s209 + $0xd0] sm:$0xff]
      %v250 = vld [vmem:[%s209 + $0xd8] sm:$0xff]
      %v251 = vld [vmem:[%s209 + $0xe0] sm:$0xff]
      %v252 = vld [vmem:[%s209 + $0xe8] sm:$0xff]
      %v253 = vld [vmem:[%s209 + $0xf0] sm:$0xff]
      %v254 = vld [vmem:[%s209 + $0xf8] sm:$0xff]
      %v255 = vld [vmem:[%s2] sm:$0x1]
      %v257 = vlaneseq
      %v258 = vshrl.u32 %v257, 7
      %v259 = vsub.s32 0, %v258
      %v260 = vrot.slane %v255, %v259
      %v262 = vmul.f32 %v223, %v260
      %v263 = vmul.f32 %v224, %v260
      %v264 = vmul.f32 %v225, %v260
      %v265 = vmul.f32 %v226, %v260
      %v266 = vmul.f32 %v227, %v260
      %v267 = vmul.f32 %v228, %v260
      %v268 = vmul.f32 %v229, %v260
      %v269 = vmul.f32 %v230, %v260
      %v270 = vmul.f32 %v231, %v260
      %v271 = vmul.f32 %v232, %v260
      %v272 = vmul.f32 %v233, %v260
      %v273 = vmul.f32 %v234, %v260
      %v274 = vmul.f32 %v235, %v260
      %v275 = vmul.f32 %v236, %v260
      %v276 = vmul.f32 %v237, %v260
      %v277 = vmul.f32 %v238, %v260
      %v278 = vmul.f32 %v239, %v260
      %v279 = vmul.f32 %v240, %v260
      %v280 = vmul.f32 %v241, %v260
      %v281 = vmul.f32 %v242, %v260
      %v282 = vmul.f32 %v243, %v260
      %v283 = vmul.f32 %v244, %v260
      %v284 = vmul.f32 %v245, %v260
      %v285 = vmul.f32 %v246, %v260
      %v286 = vmul.f32 %v247, %v260
      %v287 = vmul.f32 %v248, %v260
      %v288 = vmul.f32 %v249, %v260
      %v289 = vmul.f32 %v250, %v260
      %v290 = vmul.f32 %v251, %v260
      %v291 = vmul.f32 %v252, %v260
      %v292 = vmul.f32 %v253, %v260
      %v293 = vmul.f32 %v254, %v260
      %v294 = vld [vmem:[%s3] sm:$0x1]
      %v296 = vlaneseq
      %v297 = vshrl.u32 %v296, 7
      %v298 = vsub.s32 0, %v297
      %v299 = vrot.slane %v294, %v298
      %v301 = vadd.f32 %v262, %v299
      %v302 = vadd.f32 %v263, %v299
      %v303 = vadd.f32 %v264, %v299
      %v304 = vadd.f32 %v265, %v299
      %v305 = vadd.f32 %v266, %v299
      %v306 = vadd.f32 %v267, %v299
      %v307 = vadd.f32 %v268, %v299
      %v308 = vadd.f32 %v269, %v299
      %v309 = vadd.f32 %v270, %v299
      %v310 = vadd.f32 %v271, %v299
      %v311 = vadd.f32 %v272, %v299
      %v312 = vadd.f32 %v273, %v299
      %v313 = vadd.f32 %v274, %v299
      %v314 = vadd.f32 %v275, %v299
      %v315 = vadd.f32 %v276, %v299
      %v316 = vadd.f32 %v277, %v299
      %v317 = vadd.f32 %v278, %v299
      %v318 = vadd.f32 %v279, %v299
      %v319 = vadd.f32 %v280, %v299
      %v320 = vadd.f32 %v281, %v299
      %v321 = vadd.f32 %v282, %v299
      %v322 = vadd.f32 %v283, %v299
      %v323 = vadd.f32 %v284, %v299
      %v324 = vadd.f32 %v285, %v299
      %v325 = vadd.f32 %v286, %v299
      %v326 = vadd.f32 %v287, %v299
      %v327 = vadd.f32 %v288, %v299
      %v328 = vadd.f32 %v289, %v299
      %v329 = vadd.f32 %v290, %v299
      %v330 = vadd.f32 %v291, %v299
      %v331 = vadd.f32 %v292, %v299
      %v332 = vadd.f32 %v293, %v299
      %v333 = vld [vmem:[%s215] sm:$0xff]
      %v334 = vld [vmem:[%s215 + $0x8] sm:$0xff]
      %v335 = vld [vmem:[%s215 + $0x10] sm:$0xff]
      %v336 = vld [vmem:[%s215 + $0x18] sm:$0xff]
      %v337 = vld [vmem:[%s215 + $0x20] sm:$0xff]
      %v338 = vld [vmem:[%s215 + $0x28] sm:$0xff]
      %v339 = vld [vmem:[%s215 + $0x30] sm:$0xff]
      %v340 = vld [vmem:[%s215 + $0x38] sm:$0xff]
      %v341 = vld [vmem:[%s215 + $0x40] sm:$0xff]
      %v342 = vld [vmem:[%s215 + $0x48] sm:$0xff]
      %v343 = vld [vmem:[%s215 + $0x50] sm:$0xff]
      %v344 = vld [vmem:[%s215 + $0x58] sm:$0xff]
      %v345 = vld [vmem:[%s215 + $0x60] sm:$0xff]
      %v346 = vld [vmem:[%s215 + $0x68] sm:$0xff]
      %v347 = vld [vmem:[%s215 + $0x70] sm:$0xff]
      %v348 = vld [vmem:[%s215 + $0x78] sm:$0xff]
      %v349 = vld [vmem:[%s215 + $0x80] sm:$0xff]
      %v350 = vld [vmem:[%s215 + $0x88] sm:$0xff]
      %v351 = vld [vmem:[%s215 + $0x90] sm:$0xff]
      %v352 = vld [vmem:[%s215 + $0x98] sm:$0xff]
      %v353 = vld [vmem:[%s215 + $0xa0] sm:$0xff]
      %v354 = vld [vmem:[%s215 + $0xa8] sm:$0xff]
      %v355 = vld [vmem:[%s215 + $0xb0] sm:$0xff]
      %v356 = vld [vmem:[%s215 + $0xb8] sm:$0xff]
      %v357 = vld [vmem:[%s215 + $0xc0] sm:$0xff]
      %v358 = vld [vmem:[%s215 + $0xc8] sm:$0xff]
      %v359 = vld [vmem:[%s215 + $0xd0] sm:$0xff]
      %v360 = vld [vmem:[%s215 + $0xd8] sm:$0xff]
      %v361 = vld [vmem:[%s215 + $0xe0] sm:$0xff]
      %v362 = vld [vmem:[%s215 + $0xe8] sm:$0xff]
      %v363 = vld [vmem:[%s215 + $0xf0] sm:$0xff]
      %v364 = vld [vmem:[%s215 + $0xf8] sm:$0xff]
      %v365 = vadd.f32 %v301, %v333
      %v366 = vadd.f32 %v302, %v334
      %v367 = vadd.f32 %v303, %v335
      %v368 = vadd.f32 %v304, %v336
      %v369 = vadd.f32 %v305, %v337
      %v370 = vadd.f32 %v306, %v338
      %v371 = vadd.f32 %v307, %v339
      %v372 = vadd.f32 %v308, %v340
      %v373 = vadd.f32 %v309, %v341
      %v374 = vadd.f32 %v310, %v342
      %v375 = vadd.f32 %v311, %v343
      %v376 = vadd.f32 %v312, %v344
      %v377 = vadd.f32 %v313, %v345
      %v378 = vadd.f32 %v314, %v346
      %v379 = vadd.f32 %v315, %v347
      %v380 = vadd.f32 %v316, %v348
      %v381 = vadd.f32 %v317, %v349
      %v382 = vadd.f32 %v318, %v350
      %v383 = vadd.f32 %v319, %v351
      %v384 = vadd.f32 %v320, %v352
      %v385 = vadd.f32 %v321, %v353
      %v386 = vadd.f32 %v322, %v354
      %v387 = vadd.f32 %v323, %v355
      %v388 = vadd.f32 %v324, %v356
      %v389 = vadd.f32 %v325, %v357
      %v390 = vadd.f32 %v326, %v358
      %v391 = vadd.f32 %v327, %v359
      %v392 = vadd.f32 %v328, %v360
      %v393 = vadd.f32 %v329, %v361
      %v394 = vadd.f32 %v330, %v362
      %v395 = vadd.f32 %v331, %v363
      %v396 = vadd.f32 %v332, %v364
      %v397 = vmax.f32 %v365, 0.0
      %v398 = vmax.f32 %v366, 0.0
      %v399 = vmax.f32 %v367, 0.0
      %v400 = vmax.f32 %v368, 0.0
      %v401 = vmax.f32 %v369, 0.0
      %v402 = vmax.f32 %v370, 0.0
      %v403 = vmax.f32 %v371, 0.0
      %v404 = vmax.f32 %v372, 0.0
      %v405 = vmax.f32 %v373, 0.0
      %v406 = vmax.f32 %v374, 0.0
      %v407 = vmax.f32 %v375, 0.0
      %v408 = vmax.f32 %v376, 0.0
      %v409 = vmax.f32 %v377, 0.0
      %v410 = vmax.f32 %v378, 0.0
      %v411 = vmax.f32 %v379, 0.0
      %v412 = vmax.f32 %v380, 0.0
      %v413 = vmax.f32 %v381, 0.0
      %v414 = vmax.f32 %v382, 0.0
      %v415 = vmax.f32 %v383, 0.0
      %v416 = vmax.f32 %v384, 0.0
      %v417 = vmax.f32 %v385, 0.0
      %v418 = vmax.f32 %v386, 0.0
      %v419 = vmax.f32 %v387, 0.0
      %v420 = vmax.f32 %v388, 0.0
      %v421 = vmax.f32 %v389, 0.0
      %v422 = vmax.f32 %v390, 0.0
      %v423 = vmax.f32 %v391, 0.0
      %v424 = vmax.f32 %v392, 0.0
      %v425 = vmax.f32 %v393, 0.0
      %v426 = vmax.f32 %v394, 0.0
      %v427 = vmax.f32 %v395, 0.0
      %v428 = vmax.f32 %v396, 0.0
      %vm429 = vcmask 31744
      %430 = vst.msk [vmem:[%s221] sm:$0xff] %vm429, %v397
      %431 = vst.msk [vmem:[%s221 + $0x8] sm:$0xff] %vm429, %v398
      %432 = vst.msk [vmem:[%s221 + $0x10] sm:$0xff] %vm429, %v399
      %433 = vst.msk [vmem:[%s221 + $0x18] sm:$0xff] %vm429, %v400
      %434 = vst.msk [vmem:[%s221 + $0x20] sm:$0xff] %vm429, %v401
      %435 = vst.msk [vmem:[%s221 + $0x28] sm:$0xff] %vm429, %v402
      %436 = vst.msk [vmem:[%s221 + $0x30] sm:$0xff] %vm429, %v403
      %437 = vst.msk [vmem:[%s221 + $0x38] sm:$0xff] %vm429, %v404
      %438 = vst.msk [vmem:[%s221 + $0x40] sm:$0xff] %vm429, %v405
      %439 = vst.msk [vmem:[%s221 + $0x48] sm:$0xff] %vm429, %v406
      %440 = vst.msk [vmem:[%s221 + $0x50] sm:$0xff] %vm429, %v407
      %441 = vst.msk [vmem:[%s221 + $0x58] sm:$0xff] %vm429, %v408
      %442 = vst.msk [vmem:[%s221 + $0x60] sm:$0xff] %vm429, %v409
      %443 = vst.msk [vmem:[%s221 + $0x68] sm:$0xff] %vm429, %v410
      %444 = vst.msk [vmem:[%s221 + $0x70] sm:$0xff] %vm429, %v411
      %445 = vst.msk [vmem:[%s221 + $0x78] sm:$0xff] %vm429, %v412
      %446 = vst.msk [vmem:[%s221 + $0x80] sm:$0xff] %vm429, %v413
      %447 = vst.msk [vmem:[%s221 + $0x88] sm:$0xff] %vm429, %v414
      %448 = vst.msk [vmem:[%s221 + $0x90] sm:$0xff] %vm429, %v415
      %449 = vst.msk [vmem:[%s221 + $0x98] sm:$0xff] %vm429, %v416
      %450 = vst.msk [vmem:[%s221 + $0xa0] sm:$0xff] %vm429, %v417
      %451 = vst.msk [vmem:[%s221 + $0xa8] sm:$0xff] %vm429, %v418
      %452 = vst.msk [vmem:[%s221 + $0xb0] sm:$0xff] %vm429, %v419
      %453 = vst.msk [vmem:[%s221 + $0xb8] sm:$0xff] %vm429, %v420
      %454 = vst.msk [vmem:[%s221 + $0xc0] sm:$0xff] %vm429, %v421
      %455 = vst.msk [vmem:[%s221 + $0xc8] sm:$0xff] %vm429, %v422
      %456 = vst.msk [vmem:[%s221 + $0xd0] sm:$0xff] %vm429, %v423
      %457 = vst.msk [vmem:[%s221 + $0xd8] sm:$0xff] %vm429, %v424
      %458 = vst.msk [vmem:[%s221 + $0xe0] sm:$0xff] %vm429, %v425
      %459 = vst.msk [vmem:[%s221 + $0xe8] sm:$0xff] %vm429, %v426
      %460 = vst.msk [vmem:[%s221 + $0xf0] sm:$0xff] %vm429, %v427
      %461 = vst.msk [vmem:[%s221 + $0xf8] sm:$0xff] %vm429, %v428
      %s462 = smul.u32 32, %s15
      %p463 = scmp.lt.s32.totalorder %s462, 63
      %s464 = scalar_select %p463, %s462, 63
      %s465 = smul.addr %s464, 8
      %s466 = scalar_lea.vmem %s4, %s465
      // Predicated region
      $region37: #{basic_block_forward.5} parent=35 // pred_check
        %p467 = pneg %p127
      $region38: #{basic_block_forward.5} parent=35 // pred_check_branch
        %469 = sbr.rel (%p467) target = $region40
      $region39: #{basic_block_forward.5} parent=35 // pred_region
        %s470 = smul.u32 32, %s15
      $region40: #{basic_block_forward.5} parent=35 // pred_fallthru
        _
    $region36: #{basic_block_forward.5} parent=5 // pred_fallthru
      _
    %p471 = scmp.le.s32.totalorder 2, %s10
    // Predicated region
    $region41: #{basic_block_forward.5} parent=5 // pred_check
      %p472 = pneg %p471
    $region42: #{basic_block_forward.5} parent=5 // pred_check_branch
      %474 = sbr.rel (%p472) target = $region44
    $region43: #{basic_block_forward.5} parent=5 // pred_region
      %s475 = ssub.s32 %s10, 2
      // Predicated region
      $region45: #{basic_block_forward.5} parent=43 // pred_check
        %p476 = pneg %p133
      $region46: #{basic_block_forward.5} parent=43 // pred_check_branch
        %478 = sbr.rel (%p476) target = $region48
      $region47: #{basic_block_forward.5} parent=43 // pred_region
        %s479 = smul.u32 32, %s16
        %p480 = scmp.lt.s32.totalorder %s479, 63
        %s481 = scalar_select %p480, %s479, 63
        %s482 = smul.addr %s481, 8
        %s483 = scalar_lea.vmem %s4, %s482
      $region48: #{basic_block_forward.5} parent=43 // pred_fallthru
        _
    $region44: #{basic_block_forward.5} parent=5 // pred_fallthru
      _
  $region6: #{basic_block_forward.5} parent=0 // loop_footer
    %s14 = sadd.s32 1, %s10
  $region7: #{basic_block_forward.5} parent=0 // loop_footer_branch
    %9 = sbr.rel target = $region3
  $region8: #{basic_block_forward.5} parent=0 // loop_exit
    _

// kernel: basic_block_forward.3
$region0: #{basic_block_forward.3}
  #allocation0 [shape = 'u32[]', space=smem, size = 0x4, offset = 0x4, fixed_abs, tag = 'smem constant byte address 0x4 - core index']
  #allocation1 [shape = 'u32[144,128]{1,0:T(1,128)}', space=vmem, size = 0x12000, scoped, tag = 'internal scratch']
  #allocation2 [shape = 'f32[256,4]{1,0:T(8,128)}', space=vmem, size = 0x20000, scoped, tag = 'scratch operand']
  %s0 = inlined_call_operand.vmem [shape: bf16[2,18,18,4], index: 0, kind: input, shape index: {}]
  %s1 = inlined_call_operand.vmem [shape: bf16[3,12,4], index: 1, kind: input, shape index: {}]
  %s2 = inlined_call_operand.vmem [shape: f32[512,4], index: 2, kind: output, shape index: {0}]
  %s3 = inlined_call_operand.vmem [shape: f32[2,2,4], index: 3, kind: output, shape index: {1}]
  %4 = xla_tuple %s2, %s3
  %s5 = sld [smem:[#allocation0]]
  $region49: #{basic_block_forward.3} parent=0
    _
  %s7 = ssub.s32 1, %s5
  %s8 = scalar_select 0, %s7, %s5
  loop: start=0, step=1, limit=4
  $region2: #{basic_block_forward.3} parent=0 // loop_pre_header
    _
  $region3: #{basic_block_forward.3} parent=0 // loop_header
    %s10 = sphi 0, %s14
    %p11 = scmp.ge.s32.totalorder %s10, 4
    %s20 = sphi 0, %s22
    %s23 = sphi 0, %s20
    %s24 = sphi 0, %s23
    %s40 = sphi 0, %s24
    %s44 = sphi 0, %s44
    %s46 = sphi 0, %s44
    %s47 = sphi 0, %s46
    %s61 = sphi 0, %s47
    %s67 = sphi 0, %s69
    %s70 = sphi 0, %s67
    %s71 = sphi 0, %s70
    %s87 = sphi 0, %s71
    %s93 = sphi 0, %s95
    %s96 = sphi 0, %s93
    %s97 = sphi 0, %s96
    %s113 = sphi 0, %s97
  $region4: #{basic_block_forward.3} parent=0 // loop_header_branch
    %13 = sbr.rel (%p11) target = $region8
  $region5: #{basic_block_forward.3} parent=0 // loop_body
    %s15 = ssub.s32 %s10, 1
    %s16 = ssub.s32 %s10, 2
    %s17 = sadd.s32 %s10, 1
    %s18 = ssub.s32 %s10, %s17
    %p19 = scmp.eq.s32.totalorder %s18, 0
    %s21 = sadd.s32 %s20, 1
    %s22 = scalar_select %p19, %s20, %s21
    %p25 = pneg %p19
    %p26 = scmp.eq.s32.totalorder %s10, 1
    %p27 = por %p25, %p26
    %p28 = scmp.ne.s32.totalorder %s20, %s23
    %p29 = scmp.eq.s32.totalorder %s10, 0
    %p30 = por %p28, %p29
    %p31 = scmp.ne.s32.totalorder %s20, %s23
    %p32 = scmp.eq.s32.totalorder %s15, 1
    %p33 = por %p31, %p32
    %p34 = scmp.ne.s32.totalorder %s23, %s24
    %p35 = scmp.eq.s32.totalorder %s15, 0
    %p36 = por %p34, %p35
    %p37 = scmp.ne.s32.totalorder %s23, %s24
    %p38 = scmp.eq.s32.totalorder %s16, 1
    %p39 = por %p37, %p38
    %p41 = scmp.ne.s32.totalorder %s24, %s40
    %p42 = scmp.eq.s32.totalorder %s16, 0
    %p43 = por %p41, %p42
    %s45 = sadd.s32 %s44, 1
    %p48 = scmp.eq.s32.totalorder %s10, 1
    %p49 = scmp.ne.s32.totalorder %s44, %s46
    %p50 = scmp.eq.s32.totalorder %s10, 0
    %p51 = por %p49, %p50
    %p52 = scmp.ne.s32.totalorder %s44, %s46
    %p53 = scmp.eq.s32.totalorder %s15, 1
    %p54 = por %p52, %p53
    %p55 = scmp.ne.s32.totalorder %s46, %s47
    %p56 = scmp.eq.s32.totalorder %s15, 0
    %p57 = por %p55, %p56
    %p58 = scmp.ne.s32.totalorder %s46, %s47
    %p59 = scmp.eq.s32.totalorder %s16, 1
    %p60 = por %p58, %p59
    %p62 = scmp.ne.s32.totalorder %s47, %s61
    %p63 = scmp.eq.s32.totalorder %s16, 0
    %p64 = por %p62, %p63
    %s65 = ssub.s32 %s10, %s17
    %p66 = scmp.eq.s32.totalorder %s65, 0
    %s68 = sadd.s32 %s67, 1
    %s69 = scalar_select %p66, %s67, %s68
    %p72 = pneg %p66
    %p73 = scmp.eq.s32.totalorder %s10, 1
    %p74 = por %p72, %p73
    %p75 = scmp.ne.s32.totalorder %s67, %s70
    %p76 = scmp.eq.s32.totalorder %s10, 0
    %p77 = por %p75, %p76
    %p78 = scmp.ne.s32.totalorder %s67, %s70
    %p79 = scmp.eq.s32.totalorder %s15, 1
    %p80 = por %p78, %p79
    %p81 = scmp.ne.s32.totalorder %s70, %s71
    %p82 = scmp.eq.s32.totalorder %s15, 0
    %p83 = por %p81, %p82
    %p84 = scmp.ne.s32.totalorder %s70, %s71
    %p85 = scmp.eq.s32.totalorder %s16, 1
    %p86 = por %p84, %p85
    %p88 = scmp.ne.s32.totalorder %s71, %s87
    %p89 = scmp.eq.s32.totalorder %s16, 0
    %p90 = por %p88, %p89
    %s91 = ssub.s32 %s10, %s17
    %p92 = scmp.eq.s32.totalorder %s91, 0
    %s94 = sadd.s32 %s93, 1
    %s95 = scalar_select %p92, %s93, %s94
    %p98 = pneg %p92
    %p99 = scmp.eq.s32.totalorder %s10, 1
    %p100 = por %p98, %p99
    %p101 = scmp.ne.s32.totalorder %s93, %s96
    %p102 = scmp.eq.s32.totalorder %s10, 0
    %p103 = por %p101, %p102
    %p104 = scmp.ne.s32.totalorder %s93, %s96
    %p105 = scmp.eq.s32.totalorder %s15, 1
    %p106 = por %p104, %p105
    %p107 = scmp.ne.s32.totalorder %s96, %s97
    %p108 = scmp.eq.s32.totalorder %s15, 0
    %p109 = por %p107, %p108
    %p110 = scmp.ne.s32.totalorder %s96, %s97
    %p111 = scmp.eq.s32.totalorder %s16, 1
    %p112 = por %p110, %p111
    %p114 = scmp.ne.s32.totalorder %s97, %s113
    %p115 = scmp.eq.s32.totalorder %s16, 0
    %p116 = por %p114, %p115
    %p117 = scmp.le.s32.totalorder 1, %s10
    %p118 = scmp.lt.s32.totalorder %s10, 3
    %p119 = pnand %p117, %p118
    %p120 = pneg %p119
    // Predicated region
    $region9: #{basic_block_forward.3} parent=5 // pred_check
      _
    $region10: #{basic_block_forward.3} parent=5 // pred_check_branch
      %122 = sbr.rel (%p119) target = $region12
    $region11: #{basic_block_forward.3} parent=5 // pred_region
      %s123 = ssub.s32 %s10, 1
      // Predicated region
      $region13: #{basic_block_forward.3} parent=11 // pred_check
        %p124 = pneg %p57
      $region14: #{basic_block_forward.3} parent=11 // pred_check_branch
        %126 = sbr.rel (%p124) target = $region16
      $region15: #{basic_block_forward.3} parent=11 // pred_region
        _
      $region16: #{basic_block_forward.3} parent=11 // pred_fallthru
        _
    $region12: #{basic_block_forward.3} parent=5 // pred_fallthru
      _
    %p127 = scmp.lt.s32.totalorder %s10, 2
    // Predicated region
    $region17: #{basic_block_forward.3} parent=5 // pred_check
      %p128 = pneg %p127
    $region18: #{basic_block_forward.3} parent=5 // pred_check_branch
      %130 = sbr.rel (%p128) target = $region20
    $region19: #{basic_block_forward.3} parent=5 // pred_region
      // Predicated region
      $region21: #{basic_block_forward.3} parent=19 // pred_check
        %p131 = pneg %p30
      $region22: #{basic_block_forward.3} parent=19 // pred_check_branch
        %133 = sbr.rel (%p131) target = $region24
      $region23: #{basic_block_forward.3} parent=19 // pred_region
        %p134 = scmp.lt.s32.totalorder %s10, 1
        %s135 = scalar_select %p134, %s10, 1
        %s136 = smul.addr %s135, 54
        %s137 = smul.addr %s136, 4
        %s138 = scalar_lea.vmem %s0, %s137
      $region24: #{basic_block_forward.3} parent=19 // pred_fallthru
        _
    $region20: #{basic_block_forward.3} parent=5 // pred_fallthru
      _
    %p139 = scmp.le.s32.totalorder 1, %s10
    %p140 = scmp.lt.s32.totalorder %s10, 3
    %p141 = pnand %p139, %p140
    %p142 = pneg %p141
    // Predicated region
    $region25: #{basic_block_forward.3} parent=5 // pred_check
      _
    $region26: #{basic_block_forward.3} parent=5 // pred_check_branch
      %144 = sbr.rel (%p141) target = $region28
    $region27: #{basic_block_forward.3} parent=5 // pred_region
      %s145 = ssub.s32 %s10, 1
      %p146 = scmp.lt.s32.totalorder %s15, 1
      %s147 = scalar_select %p146, %s15, 1
      %s148 = smul.addr %s147, 54
      %s149 = smul.addr %s148, 4
      %s150 = scalar_lea.vmem %s0, %s149
      %p151 = pneg %p36
      %p152 = pneg %p33
      %p153 = pneg %p57
      %p154 = pneg %p54
      %p155 = pneg %p83
      %p156 = pneg %p80
      %s157 = smul.u32 32, %s15
      %p158 = scmp.lt.s32.totalorder %s157, 63
      %s159 = scalar_select %p158, %s157, 63
      %s160 = smul.addr %s159, 8
      %s161 = scalar_lea.vmem %s2, %s160
      %p162 = pneg %p109
      %p163 = pneg %p106
      %p164 = scmp.lt.s32.totalorder %s15, 1
      %s165 = scalar_select %p164, %s15, 1
      %s166 = smul.addr %s165, 2
      %s167 = scalar_lea.vmem %s3, %s166
      %p168 = scmp.lt.s32.totalorder %s15, 1
      %s169 = scalar_select %p168, %s15, 1
      %s170 = smul.addr %s169, 54
      %s171 = smul.addr %s170, 4
      %s172 = scalar_lea.vmem %s0, %s171
      %s173 = smul.u32 32, %s15
      %p174 = scmp.lt.s32.totalorder %s173, 63
      %s175 = scalar_select %p174, %s173, 63
      %s176 = smul.addr %s175, 8
      %s177 = scalar_lea.vmem %s2, %s176
      %s178 = smul.u32 32, %s15
      %p179 = scmp.lt.s32.totalorder %s15, 1
      %s180 = scalar_select %p179, %s15, 1
      %s181 = smul.addr %s180, 2
      %s182 = scalar_lea.vmem %s3, %s181
      %v184 = vld [vmem:[%s172] sm:$0xf]
      %v185 = vld [vmem:[%s172 + $0x4] sm:$0xf]
      %v186 = vld [vmem:[%s172 + $0x8] sm:$0x1]
      %v187 = vld [vmem:[%s172 + $0xc] sm:$0xf]
      %v188 = vld [vmem:[%s172 + $0x10] sm:$0xf]
      %v189 = vld [vmem:[%s172 + $0x14] sm:$0x1]
      %v190 = vld [vmem:[%s172 + $0x18] sm:$0xf]
      %v191 = vld [vmem:[%s172 + $0x1c] sm:$0xf]
      %v192 = vld [vmem:[%s172 + $0x20] sm:$0x1]
      %v193 = vld [vmem:[%s172 + $0x24] sm:$0xf]
      %v194 = vld [vmem:[%s172 + $0x28] sm:$0xf]
      %v195 = vld [vmem:[%s172 + $0x2c] sm:$0x1]
      %v196 = vld [vmem:[%s172 + $0x30] sm:$0xf]
      %v197 = vld [vmem:[%s172 + $0x34] sm:$0xf]
      %v198 = vld [vmem:[%s172 + $0x38] sm:$0x1]
      %v199 = vld [vmem:[%s172 + $0x3c] sm:$0xf]
      %v200 = vld [vmem:[%s172 + $0x40] sm:$0xf]
      %v201 = vld [vmem:[%s172 + $0x44] sm:$0x1]
      %v202 = vld [vmem:[%s172 + $0x48] sm:$0xf]
      %v203 = vld [vmem:[%s172 + $0x4c] sm:$0xf]
      %v204 = vld [vmem:[%s172 + $0x50] sm:$0x1]
      %v205 = vld [vmem:[%s172 + $0x54] sm:$0xf]
      %v206 = vld [vmem:[%s172 + $0x58] sm:$0xf]
      %v207 = vld [vmem:[%s172 + $0x5c] sm:$0x1]
      %v208 = vld [vmem:[%s172 + $0x60] sm:$0xf]
      %v209 = vld [vmem:[%s172 + $0x64] sm:$0xf]
      %v210 = vld [vmem:[%s172 + $0x68] sm:$0x1]
      %v211 = vld [vmem:[%s172 + $0x6c] sm:$0xf]
      %v212 = vld [vmem:[%s172 + $0x70] sm:$0xf]
      %v213 = vld [vmem:[%s172 + $0x74] sm:$0x1]
      %v214 = vld [vmem:[%s172 + $0x78] sm:$0xf]
      %v215 = vld [vmem:[%s172 + $0x7c] sm:$0xf]
      %v216 = vld [vmem:[%s172 + $0x80] sm:$0x1]
      %v217 = vld [vmem:[%s172 + $0x84] sm:$0xf]
      %v218 = vld [vmem:[%s172 + $0x88] sm:$0xf]
      %v219 = vld [vmem:[%s172 + $0x8c] sm:$0x1]
      %v220 = vld [vmem:[%s172 + $0x90] sm:$0xf]
      %v221 = vld [vmem:[%s172 + $0x94] sm:$0xf]
      %v222 = vld [vmem:[%s172 + $0x98] sm:$0x1]
      %v223 = vld [vmem:[%s172 + $0x9c] sm:$0xf]
      %v224 = vld [vmem:[%s172 + $0xa0] sm:$0xf]
      %v225 = vld [vmem:[%s172 + $0xa4] sm:$0x1]
      %v226 = vld [vmem:[%s172 + $0xa8] sm:$0xf]
      %v227 = vld [vmem:[%s172 + $0xac] sm:$0xf]
      %v228 = vld [vmem:[%s172 + $0xb0] sm:$0x1]
      %v229 = vld [vmem:[%s172 + $0xb4] sm:$0xf]
      %v230 = vld [vmem:[%s172 + $0xb8] sm:$0xf]
      %v231 = vld [vmem:[%s172 + $0xbc] sm:$0x1]
      %v232 = vld [vmem:[%s172 + $0xc0] sm:$0xf]
      %v233 = vld [vmem:[%s172 + $0xc4] sm:$0xf]
      %v234 = vld [vmem:[%s172 + $0xc8] sm:$0x1]
      %v235 = vld [vmem:[%s172 + $0xcc] sm:$0xf]
      %v236 = vld [vmem:[%s172 + $0xd0] sm:$0xf]
      %v237 = vld [vmem:[%s172 + $0xd4] sm:$0x1]
      %v270 = vunpack.c.l.b16 %v184
      %v271 = vunpack.c.l.b16 %v185
      %v272 = vunpack.c.l.b16 %v187
      %v273 = vunpack.c.l.b16 %v188
      %v274 = vunpack.c.l.b16 %v190
      %v275 = vunpack.c.l.b16 %v191
      %v276 = vunpack.c.l.b16 %v193
      %v277 = vunpack.c.l.b16 %v194
      %v278 = vunpack.c.l.b16 %v196
      %v279 = vunpack.c.l.b16 %v197
      %v280 = vunpack.c.l.b16 %v199
      %v281 = vunpack.c.l.b16 %v200
      %v282 = vunpack.c.l.b16 %v202
      %v283 = vunpack.c.l.b16 %v203
      %v284 = vunpack.c.l.b16 %v205
      %v285 = vunpack.c.l.b16 %v206
      %v286 = vunpack.c.l.b16 %v208
      %v287 = vunpack.c.l.b16 %v209
      %v288 = vunpack.c.l.b16 %v211
      %v289 = vunpack.c.l.b16 %v212
      %v290 = vunpack.c.l.b16 %v214
      %v291 = vunpack.c.l.b16 %v215
      %v292 = vunpack.c.l.b16 %v217
      %v293 = vunpack.c.l.b16 %v218
      %v294 = vunpack.c.l.b16 %v220
      %v295 = vunpack.c.l.b16 %v221
      %v296 = vunpack.c.l.b16 %v223
      %v297 = vunpack.c.l.b16 %v224
      %v298 = vunpack.c.l.b16 %v226
      %v299 = vunpack.c.l.b16 %v227
      %v300 = vunpack.c.l.b16 %v229
      %v301 = vunpack.c.l.b16 %v230
      %v302 = vpack.c.b16 %v271, %v270
      %v303 = vpack.c.b16 %v273, %v272
      %v304 = vpack.c.b16 %v275, %v274
      %v305 = vpack.c.b16 %v277, %v276
      %v306 = vpack.c.b16 %v279, %v278
      %v307 = vpack.c.b16 %v281, %v280
      %v308 = vpack.c.b16 %v283, %v282
      %v309 = vpack.c.b16 %v285, %v284
      %v310 = vpack.c.b16 %v287, %v286
      %v311 = vpack.c.b16 %v289, %v288
      %v312 = vpack.c.b16 %v291, %v290
      %v313 = vpack.c.b16 %v293, %v292
      %v314 = vpack.c.b16 %v295, %v294
      %v315 = vpack.c.b16 %v297, %v296
      %v316 = vpack.c.b16 %v299, %v298
      %v317 = vpack.c.b16 %v301, %v300
      %v334 = vunpack.c.l.b16 %v186
      %v335 = vunpack.c.l.b16 %v189
      %v336 = vunpack.c.l.b16 %v192
      %v337 = vunpack.c.l.b16 %v195
      %v338 = vunpack.c.l.b16 %v198
      %v339 = vunpack.c.l.b16 %v201
      %v340 = vunpack.c.l.b16 %v204
      %v341 = vunpack.c.l.b16 %v207
      %v342 = vunpack.c.l.b16 %v210
      %v343 = vunpack.c.l.b16 %v213
      %v344 = vunpack.c.l.b16 %v216
      %v345 = vunpack.c.l.b16 %v219
      %v346 = vunpack.c.l.b16 %v222
      %v347 = vunpack.c.l.b16 %v225
      %v348 = vunpack.c.l.b16 %v228
      %v349 = vunpack.c.l.b16 %v231
      %v350 = vpack.c.b16 %v334, %v334
      %v351 = vpack.c.b16 %v335, %v335
      %v352 = vpack.c.b16 %v336, %v336
      %v353 = vpack.c.b16 %v337, %v337
      %v354 = vpack.c.b16 %v338, %v338
      %v355 = vpack.c.b16 %v339, %v339
      %v356 = vpack.c.b16 %v340, %v340
      %v357 = vpack.c.b16 %v341, %v341
      %v358 = vpack.c.b16 %v342, %v342
      %v359 = vpack.c.b16 %v343, %v343
      %v360 = vpack.c.b16 %v344, %v344
      %v361 = vpack.c.b16 %v345, %v345
      %v362 = vpack.c.b16 %v346, %v346
      %v363 = vpack.c.b16 %v347, %v347
      %v364 = vpack.c.b16 %v348, %v348
      %v365 = vpack.c.b16 %v349, %v349
      %vm366 = vsmask.f32 7424
      %v368 = vshrl.u32 %v302, 16
      %v370 = vshll.u32 %v302, 16
      %v372 = vrot.slane %v370, 1
      %v373 = vor.u32 %v368, %v372
      %v375 = vshll.u32 %v350, 16
      %v377 = vrot.slane %v375, 1
      %v378 = vsel %vm366, %v373, %v377
      %v380 = vshrl.u32 %v303, 16
      %v382 = vshll.u32 %v303, 16
      %v384 = vrot.slane %v382, 1
      %v385 = vor.u32 %v380, %v384
      %v387 = vshll.u32 %v351, 16
      %v389 = vrot.slane %v387, 1
      %v390 = vsel %vm366, %v385, %v389
      %v392 = vshrl.u32 %v304, 16
      %v394 = vshll.u32 %v304, 16
      %v396 = vrot.slane %v394, 1
      %v397 = vor.u32 %v392, %v396
      %v399 = vshll.u32 %v352, 16
      %v401 = vrot.slane %v399, 1
      %v402 = vsel %vm366, %v397, %v401
      %v404 = vshrl.u32 %v305, 16
      %v406 = vshll.u32 %v305, 16
      %v408 = vrot.slane %v406, 1
      %v409 = vor.u32 %v404, %v408
      %v411 = vshll.u32 %v353, 16
      %v413 = vrot.slane %v411, 1
      %v414 = vsel %vm366, %v409, %v413
      %v416 = vshrl.u32 %v306, 16
      %v418 = vshll.u32 %v306, 16
      %v420 = vrot.slane %v418, 1
      %v421 = vor.u32 %v416, %v420
      %v423 = vshll.u32 %v354, 16
      %v425 = vrot.slane %v423, 1
      %v426 = vsel %vm366, %v421, %v425
      %v428 = vshrl.u32 %v307, 16
      %v430 = vshll.u32 %v307, 16
      %v432 = vrot.slane %v430, 1
      %v433 = vor.u32 %v428, %v432
      %v435 = vshll.u32 %v355, 16
      %v437 = vrot.slane %v435, 1
      %v438 = vsel %vm366, %v433, %v437
      %v440 = vshrl.u32 %v308, 16
      %v442 = vshll.u32 %v308, 16
      %v444 = vrot.slane %v442, 1
      %v445 = vor.u32 %v440, %v444
      %v447 = vshll.u32 %v356, 16
      %v449 = vrot.slane %v447, 1
      %v450 = vsel %vm366, %v445, %v449
      %v452 = vshrl.u32 %v309, 16
      %v454 = vshll.u32 %v309, 16
      %v456 = vrot.slane %v454, 1
      %v457 = vor.u32 %v452, %v456
      %v459 = vshll.u32 %v357, 16
      %v461 = vrot.slane %v459, 1
      %v462 = vsel %vm366, %v457, %v461
      %v464 = vshrl.u32 %v310, 16
      %v466 = vshll.u32 %v310, 16
      %v468 = vrot.slane %v466, 1
      %v469 = vor.u32 %v464, %v468
      %v471 = vshll.u32 %v358, 16
      %v473 = vrot.slane %v471, 1
      %v474 = vsel %vm366, %v469, %v473
      %v476 = vshrl.u32 %v311, 16
      %v478 = vshll.u32 %v311, 16
      %v480 = vrot.slane %v478, 1
      %v481 = vor.u32 %v476, %v480
      %v483 = vshll.u32 %v359, 16
      %v485 = vrot.slane %v483, 1
      %v486 = vsel %vm366, %v481, %v485
      %v488 = vshrl.u32 %v312, 16
      %v490 = vshll.u32 %v312, 16
      %v492 = vrot.slane %v490, 1
      %v493 = vor.u32 %v488, %v492
      %v495 = vshll.u32 %v360, 16
      %v497 = vrot.slane %v495, 1
      %v498 = vsel %vm366, %v493, %v497
      %v500 = vshrl.u32 %v313, 16
      %v502 = vshll.u32 %v313, 16
      %v504 = vrot.slane %v502, 1
      %v505 = vor.u32 %v500, %v504
      %v507 = vshll.u32 %v361, 16
      %v509 = vrot.slane %v507, 1
      %v510 = vsel %vm366, %v505, %v509
      %v512 = vshrl.u32 %v314, 16
      %v514 = vshll.u32 %v314, 16
      %v516 = vrot.slane %v514, 1
      %v517 = vor.u32 %v512, %v516
      %v519 = vshll.u32 %v362, 16
      %v521 = vrot.slane %v519, 1
      %v522 = vsel %vm366, %v517, %v521
      %v524 = vshrl.u32 %v315, 16
      %v526 = vshll.u32 %v315, 16
      %v528 = vrot.slane %v526, 1
      %v529 = vor.u32 %v524, %v528
      %v531 = vshll.u32 %v363, 16
      %v533 = vrot.slane %v531, 1
      %v534 = vsel %vm366, %v529, %v533
      %v536 = vshrl.u32 %v316, 16
      %v538 = vshll.u32 %v316, 16
      %v540 = vrot.slane %v538, 1
      %v541 = vor.u32 %v536, %v540
      %v543 = vshll.u32 %v364, 16
      %v545 = vrot.slane %v543, 1
      %v546 = vsel %vm366, %v541, %v545
      %v548 = vshrl.u32 %v317, 16
      %v550 = vshll.u32 %v317, 16
      %v552 = vrot.slane %v550, 1
      %v553 = vor.u32 %v548, %v552
      %v555 = vshll.u32 %v365, 16
      %v557 = vrot.slane %v555, 1
      %v558 = vsel %vm366, %v553, %v557
      %559 = vrot.lane.b32.xlu0 %v378, 4
      %v560 = vpop.permute.xlu0 %559
      %561 = vrot.lane.b32.xlu0 %v390, 4
      %v562 = vpop.permute.xlu0 %561
      %563 = vrot.lane.b32.xlu0 %v402, 4
      %v564 = vpop.permute.xlu0 %563
      %565 = vrot.lane.b32.xlu0 %v414, 4
      %v566 = vpop.permute.xlu0 %565
      %567 = vrot.lane.b32.xlu0 %v426, 4
      %v568 = vpop.permute.xlu0 %567
      %569 = vrot.lane.b32.xlu0 %v438, 4
      %v570 = vpop.permute.xlu0 %569
      %571 = vrot.lane.b32.xlu0 %v450, 4
      %v572 = vpop.permute.xlu0 %571
      %573 = vrot.lane.b32.xlu0 %v462, 4
      %v574 = vpop.permute.xlu0 %573
      %575 = vrot.lane.b32.xlu0 %v474, 4
      %v576 = vpop.permute.xlu0 %575
      %577 = vrot.lane.b32.xlu0 %v486, 4
      %v578 = vpop.permute.xlu0 %577
      %579 = vrot.lane.b32.xlu0 %v498, 4
      %v580 = vpop.permute.xlu0 %579
      %581 = vrot.lane.b32.xlu0 %v510, 4
      %v582 = vpop.permute.xlu0 %581
      %583 = vrot.lane.b32.xlu0 %v522, 4
      %v584 = vpop.permute.xlu0 %583
      %585 = vrot.lane.b32.xlu0 %v534, 4
      %v586 = vpop.permute.xlu0 %585
      %587 = vrot.lane.b32.xlu0 %v546, 4
      %v588 = vpop.permute.xlu0 %587
      %589 = vrot.lane.b32.xlu0 %v558, 4
      %v590 = vpop.permute.xlu0 %589
      %vm591 = vcmask 1046528
      %v592 = vrot.slane %v302, 1
      %v593 = vrot.slane %v350, 1
      %v594 = vsel %vm591, %v592, %v593
      %v595 = vrot.slane %v303, 1
      %v596 = vrot.slane %v351, 1
      %v597 = vsel %vm591, %v595, %v596
      %v598 = vrot.slane %v304, 1
      %v599 = vrot.slane %v352, 1
      %v600 = vsel %vm591, %v598, %v599
      %v601 = vrot.slane %v305, 1
      %v602 = vrot.slane %v353, 1
      %v603 = vsel %vm591, %v601, %v602
      %v604 = vrot.slane %v306, 1
      %v605 = vrot.slane %v354, 1
      %v606 = vsel %vm591, %v604, %v605
      %v607 = vrot.slane %v307, 1
      %v608 = vrot.slane %v355, 1
      %v609 = vsel %vm591, %v607, %v608
      %v610 = vrot.slane %v308, 1
      %v611 = vrot.slane %v356, 1
      %v612 = vsel %vm591, %v610, %v611
      %v613 = vrot.slane %v309, 1
      %v614 = vrot.slane %v357, 1
      %v615 = vsel %vm591, %v613, %v614
      %v616 = vrot.slane %v310, 1
      %v617 = vrot.slane %v358, 1
      %v618 = vsel %vm591, %v616, %v617
      %v619 = vrot.slane %v311, 1
      %v620 = vrot.slane %v359, 1
      %v621 = vsel %vm591, %v619, %v620
      %v622 = vrot.slane %v312, 1
      %v623 = vrot.slane %v360, 1
      %v624 = vsel %vm591, %v622, %v623
      %v625 = vrot.slane %v313, 1
      %v626 = vrot.slane %v361, 1
      %v627 = vsel %vm591, %v625, %v626
      %v628 = vrot.slane %v314, 1
      %v629 = vrot.slane %v362, 1
      %v630 = vsel %vm591, %v628, %v629
      %v631 = vrot.slane %v315, 1
      %v632 = vrot.slane %v363, 1
      %v633 = vsel %vm591, %v631, %v632
      %v634 = vrot.slane %v316, 1
      %v635 = vrot.slane %v364, 1
      %v636 = vsel %vm591, %v634, %v635
      %v637 = vrot.slane %v317, 1
      %v638 = vrot.slane %v365, 1
      %v639 = vsel %vm591, %v637, %v638
      %640 = vrot.lane.b32.xlu0 %v594, 8
      %v641 = vpop.permute.xlu0 %640
      %642 = vrot.lane.b32.xlu0 %v597, 8
      %v643 = vpop.permute.xlu0 %642
      %644 = vrot.lane.b32.xlu0 %v600, 8
      %v645 = vpop.permute.xlu0 %644
      %646 = vrot.lane.b32.xlu0 %v603, 8
      %v647 = vpop.permute.xlu0 %646
      %648 = vrot.lane.b32.xlu0 %v606, 8
      %v649 = vpop.permute.xlu0 %648
      %650 = vrot.lane.b32.xlu0 %v609, 8
      %v651 = vpop.permute.xlu0 %650
      %652 = vrot.lane.b32.xlu0 %v612, 8
      %v653 = vpop.permute.xlu0 %652
      %654 = vrot.lane.b32.xlu0 %v615, 8
      %v655 = vpop.permute.xlu0 %654
      %656 = vrot.lane.b32.xlu0 %v618, 8
      %v657 = vpop.permute.xlu0 %656
      %658 = vrot.lane.b32.xlu0 %v621, 8
      %v659 = vpop.permute.xlu0 %658
      %660 = vrot.lane.b32.xlu0 %v624, 8
      %v661 = vpop.permute.xlu0 %660
      %662 = vrot.lane.b32.xlu0 %v627, 8
      %v663 = vpop.permute.xlu0 %662
      %664 = vrot.lane.b32.xlu0 %v630, 8
      %v665 = vpop.permute.xlu0 %664
      %666 = vrot.lane.b32.xlu0 %v633, 8
      %v667 = vpop.permute.xlu0 %666
      %668 = vrot.lane.b32.xlu0 %v636, 8
      %v669 = vpop.permute.xlu0 %668
      %670 = vrot.lane.b32.xlu0 %v639, 8
      %v671 = vpop.permute.xlu0 %670
      %vm672 = vcmask 31744
      %v674 = vsel %vm672, %v302, %v560
      %v676 = vsel %vm672, %v303, %v562
      %v678 = vsel %vm672, %v304, %v564
      %v680 = vsel %vm672, %v305, %v566
      %v682 = vsel %vm672, %v306, %v568
      %v684 = vsel %vm672, %v307, %v570
      %v686 = vsel %vm672, %v308, %v572
      %v688 = vsel %vm672, %v309, %v574
      %v690 = vsel %vm672, %v310, %v576
      %v692 = vsel %vm672, %v311, %v578
      %v694 = vsel %vm672, %v312, %v580
      %v696 = vsel %vm672, %v313, %v582
      %v698 = vsel %vm672, %v314, %v584
      %v700 = vsel %vm672, %v315, %v586
      %v702 = vsel %vm672, %v316, %v588
      %v704 = vsel %vm672, %v317, %v590
      %vm705 = vcmask 64512
      %v707 = vsel %vm705, %v674, %v641
      %v709 = vsel %vm705, %v676, %v643
      %v711 = vsel %vm705, %v678, %v645
      %v713 = vsel %vm705, %v680, %v647
      %v715 = vsel %vm705, %v682, %v649
      %v717 = vsel %vm705, %v684, %v651
      %v719 = vsel %vm705, %v686, %v653
      %v721 = vsel %vm705, %v688, %v655
      %v723 = vsel %vm705, %v690, %v657
      %v725 = vsel %vm705, %v692, %v659
      %v727 = vsel %vm705, %v694, %v661
      %v729 = vsel %vm705, %v696, %v663
      %v731 = vsel %vm705, %v698, %v665
      %v733 = vsel %vm705, %v700, %v667
      %v735 = vsel %vm705, %v702, %v669
      %v737 = vsel %vm705, %v704, %v671
      %v738 = vld [vmem:[%s1] sm:$0xf]
      %v739 = vld [vmem:[%s1 + $0x4] sm:$0x3]
      %v742 = vunpack.c.l.b16 %v738
      %v743 = vunpack.c.l.b16 %v739
      %v744 = vpack.c.b16 %v743, %v742
      %vm745 = vcmask 97280
      %v746 = vsel %vm745, %v707, 0
      %v748 = vsel %vm745, %v709, 0
      %v750 = vsel %vm745, %v711, 0
      %v752 = vsel %vm745, %v713, 0
      %v754 = vsel %vm745, %v715, 0
      %v756 = vsel %vm745, %v717, 0
      %v758 = vsel %vm745, %v719, 0
      %v760 = vsel %vm745, %v721, 0
      %v762 = vsel %vm745, %v723, 0
      %v764 = vsel %vm745, %v725, 0
      %v766 = vsel %vm745, %v727, 0
      %v768 = vsel %vm745, %v729, 0
      %v770 = vsel %vm745, %v731, 0
      %v772 = vsel %vm745, %v733, 0
      %v774 = vsel %vm745, %v735, 0
      %v776 = vsel %vm745, %v737, 0
      %vm778 = vcmask 1045504
      %v780 = vsel %vm778, %v744, 0
      %782 = vmatprep.subr.bf16.mxu0 0
      %783 = vmatpush1.bf16.msra.mxu0 %v780
      %784 = vmatprep.subr.bf16.mxu0 0
      %785 = vmatpush1.bf16.msra.mxu0 0
      %786 = vmatprep.subr.bf16.mxu0 0
      %787 = vmatpush1.bf16.msra.mxu0 0
      %788 = vmatprep.subr.bf16.mxu0 0
      %789 = vmatpush1.bf16.msra.mxu0 0
      %790 = vmatprep.subr.bf16.mxu0 0
      %791 = vmatpush1.bf16.msra.mxu0 0
      %792 = vmatprep.subr.bf16.mxu0 0
      %793 = vmatpush1.bf16.msra.mxu0 0
      %794 = vmatprep.subr.bf16.mxu0 0
      %795 = vmatpush1.bf16.msra.mxu0 0
      %796 = vmatprep.subr.bf16.mxu0 0
      %797 = vmatpush1.bf16.msra.mxu0 0
      %798 = vmatprep.subr.bf16.mxu0 0
      %799 = vmatpush1.bf16.msra.mxu0 0
      %800 = vmatprep.subr.bf16.mxu0 0
      %801 = vmatpush1.bf16.msra.mxu0 0
      %802 = vmatprep.subr.bf16.mxu0 0
      %803 = vmatpush1.bf16.msra.mxu0 0
      %804 = vmatprep.subr.bf16.mxu0 0
      %805 = vmatpush1.bf16.msra.mxu0 0
      %806 = vmatprep.subr.bf16.mxu0 0
      %807 = vmatpush1.bf16.msra.mxu0 0
      %808 = vmatprep.subr.bf16.mxu0 0
      %809 = vmatpush1.bf16.msra.mxu0 0
      %810 = vmatprep.subr.bf16.mxu0 0
      %811 = vmatpush1.bf16.msra.mxu0 0
      %812 = vmatprep.subr.bf16.mxu0 0
      %813 = vmatpush1.bf16.msra.mxu0 0
      %814 = vmatprep.mubr.bf16.mxu0 0
      %815 = vmatmul.mubr.bf16.gmra.mrb[0].mxu0 %v746
      %v816 = vpop.f32.mrb[0].mxu0
      %v817 = vadd.f32 0.0, %v816
      %v818 = vpop.f32.mrb[0].mxu0
      %v819 = vpop.f32.mrb[0].mxu0
      %v820 = vadd.f32 0.0, %v819
      %v821 = vpop.f32.mrb[0].mxu0
      %822 = vmatprep.mubr.bf16.mxu0 0
      %823 = vmatmul.mubr.bf16.gmra.mrb[0].mxu0 %v748
      %v824 = vpop.f32.mrb[0].mxu0
      %v825 = vadd.f32 0.0, %v824
      %v826 = vpop.f32.mrb[0].mxu0
      %v827 = vpop.f32.mrb[0].mxu0
      %v828 = vadd.f32 0.0, %v827
      %v829 = vpop.f32.mrb[0].mxu0
      %830 = vmatprep.mubr.bf16.mxu0 0
      %831 = vmatmul.mubr.bf16.gmra.mrb[0].mxu0 %v750
      %v832 = vpop.f32.mrb[0].mxu0
      %v833 = vadd.f32 0.0, %v832
      %v834 = vpop.f32.mrb[0].mxu0
      %v835 = vpop.f32.mrb[0].mxu0
      %v836 = vadd.f32 0.0, %v835
      %v837 = vpop.f32.mrb[0].mxu0
      %838 = vmatprep.mubr.bf16.mxu0 0
      %839 = vmatmul.mubr.bf16.gmra.mrb[0].mxu0 %v752
      %v840 = vpop.f32.mrb[0].mxu0
      %v841 = vadd.f32 0.0, %v840
      %v842 = vpop.f32.mrb[0].mxu0
      %v843 = vpop.f32.mrb[0].mxu0
      %v844 = vadd.f32 0.0, %v843
      %v845 = vpop.f32.mrb[0].mxu0
      %846 = vmatprep.mubr.bf16.mxu0 0
      %847 = vmatmul.mubr.bf16.gmra.mrb[0].mxu0 %v754
      %v848 = vpop.f32.mrb[0].mxu0
      %v849 = vadd.f32 0.0, %v848
      %v850 = vpop.f32.mrb[0].mxu0
      %v851 = vpop.f32.mrb[0].mxu0
      %v852 = vadd.f32 0.0, %v851
      %v853 = vpop.f32.mrb[0].mxu0
      %854 = vmatprep.mubr.bf16.mxu0 0
      %855 = vmatmul.mubr.bf16.gmra.mrb[0].mxu0 %v756
      %v856 = vpop.f32.mrb[0].mxu0
      %v857 = vadd.f32 0.0, %v856
      %v858 = vpop.f32.mrb[0].mxu0
      %v859 = vpop.f32.mrb[0].mxu0
      %v860 = vadd.f32 0.0, %v859
      %v861 = vpop.f32.mrb[0].mxu0
      %862 = vmatprep.mubr.bf16.mxu0 0
      %863 = vmatmul.mubr.bf16.gmra.mrb[0].mxu0 %v758
      %v864 = vpop.f32.mrb[0].mxu0
      %v865 = vadd.f32 0.0, %v864
      %v866 = vpop.f32.mrb[0].mxu0
      %v867 = vpop.f32.mrb[0].mxu0
      %v868 = vadd.f32 0.0, %v867
      %v869 = vpop.f32.mrb[0].mxu0
      %870 = vmatprep.mubr.bf16.mxu0 0
      %871 = vmatmul.mubr.bf16.gmra.mrb[0].mxu0 %v760
      %v872 = vpop.f32.mrb[0].mxu0
      %v873 = vadd.f32 0.0, %v872
      %v874 = vpop.f32.mrb[0].mxu0
      %v875 = vpop.f32.mrb[0].mxu0
      %v876 = vadd.f32 0.0, %v875
      %v877 = vpop.f32.mrb[0].mxu0
      %878 = vmatprep.mubr.bf16.mxu0 0
      %879 = vmatmul.mubr.bf16.gmra.mrb[0].mxu0 %v762
      %v880 = vpop.f32.mrb[0].mxu0
      %v881 = vadd.f32 0.0, %v880
      %v882 = vpop.f32.mrb[0].mxu0
      %v883 = vpop.f32.mrb[0].mxu0
      %v884 = vadd.f32 0.0, %v883
      %v885 = vpop.f32.mrb[0].mxu0
      %886 = vmatprep.mubr.bf16.mxu0 0
      %887 = vmatmul.mubr.bf16.gmra.mrb[0].mxu0 %v764
      %v888 = vpop.f32.mrb[0].mxu0
      %v889 = vadd.f32 0.0, %v888
      %v890 = vpop.f32.mrb[0].mxu0
      %v891 = vpop.f32.mrb[0].mxu0
      %v892 = vadd.f32 0.0, %v891
      %v893 = vpop.f32.mrb[0].mxu0
      %894 = vmatprep.mubr.bf16.mxu0 0
      %895 = vmatmul.mubr.bf16.gmra.mrb[0].mxu0 %v766
      %v896 = vpop.f32.mrb[0].mxu0
      %v897 = vadd.f32 0.0, %v896
      %v898 = vpop.f32.mrb[0].mxu0
      %v899 = vpop.f32.mrb[0].mxu0
      %v900 = vadd.f32 0.0, %v899
      %v901 = vpop.f32.mrb[0].mxu0
      %902 = vmatprep.mubr.bf16.mxu0 0
      %903 = vmatmul.mubr.bf16.gmra.mrb[0].mxu0 %v768
      %v904 = vpop.f32.mrb[0].mxu0
      %v905 = vadd.f32 0.0, %v904
      %v906 = vpop.f32.mrb[0].mxu0
      %v907 = vpop.f32.mrb[0].mxu0
      %v908 = vadd.f32 0.0, %v907
      %v909 = vpop.f32.mrb[0].mxu0
      %910 = vmatprep.mubr.bf16.mxu0 0
      %911 = vmatmul.mubr.bf16.gmra.mrb[0].mxu0 %v770
      %v912 = vpop.f32.mrb[0].mxu0
      %v913 = vadd.f32 0.0, %v912
      %v914 = vpop.f32.mrb[0].mxu0
      %v915 = vpop.f32.mrb[0].mxu0
      %v916 = vadd.f32 0.0, %v915
      %v917 = vpop.f32.mrb[0].mxu0
      %918 = vmatprep.mubr.bf16.mxu0 0
      %919 = vmatmul.mubr.bf16.gmra.mrb[0].mxu0 %v772
      %v920 = vpop.f32.mrb[0].mxu0
      %v921 = vadd.f32 0.0, %v920
      %v922 = vpop.f32.mrb[0].mxu0
      %v923 = vpop.f32.mrb[0].mxu0
      %v924 = vadd.f32 0.0, %v923
      %v925 = vpop.f32.mrb[0].mxu0
      %926 = vmatprep.mubr.bf16.mxu0 0
      %927 = vmatmul.mubr.bf16.gmra.mrb[0].mxu0 %v774
      %v928 = vpop.f32.mrb[0].mxu0
      %v929 = vadd.f32 0.0, %v928
      %v930 = vpop.f32.mrb[0].mxu0
      %v931 = vpop.f32.mrb[0].mxu0
      %v932 = vadd.f32 0.0, %v931
      %v933 = vpop.f32.mrb[0].mxu0
      %934 = vmatprep.mubr.bf16.mxu0 0
      %935 = vmatmul.mubr.bf16.gmra.mrb[0].mxu0 %v776
      %v936 = vpop.f32.mrb[0].mxu0
      %v937 = vadd.f32 0.0, %v936
      %v938 = vpop.f32.mrb[0].mxu0
      %v939 = vpop.f32.mrb[0].mxu0
      %v940 = vadd.f32 0.0, %v939
      %v941 = vpop.f32.mrb[0].mxu0
      %942 = vdwg.mxu0
      %943 = vst.msk [vmem:[#allocation2] sm:$0xff] %vm672, %v817
      %944 = vst.msk [vmem:[#allocation2 + $0x8] sm:$0xff] %vm672, %v820
      %945 = vst.msk [vmem:[#allocation2 + $0x10] sm:$0xff] %vm672, %v825
      %946 = vst.msk [vmem:[#allocation2 + $0x18] sm:$0xff] %vm672, %v828
      %947 = vst.msk [vmem:[#allocation2 + $0x20] sm:$0xff] %vm672, %v833
      %948 = vst.msk [vmem:[#allocation2 + $0x28] sm:$0xff] %vm672, %v836
      %949 = vst.msk [vmem:[#allocation2 + $0x30] sm:$0xff] %vm672, %v841
      %950 = vst.msk [vmem:[#allocation2 + $0x38] sm:$0xff] %vm672, %v844
      %951 = vst.msk [vmem:[#allocation2 + $0x40] sm:$0xff] %vm672, %v849
      %952 = vst.msk [vmem:[#allocation2 + $0x48] sm:$0xff] %vm672, %v852
      %953 = vst.msk [vmem:[#allocation2 + $0x50] sm:$0xff] %vm672, %v857
      %954 = vst.msk [vmem:[#allocation2 + $0x58] sm:$0xff] %vm672, %v860
      %955 = vst.msk [vmem:[#allocation2 + $0x60] sm:$0xff] %vm672, %v865
      %956 = vst.msk [vmem:[#allocation2 + $0x68] sm:$0xff] %vm672, %v868
      %957 = vst.msk [vmem:[#allocation2 + $0x70] sm:$0xff] %vm672, %v873
      %958 = vst.msk [vmem:[#allocation2 + $0x78] sm:$0xff] %vm672, %v876
      %959 = vst.msk [vmem:[#allocation2 + $0x80] sm:$0xff] %vm672, %v881
      %960 = vst.msk [vmem:[#allocation2 + $0x88] sm:$0xff] %vm672, %v884
      %961 = vst.msk [vmem:[#allocation2 + $0x90] sm:$0xff] %vm672, %v889
      %962 = vst.msk [vmem:[#allocation2 + $0x98] sm:$0xff] %vm672, %v892
      %963 = vst.msk [vmem:[#allocation2 + $0xa0] sm:$0xff] %vm672, %v897
      %964 = vst.msk [vmem:[#allocation2 + $0xa8] sm:$0xff] %vm672, %v900
      %965 = vst.msk [vmem:[#allocation2 + $0xb0] sm:$0xff] %vm672, %v905
      %966 = vst.msk [vmem:[#allocation2 + $0xb8] sm:$0xff] %vm672, %v908
      %967 = vst.msk [vmem:[#allocation2 + $0xc0] sm:$0xff] %vm672, %v913
      %968 = vst.msk [vmem:[#allocation2 + $0xc8] sm:$0xff] %vm672, %v916
      %969 = vst.msk [vmem:[#allocation2 + $0xd0] sm:$0xff] %vm672, %v921
      %970 = vst.msk [vmem:[#allocation2 + $0xd8] sm:$0xff] %vm672, %v924
      %971 = vst.msk [vmem:[#allocation2 + $0xe0] sm:$0xff] %vm672, %v929
      %972 = vst.msk [vmem:[#allocation2 + $0xe8] sm:$0xff] %vm672, %v932
      %973 = vst.msk [vmem:[#allocation2 + $0xf0] sm:$0xff] %vm672, %v937
      %974 = vst.msk [vmem:[#allocation2 + $0xf8] sm:$0xff] %vm672, %v940
      %v977 = vunpack.c.l.b16 %v232
      %v978 = vunpack.c.l.b16 %v233
      %v979 = vpack.c.b16 %v978, %v977
      %v981 = vunpack.c.l.b16 %v234
      %v982 = vpack.c.b16 %v981, %v981
      %v984 = vshrl.u32 %v979, 16
      %v986 = vshll.u32 %v979, 16
      %v988 = vrot.slane %v986, 1
      %v989 = vor.u32 %v984, %v988
      %v991 = vshll.u32 %v982, 16
      %v993 = vrot.slane %v991, 1
      %v994 = vsel %vm366, %v989, %v993
      %995 = vrot.lane.b32.xlu0 %v994, 4
      %v996 = vpop.permute.xlu0 %995
      %v997 = vrot.slane %v979, 1
      %v998 = vrot.slane %v982, 1
      %v999 = vsel %vm591, %v997, %v998
      %1000 = vrot.lane.b32.xlu0 %v999, 8
      %v1001 = vpop.permute.xlu0 %1000
      %v1003 = vsel %vm672, %v979, %v996
      %v1005 = vsel %vm705, %v1003, %v1001
      %s1006 = scalar_lea.vmem %s1, 8
      %v1007 = vld [vmem:[%s1006] sm:$0xf]
      %v1008 = vld [vmem:[%s1006 + $0x4] sm:$0x3]
      %v1011 = vunpack.c.l.b16 %v1007
      %v1012 = vunpack.c.l.b16 %v1008
      %v1013 = vpack.c.b16 %v1012, %v1011
      %v1014 = vsel %vm745, %v1005, 0
      %v1017 = vsel %vm778, %v1013, 0
      %1019 = vmatprep.subr.bf16.mxu0 0
      %1020 = vmatpush1.bf16.msra.mxu0 %v1017
      %1021 = vmatprep.subr.bf16.mxu0 0
      %1022 = vmatpush1.bf16.msra.mxu0 0
      %1023 = vmatprep.subr.bf16.mxu0 0
      %1024 = vmatpush1.bf16.msra.mxu0 0
      %1025 = vmatprep.subr.bf16.mxu0 0
      %1026 = vmatpush1.bf16.msra.mxu0 0
      %1027 = vmatprep.subr.bf16.mxu0 0
      %1028 = vmatpush1.bf16.msra.mxu0 0
      %1029 = vmatprep.subr.bf16.mxu0 0
      %1030 = vmatpush1.bf16.msra.mxu0 0
      %1031 = vmatprep.subr.bf16.mxu0 0
      %1032 = vmatpush1.bf16.msra.mxu0 0
      %1033 = vmatprep.subr.bf16.mxu0 0
      %1034 = vmatpush1.bf16.msra.mxu0 0
      %1035 = vmatprep.subr.bf16.mxu0 0
      %1036 = vmatpush1.bf16.msra.mxu0 0
      %1037 = vmatprep.subr.bf16.mxu0 0
      %1038 = vmatpush1.bf16.msra.mxu0 0
      %1039 = vmatprep.subr.bf16.mxu0 0
      %1040 = vmatpush1.bf16.msra.mxu0 0
      %1041 = vmatprep.subr.bf16.mxu0 0
      %1042 = vmatpush1.bf16.msra.mxu0 0
      %1043 = vmatprep.subr.bf16.mxu0 0
      %1044 = vmatpush1.bf16.msra.mxu0 0
      %1045 = vmatprep.subr.bf16.mxu0 0
      %1046 = vmatpush1.bf16.msra.mxu0 0
      %1047 = vmatprep.subr.bf16.mxu0 0
      %1048 = vmatpush1.bf16.msra.mxu0 0
      %1049 = vmatprep.subr.bf16.mxu0 0
      %1050 = vmatpush1.bf16.msra.mxu0 0
      %1051 = vmatprep.mubr.bf16.mxu0 0
      %1052 = vmatmul.mubr.bf16.gmra.mrb[0].mxu0 %v748
      %v1053 = vpop.f32.mrb[0].mxu0
      %v1054 = vadd.f32 0.0, %v1053
      %v1055 = vpop.f32.mrb[0].mxu0
      %v1056 = vpop.f32.mrb[0].mxu0
      %v1057 = vadd.f32 0.0, %v1056
      %v1058 = vpop.f32.mrb[0].mxu0
      %1059 = vmatprep.mubr.bf16.mxu0 0
      %1060 = vmatmul.mubr.bf16.gmra.mrb[0].mxu0 %v750
      %v1061 = vpop.f32.mrb[0].mxu0
      %v1062 = vadd.f32 0.0, %v1061
      %v1063 = vpop.f32.mrb[0].mxu0
      %v1064 = vpop.f32.mrb[0].mxu0
      %v1065 = vadd.f32 0.0, %v1064
      %v1066 = vpop.f32.mrb[0].mxu0
      %1067 = vmatprep.mubr.bf16.mxu0 0
      %1068 = vmatmul.mubr.bf16.gmra.mrb[0].mxu0 %v752
      %v1069 = vpop.f32.mrb[0].mxu0
      %v1070 = vadd.f32 0.0, %v1069
      %v1071 = vpop.f32.mrb[0].mxu0
      %v1072 = vpop.f32.mrb[0].mxu0
      %v1073 = vadd.f32 0.0, %v1072
      %v1074 = vpop.f32.mrb[0].mxu0
      %1075 = vmatprep.mubr.bf16.mxu0 0
      %1076 = vmatmul.mubr.bf16.gmra.mrb[0].mxu0 %v754
      %v1077 = vpop.f32.mrb[0].mxu0
      %v1078 = vadd.f32 0.0, %v1077
      %v1079 = vpop.f32.mrb[0].mxu0
      %v1080 = vpop.f32.mrb[0].mxu0
      %v1081 = vadd.f32 0.0, %v1080
      %v1082 = vpop.f32.mrb[0].mxu0
      %1083 = vmatprep.mubr.bf16.mxu0 0
      %1084 = vmatmul.mubr.bf16.gmra.mrb[0].mxu0 %v756
      %v1085 = vpop.f32.mrb[0].mxu0
      %v1086 = vadd.f32 0.0, %v1085
      %v1087 = vpop.f32.mrb[0].mxu0
      %v1088 = vpop.f32.mrb[0].mxu0
      %v1089 = vadd.f32 0.0, %v1088
      %v1090 = vpop.f32.mrb[0].mxu0
      %1091 = vmatprep.mubr.bf16.mxu0 0
      %1092 = vmatmul.mubr.bf16.gmra.mrb[0].mxu0 %v758
      %v1093 = vpop.f32.mrb[0].mxu0
      %v1094 = vadd.f32 0.0, %v1093
      %v1095 = vpop.f32.mrb[0].mxu0
      %v1096 = vpop.f32.mrb[0].mxu0
      %v1097 = vadd.f32 0.0, %v1096
      %v1098 = vpop.f32.mrb[0].mxu0
      %1099 = vmatprep.mubr.bf16.mxu0 0
      %1100 = vmatmul.mubr.bf16.gmra.mrb[0].mxu0 %v760
      %v1101 = vpop.f32.mrb[0].mxu0
      %v1102 = vadd.f32 0.0, %v1101
      %v1103 = vpop.f32.mrb[0].mxu0
      %v1104 = vpop.f32.mrb[0].mxu0
      %v1105 = vadd.f32 0.0, %v1104
      %v1106 = vpop.f32.mrb[0].mxu0
      %1107 = vmatprep.mubr.bf16.mxu0 0
      %1108 = vmatmul.mubr.bf16.gmra.mrb[0].mxu0 %v762
      %v1109 = vpop.f32.mrb[0].mxu0
      %v1110 = vadd.f32 0.0, %v1109
      %v1111 = vpop.f32.mrb[0].mxu0
      %v1112 = vpop.f32.mrb[0].mxu0
      %v1113 = vadd.f32 0.0, %v1112
      %v1114 = vpop.f32.mrb[0].mxu0
      %1115 = vmatprep.mubr.bf16.mxu0 0
      %1116 = vmatmul.mubr.bf16.gmra.mrb[0].mxu0 %v764
      %v1117 = vpop.f32.mrb[0].mxu0
      %v1118 = vadd.f32 0.0, %v1117
      %v1119 = vpop.f32.mrb[0].mxu0
      %v1120 = vpop.f32.mrb[0].mxu0
      %v1121 = vadd.f32 0.0, %v1120
      %v1122 = vpop.f32.mrb[0].mxu0
      %1123 = vmatprep.mubr.bf16.mxu0 0
      %1124 = vmatmul.mubr.bf16.gmra.mrb[0].mxu0 %v766
      %v1125 = vpop.f32.mrb[0].mxu0
      %v1126 = vadd.f32 0.0, %v1125
      %v1127 = vpop.f32.mrb[0].mxu0
      %v1128 = vpop.f32.mrb[0].mxu0
      %v1129 = vadd.f32 0.0, %v1128
      %v1130 = vpop.f32.mrb[0].mxu0
      %1131 = vmatprep.mubr.bf16.mxu0 0
      %1132 = vmatmul.mubr.bf16.gmra.mrb[0].mxu0 %v768
      %v1133 = vpop.f32.mrb[0].mxu0
      %v1134 = vadd.f32 0.0, %v1133
      %v1135 = vpop.f32.mrb[0].mxu0
      %v1136 = vpop.f32.mrb[0].mxu0
      %v1137 = vadd.f32 0.0, %v1136
      %v1138 = vpop.f32.mrb[0].mxu0
      %1139 = vmatprep.mubr.bf16.mxu0 0
      %1140 = vmatmul.mubr.bf16.gmra.mrb[0].mxu0 %v770
      %v1141 = vpop.f32.mrb[0].mxu0
      %v1142 = vadd.f32 0.0, %v1141
      %v1143 = vpop.f32.mrb[0].mxu0
      %v1144 = vpop.f32.mrb[0].mxu0
      %v1145 = vadd.f32 0.0, %v1144
      %v1146 = vpop.f32.mrb[0].mxu0
      %1147 = vmatprep.mubr.bf16.mxu0 0
      %1148 = vmatmul.mubr.bf16.gmra.mrb[0].mxu0 %v772
      %v1149 = vpop.f32.mrb[0].mxu0
      %v1150 = vadd.f32 0.0, %v1149
      %v1151 = vpop.f32.mrb[0].mxu0
      %v1152 = vpop.f32.mrb[0].mxu0
      %v1153 = vadd.f32 0.0, %v1152
      %v1154 = vpop.f32.mrb[0].mxu0
      %1155 = vmatprep.mubr.bf16.mxu0 0
      %1156 = vmatmul.mubr.bf16.gmra.mrb[0].mxu0 %v774
      %v1157 = vpop.f32.mrb[0].mxu0
      %v1158 = vadd.f32 0.0, %v1157
      %v1159 = vpop.f32.mrb[0].mxu0
      %v1160 = vpop.f32.mrb[0].mxu0
      %v1161 = vadd.f32 0.0, %v1160
      %v1162 = vpop.f32.mrb[0].mxu0
      %1163 = vmatprep.mubr.bf16.mxu0 0
      %1164 = vmatmul.mubr.bf16.gmra.mrb[0].mxu0 %v776
      %v1165 = vpop.f32.mrb[0].mxu0
      %v1166 = vadd.f32 0.0, %v1165
      %v1167 = vpop.f32.mrb[0].mxu0
      %v1168 = vpop.f32.mrb[0].mxu0
      %v1169 = vadd.f32 0.0, %v1168
      %v1170 = vpop.f32.mrb[0].mxu0
      %1171 = vmatprep.mubr.bf16.mxu0 0
      %1172 = vmatmul.mubr.bf16.gmra.mrb[0].mxu0 %v1014
      %v1173 = vpop.f32.mrb[0].mxu0
      %v1174 = vadd.f32 0.0, %v1173
      %v1175 = vpop.f32.mrb[0].mxu0
      %v1176 = vpop.f32.mrb[0].mxu0
      %v1177 = vadd.f32 0.0, %v1176
      %v1178 = vpop.f32.mrb[0].mxu0
      %1179 = vdwg.mxu0
      %v1180 = vld [vmem:[#allocation2] sm:$0xff]
      %v1181 = vld [vmem:[#allocation2 + $0x8] sm:$0xff]
      %v1182 = vld [vmem:[#allocation2 + $0x10] sm:$0xff]
      %v1183 = vld [vmem:[#allocation2 + $0x18] sm:$0xff]
      %v1184 = vld [vmem:[#allocation2 + $0x20] sm:$0xff]
      %v1185 = vld [vmem:[#allocation2 + $0x28] sm:$0xff]
      %v1186 = vld [vmem:[#allocation2 + $0x30] sm:$0xff]
      %v1187 = vld [vmem:[#allocation2 + $0x38] sm:$0xff]
      %v1188 = vld [vmem:[#allocation2 + $0x40] sm:$0xff]
      %v1189 = vld [vmem:[#allocation2 + $0x48] sm:$0xff]
      %v1190 = vld [vmem:[#allocation2 + $0x50] sm:$0xff]
      %v1191 = vld [vmem:[#allocation2 + $0x58] sm:$0xff]
      %v1192 = vld [vmem:[#allocation2 + $0x60] sm:$0xff]
      %v1193 = vld [vmem:[#allocation2 + $0x68] sm:$0xff]
      %v1194 = vld [vmem:[#allocation2 + $0x70] sm:$0xff]
      %v1195 = vld [vmem:[#allocation2 + $0x78] sm:$0xff]
      %v1196 = vld [vmem:[#allocation2 + $0x80] sm:$0xff]
      %v1197 = vld [vmem:[#allocation2 + $0x88] sm:$0xff]
      %v1198 = vld [vmem:[#allocation2 + $0x90] sm:$0xff]
      %v1199 = vld [vmem:[#allocation2 + $0x98] sm:$0xff]
      %v1200 = vld [vmem:[#allocation2 + $0xa0] sm:$0xff]
      %v1201 = vld [vmem:[#allocation2 + $0xa8] sm:$0xff]
      %v1202 = vld [vmem:[#allocation2 + $0xb0] sm:$0xff]
      %v1203 = vld [vmem:[#allocation2 + $0xb8] sm:$0xff]
      %v1204 = vld [vmem:[#allocation2 + $0xc0] sm:$0xff]
      %v1205 = vld [vmem:[#allocation2 + $0xc8] sm:$0xff]
      %v1206 = vld [vmem:[#allocation2 + $0xd0] sm:$0xff]
      %v1207 = vld [vmem:[#allocation2 + $0xd8] sm:$0xff]
      %v1208 = vld [vmem:[#allocation2 + $0xe0] sm:$0xff]
      %v1209 = vld [vmem:[#allocation2 + $0xe8] sm:$0xff]
      %v1210 = vld [vmem:[#allocation2 + $0xf0] sm:$0xff]
      %v1211 = vld [vmem:[#allocation2 + $0xf8] sm:$0xff]
      %v1212 = vadd.f32 %v1180, %v1054
      %v1213 = vadd.f32 %v1181, %v1057
      %v1214 = vadd.f32 %v1182, %v1062
      %v1215 = vadd.f32 %v1183, %v1065
      %v1216 = vadd.f32 %v1184, %v1070
      %v1217 = vadd.f32 %v1185, %v1073
      %v1218 = vadd.f32 %v1186, %v1078
      %v1219 = vadd.f32 %v1187, %v1081
      %v1220 = vadd.f32 %v1188, %v1086
      %v1221 = vadd.f32 %v1189, %v1089
      %v1222 = vadd.f32 %v1190, %v1094
      %v1223 = vadd.f32 %v1191, %v1097
      %v1224 = vadd.f32 %v1192, %v1102
      %v1225 = vadd.f32 %v1193, %v1105
      %v1226 = vadd.f32 %v1194, %v1110
      %v1227 = vadd.f32 %v1195, %v1113
      %v1228 = vadd.f32 %v1196, %v1118
      %v1229 = vadd.f32 %v1197, %v1121
      %v1230 = vadd.f32 %v1198, %v1126
      %v1231 = vadd.f32 %v1199, %v1129
      %v1232 = vadd.f32 %v1200, %v1134
      %v1233 = vadd.f32 %v1201, %v1137
      %v1234 = vadd.f32 %v1202, %v1142
      %v1235 = vadd.f32 %v1203, %v1145
      %v1236 = vadd.f32 %v1204, %v1150
      %v1237 = vadd.f32 %v1205, %v1153
      %v1238 = vadd.f32 %v1206, %v1158
      %v1239 = vadd.f32 %v1207, %v1161
      %v1240 = vadd.f32 %v1208, %v1166
      %v1241 = vadd.f32 %v1209, %v1169
      %v1242 = vadd.f32 %v1210, %v1174
      %v1243 = vadd.f32 %v1211, %v1177
      %1244 = vst.msk [vmem:[#allocation2] sm:$0xff] %vm672, %v1212
      %1245 = vst.msk [vmem:[#allocation2 + $0x8] sm:$0xff] %vm672, %v1213
      %1246 = vst.msk [vmem:[#allocation2 + $0x10] sm:$0xff] %vm672, %v1214
      %1247 = vst.msk [vmem:[#allocation2 + $0x18] sm:$0xff] %vm672, %v1215
      %1248 = vst.msk [vmem:[#allocation2 + $0x20] sm:$0xff] %vm672, %v1216
      %1249 = vst.msk [vmem:[#allocation2 + $0x28] sm:$0xff] %vm672, %v1217
      %1250 = vst.msk [vmem:[#allocation2 + $0x30] sm:$0xff] %vm672, %v1218
      %1251 = vst.msk [vmem:[#allocation2 + $0x38] sm:$0xff] %vm672, %v1219
      %1252 = vst.msk [vmem:[#allocation2 + $0x40] sm:$0xff] %vm672, %v1220
      %1253 = vst.msk [vmem:[#allocation2 + $0x48] sm:$0xff] %vm672, %v1221
      %1254 = vst.msk [vmem:[#allocation2 + $0x50] sm:$0xff] %vm672, %v1222
      %1255 = vst.msk [vmem:[#allocation2 + $0x58] sm:$0xff] %vm672, %v1223
      %1256 = vst.msk [vmem:[#allocation2 + $0x60] sm:$0xff] %vm672, %v1224
      %1257 = vst.msk [vmem:[#allocation2 + $0x68] sm:$0xff] %vm672, %v1225
      %1258 = vst.msk [vmem:[#allocation2 + $0x70] sm:$0xff] %vm672, %v1226
      %1259 = vst.msk [vmem:[#allocation2 + $0x78] sm:$0xff] %vm672, %v1227
      %1260 = vst.msk [vmem:[#allocation2 + $0x80] sm:$0xff] %vm672, %v1228
      %1261 = vst.msk [vmem:[#allocation2 + $0x88] sm:$0xff] %vm672, %v1229
      %1262 = vst.msk [vmem:[#allocation2 + $0x90] sm:$0xff] %vm672, %v1230
      %1263 = vst.msk [vmem:[#allocation2 + $0x98] sm:$0xff] %vm672, %v1231
      %1264 = vst.msk [vmem:[#allocation2 + $0xa0] sm:$0xff] %vm672, %v1232
      %1265 = vst.msk [vmem:[#allocation2 + $0xa8] sm:$0xff] %vm672, %v1233
      %1266 = vst.msk [vmem:[#allocation2 + $0xb0] sm:$0xff] %vm672, %v1234
      %1267 = vst.msk [vmem:[#allocation2 + $0xb8] sm:$0xff] %vm672, %v1235
      %1268 = vst.msk [vmem:[#allocation2 + $0xc0] sm:$0xff] %vm672, %v1236
      %1269 = vst.msk [vmem:[#allocation2 + $0xc8] sm:$0xff] %vm672, %v1237
      %1270 = vst.msk [vmem:[#allocation2 + $0xd0] sm:$0xff] %vm672, %v1238
      %1271 = vst.msk [vmem:[#allocation2 + $0xd8] sm:$0xff] %vm672, %v1239
      %1272 = vst.msk [vmem:[#allocation2 + $0xe0] sm:$0xff] %vm672, %v1240
      %1273 = vst.msk [vmem:[#allocation2 + $0xe8] sm:$0xff] %vm672, %v1241
      %1274 = vst.msk [vmem:[#allocation2 + $0xf0] sm:$0xff] %vm672, %v1242
      %1275 = vst.msk [vmem:[#allocation2 + $0xf8] sm:$0xff] %vm672, %v1243
      %v1278 = vunpack.c.l.b16 %v235
      %v1279 = vunpack.c.l.b16 %v236
      %v1280 = vpack.c.b16 %v1279, %v1278
      %v1282 = vunpack.c.l.b16 %v237
      %v1283 = vpack.c.b16 %v1282, %v1282
      %v1285 = vshrl.u32 %v1280, 16
      %v1287 = vshll.u32 %v1280, 16
      %v1289 = vrot.slane %v1287, 1
      %v1290 = vor.u32 %v1285, %v1289
      %v1292 = vshll.u32 %v1283, 16
      %v1294 = vrot.slane %v1292, 1
      %v1295 = vsel %vm366, %v1290, %v1294
      %1296 = vrot.lane.b32.xlu0 %v1295, 4
      %v1297 = vpop.permute.xlu0 %1296
      %v1298 = vrot.slane %v1280, 1
      %v1299 = vrot.slane %v1283, 1
      %v1300 = vsel %vm591, %v1298, %v1299
      %1301 = vrot.lane.b32.xlu0 %v1300, 8
      %v1302 = vpop.permute.xlu0 %1301
      %v1304 = vsel %vm672, %v1280, %v1297
      %v1306 = vsel %vm705, %v1304, %v1302
      %s1307 = scalar_lea.vmem %s1, 16
      %v1308 = vld [vmem:[%s1307] sm:$0xf]
      %v1309 = vld [vmem:[%s1307 + $0x4] sm:$0x3]
      %v1312 = vunpack.c.l.b16 %v1308
      %v1313 = vunpack.c.l.b16 %v1309
      %v1314 = vpack.c.b16 %v1313, %v1312
      %v1315 = vsel %vm745, %v1306, 0
      %v1318 = vsel %vm778, %v1314, 0
      %1320 = vmatprep.subr.bf16.mxu0 0
      %1321 = vmatpush1.bf16.msra.mxu0 %v1318
      %1322 = vmatprep.subr.bf16.mxu0 0
      %1323 = vmatpush1.bf16.msra.mxu0 0
      %1324 = vmatprep.subr.bf16.mxu0 0
      %1325 = vmatpush1.bf16.msra.mxu0 0
      %1326 = vmatprep.subr.bf16.mxu0 0
      %1327 = vmatpush1.bf16.msra.mxu0 0
      %1328 = vmatprep.subr.bf16.mxu0 0
      %1329 = vmatpush1.bf16.msra.mxu0 0
      %1330 = vmatprep.subr.bf16.mxu0 0
      %1331 = vmatpush1.bf16.msra.mxu0 0
      %1332 = vmatprep.subr.bf16.mxu0 0
      %1333 = vmatpush1.bf16.msra.mxu0 0
      %1334 = vmatprep.subr.bf16.mxu0 0
      %1335 = vmatpush1.bf16.msra.mxu0 0
      %1336 = vmatprep.subr.bf16.mxu0 0
      %1337 = vmatpush1.bf16.msra.mxu0 0
      %1338 = vmatprep.subr.bf16.mxu0 0
      %1339 = vmatpush1.bf16.msra.mxu0 0
      %1340 = vmatprep.subr.bf16.mxu0 0
      %1341 = vmatpush1.bf16.msra.mxu0 0
      %1342 = vmatprep.subr.bf16.mxu0 0
      %1343 = vmatpush1.bf16.msra.mxu0 0
      %1344 = vmatprep.subr.bf16.mxu0 0
      %1345 = vmatpush1.bf16.msra.mxu0 0
      %1346 = vmatprep.subr.bf16.mxu0 0
      %1347 = vmatpush1.bf16.msra.mxu0 0
      %1348 = vmatprep.subr.bf16.mxu0 0
      %1349 = vmatpush1.bf16.msra.mxu0 0
      %1350 = vmatprep.subr.bf16.mxu0 0
      %1351 = vmatpush1.bf16.msra.mxu0 0
      %1352 = vmatprep.mubr.bf16.mxu0 0
      %1353 = vmatmul.mubr.bf16.gmra.mrb[0].mxu0 %v750
      %v1354 = vpop.f32.mrb[0].mxu0
      %v1355 = vadd.f32 0.0, %v1354
      %v1356 = vpop.f32.mrb[0].mxu0
      %v1357 = vpop.f32.mrb[0].mxu0
      %v1358 = vadd.f32 0.0, %v1357
      %v1359 = vpop.f32.mrb[0].mxu0
      %1360 = vmatprep.mubr.bf16.mxu0 0
      %1361 = vmatmul.mubr.bf16.gmra.mrb[0].mxu0 %v752
      %v1362 = vpop.f32.mrb[0].mxu0
      %v1363 = vadd.f32 0.0, %v1362
      %v1364 = vpop.f32.mrb[0].mxu0
      %v1365 = vpop.f32.mrb[0].mxu0
      %v1366 = vadd.f32 0.0, %v1365
      %v1367 = vpop.f32.mrb[0].mxu0
      %1368 = vmatprep.mubr.bf16.mxu0 0
      %1369 = vmatmul.mubr.bf16.gmra.mrb[0].mxu0 %v754
      %v1370 = vpop.f32.mrb[0].mxu0
      %v1371 = vadd.f32 0.0, %v1370
      %v1372 = vpop.f32.mrb[0].mxu0
      %v1373 = vpop.f32.mrb[0].mxu0
      %v1374 = vadd.f32 0.0, %v1373
      %v1375 = vpop.f32.mrb[0].mxu0
      %1376 = vmatprep.mubr.bf16.mxu0 0
      %1377 = vmatmul.mubr.bf16.gmra.mrb[0].mxu0 %v756
      %v1378 = vpop.f32.mrb[0].mxu0
      %v1379 = vadd.f32 0.0, %v1378
      %v1380 = vpop.f32.mrb[0].mxu0
      %v1381 = vpop.f32.mrb[0].mxu0
      %v1382 = vadd.f32 0.0, %v1381
      %v1383 = vpop.f32.mrb[0].mxu0
      %1384 = vmatprep.mubr.bf16.mxu0 0
      %1385 = vmatmul.mubr.bf16.gmra.mrb[0].mxu0 %v758
      %v1386 = vpop.f32.mrb[0].mxu0
      %v1387 = vadd.f32 0.0, %v1386
      %v1388 = vpop.f32.mrb[0].mxu0
      %v1389 = vpop.f32.mrb[0].mxu0
      %v1390 = vadd.f32 0.0, %v1389
      %v1391 = vpop.f32.mrb[0].mxu0
      %1392 = vmatprep.mubr.bf16.mxu0 0
      %1393 = vmatmul.mubr.bf16.gmra.mrb[0].mxu0 %v760
      %v1394 = vpop.f32.mrb[0].mxu0
      %v1395 = vadd.f32 0.0, %v1394
      %v1396 = vpop.f32.mrb[0].mxu0
      %v1397 = vpop.f32.mrb[0].mxu0
      %v1398 = vadd.f32 0.0, %v1397
      %v1399 = vpop.f32.mrb[0].mxu0
      %1400 = vmatprep.mubr.bf16.mxu0 0
      %1401 = vmatmul.mubr.bf16.gmra.mrb[0].mxu0 %v762
      %v1402 = vpop.f32.mrb[0].mxu0
      %v1403 = vadd.f32 0.0, %v1402
      %v1404 = vpop.f32.mrb[0].mxu0
      %v1405 = vpop.f32.mrb[0].mxu0
      %v1406 = vadd.f32 0.0, %v1405
      %v1407 = vpop.f32.mrb[0].mxu0
      %1408 = vmatprep.mubr.bf16.mxu0 0
      %1409 = vmatmul.mubr.bf16.gmra.mrb[0].mxu0 %v764
      %v1410 = vpop.f32.mrb[0].mxu0
      %v1411 = vadd.f32 0.0, %v1410
      %v1412 = vpop.f32.mrb[0].mxu0
      %v1413 = vpop.f32.mrb[0].mxu0
      %v1414 = vadd.f32 0.0, %v1413
      %v1415 = vpop.f32.mrb[0].mxu0
      %1416 = vmatprep.mubr.bf16.mxu0 0
      %1417 = vmatmul.mubr.bf16.gmra.mrb[0].mxu0 %v766
      %v1418 = vpop.f32.mrb[0].mxu0
      %v1419 = vadd.f32 0.0, %v1418
      %v1420 = vpop.f32.mrb[0].mxu0
      %v1421 = vpop.f32.mrb[0].mxu0
      %v1422 = vadd.f32 0.0, %v1421
      %v1423 = vpop.f32.mrb[0].mxu0
      %1424 = vmatprep.mubr.bf16.mxu0 0
      %1425 = vmatmul.mubr.bf16.gmra.mrb[0].mxu0 %v768
      %v1426 = vpop.f32.mrb[0].mxu0
      %v1427 = vadd.f32 0.0, %v1426
      %v1428 = vpop.f32.mrb[0].mxu0
      %v1429 = vpop.f32.mrb[0].mxu0
      %v1430 = vadd.f32 0.0, %v1429
      %v1431 = vpop.f32.mrb[0].mxu0
      %1432 = vmatprep.mubr.bf16.mxu0 0
      %1433 = vmatmul.mubr.bf16.gmra.mrb[0].mxu0 %v770
      %v1434 = vpop.f32.mrb[0].mxu0
      %v1435 = vadd.f32 0.0, %v1434
      %v1436 = vpop.f32.mrb[0].mxu0
      %v1437 = vpop.f32.mrb[0].mxu0
      %v1438 = vadd.f32 0.0, %v1437
      %v1439 = vpop.f32.mrb[0].mxu0
      %1440 = vmatprep.mubr.bf16.mxu0 0
      %1441 = vmatmul.mubr.bf16.gmra.mrb[0].mxu0 %v772
      %v1442 = vpop.f32.mrb[0].mxu0
      %v1443 = vadd.f32 0.0, %v1442
      %v1444 = vpop.f32.mrb[0].mxu0
      %v1445 = vpop.f32.mrb[0].mxu0
      %v1446 = vadd.f32 0.0, %v1445
      %v1447 = vpop.f32.mrb[0].mxu0
      %1448 = vmatprep.mubr.bf16.mxu0 0
      %1449 = vmatmul.mubr.bf16.gmra.mrb[0].mxu0 %v774
      %v1450 = vpop.f32.mrb[0].mxu0
      %v1451 = vadd.f32 0.0, %v1450
      %v1452 = vpop.f32.mrb[0].mxu0
      %v1453 = vpop.f32.mrb[0].mxu0
      %v1454 = vadd.f32 0.0, %v1453
      %v1455 = vpop.f32.mrb[0].mxu0
      %1456 = vmatprep.mubr.bf16.mxu0 0
      %1457 = vmatmul.mubr.bf16.gmra.mrb[0].mxu0 %v776
      %v1458 = vpop.f32.mrb[0].mxu0
      %v1459 = vadd.f32 0.0, %v1458
      %v1460 = vpop.f32.mrb[0].mxu0
      %v1461 = vpop.f32.mrb[0].mxu0
      %v1462 = vadd.f32 0.0, %v1461
      %v1463 = vpop.f32.mrb[0].mxu0
      %1464 = vmatprep.mubr.bf16.mxu0 0
      %1465 = vmatmul.mubr.bf16.gmra.mrb[0].mxu0 %v1014
      %v1466 = vpop.f32.mrb[0].mxu0
      %v1467 = vadd.f32 0.0, %v1466
      %v1468 = vpop.f32.mrb[0].mxu0
      %v1469 = vpop.f32.mrb[0].mxu0
      %v1470 = vadd.f32 0.0, %v1469
      %v1471 = vpop.f32.mrb[0].mxu0
      %1472 = vmatprep.mubr.bf16.mxu0 0
      %1473 = vmatmul.mubr.bf16.gmra.mrb[0].mxu0 %v1315
      %v1474 = vpop.f32.mrb[0].mxu0
      %v1475 = vadd.f32 0.0, %v1474
      %v1476 = vpop.f32.mrb[0].mxu0
      %v1477 = vpop.f32.mrb[0].mxu0
      %v1478 = vadd.f32 0.0, %v1477
      %v1479 = vpop.f32.mrb[0].mxu0
      %1480 = vdwg.mxu0
      %v1481 = vld [vmem:[#allocation2] sm:$0xff]
      %v1482 = vld [vmem:[#allocation2 + $0x8] sm:$0xff]
      %v1483 = vld [vmem:[#allocation2 + $0x10] sm:$0xff]
      %v1484 = vld [vmem:[#allocation2 + $0x18] sm:$0xff]
      %v1485 = vld [vmem:[#allocation2 + $0x20] sm:$0xff]
      %v1486 = vld [vmem:[#allocation2 + $0x28] sm:$0xff]
      %v1487 = vld [vmem:[#allocation2 + $0x30] sm:$0xff]
      %v1488 = vld [vmem:[#allocation2 + $0x38] sm:$0xff]
      %v1489 = vld [vmem:[#allocation2 + $0x40] sm:$0xff]
      %v1490 = vld [vmem:[#allocation2 + $0x48] sm:$0xff]
      %v1491 = vld [vmem:[#allocation2 + $0x50] sm:$0xff]
      %v1492 = vld [vmem:[#allocation2 + $0x58] sm:$0xff]
      %v1493 = vld [vmem:[#allocation2 + $0x60] sm:$0xff]
      %v1494 = vld [vmem:[#allocation2 + $0x68] sm:$0xff]
      %v1495 = vld [vmem:[#allocation2 + $0x70] sm:$0xff]
      %v1496 = vld [vmem:[#allocation2 + $0x78] sm:$0xff]
      %v1497 = vld [vmem:[#allocation2 + $0x80] sm:$0xff]
      %v1498 = vld [vmem:[#allocation2 + $0x88] sm:$0xff]
      %v1499 = vld [vmem:[#allocation2 + $0x90] sm:$0xff]
      %v1500 = vld [vmem:[#allocation2 + $0x98] sm:$0xff]
      %v1501 = vld [vmem:[#allocation2 + $0xa0] sm:$0xff]
      %v1502 = vld [vmem:[#allocation2 + $0xa8] sm:$0xff]
      %v1503 = vld [vmem:[#allocation2 + $0xb0] sm:$0xff]
      %v1504 = vld [vmem:[#allocation2 + $0xb8] sm:$0xff]
      %v1505 = vld [vmem:[#allocation2 + $0xc0] sm:$0xff]
      %v1506 = vld [vmem:[#allocation2 + $0xc8] sm:$0xff]
      %v1507 = vld [vmem:[#allocation2 + $0xd0] sm:$0xff]
      %v1508 = vld [vmem:[#allocation2 + $0xd8] sm:$0xff]
      %v1509 = vld [vmem:[#allocation2 + $0xe0] sm:$0xff]
      %v1510 = vld [vmem:[#allocation2 + $0xe8] sm:$0xff]
      %v1511 = vld [vmem:[#allocation2 + $0xf0] sm:$0xff]
      %v1512 = vld [vmem:[#allocation2 + $0xf8] sm:$0xff]
      %v1513 = vadd.f32 %v1481, %v1355
      %v1514 = vadd.f32 %v1482, %v1358
      %v1515 = vadd.f32 %v1483, %v1363
      %v1516 = vadd.f32 %v1484, %v1366
      %v1517 = vadd.f32 %v1485, %v1371
      %v1518 = vadd.f32 %v1486, %v1374
      %v1519 = vadd.f32 %v1487, %v1379
      %v1520 = vadd.f32 %v1488, %v1382
      %v1521 = vadd.f32 %v1489, %v1387
      %v1522 = vadd.f32 %v1490, %v1390
      %v1523 = vadd.f32 %v1491, %v1395
      %v1524 = vadd.f32 %v1492, %v1398
      %v1525 = vadd.f32 %v1493, %v1403
      %v1526 = vadd.f32 %v1494, %v1406
      %v1527 = vadd.f32 %v1495, %v1411
      %v1528 = vadd.f32 %v1496, %v1414
      %v1529 = vadd.f32 %v1497, %v1419
      %v1530 = vadd.f32 %v1498, %v1422
      %v1531 = vadd.f32 %v1499, %v1427
      %v1532 = vadd.f32 %v1500, %v1430
      %v1533 = vadd.f32 %v1501, %v1435
      %v1534 = vadd.f32 %v1502, %v1438
      %v1535 = vadd.f32 %v1503, %v1443
      %v1536 = vadd.f32 %v1504, %v1446
      %v1537 = vadd.f32 %v1505, %v1451
      %v1538 = vadd.f32 %v1506, %v1454
      %v1539 = vadd.f32 %v1507, %v1459
      %v1540 = vadd.f32 %v1508, %v1462
      %v1541 = vadd.f32 %v1509, %v1467
      %v1542 = vadd.f32 %v1510, %v1470
      %v1543 = vadd.f32 %v1511, %v1475
      %v1544 = vadd.f32 %v1512, %v1478
      %1545 = vst.msk [vmem:[#allocation2] sm:$0xff] %vm672, %v1513
      %1546 = vst.msk [vmem:[#allocation2 + $0x8] sm:$0xff] %vm672, %v1514
      %1547 = vst.msk [vmem:[#allocation2 + $0x10] sm:$0xff] %vm672, %v1515
      %1548 = vst.msk [vmem:[#allocation2 + $0x18] sm:$0xff] %vm672, %v1516
      %1549 = vst.msk [vmem:[#allocation2 + $0x20] sm:$0xff] %vm672, %v1517
      %1550 = vst.msk [vmem:[#allocation2 + $0x28] sm:$0xff] %vm672, %v1518
      %1551 = vst.msk [vmem:[#allocation2 + $0x30] sm:$0xff] %vm672, %v1519
      %1552 = vst.msk [vmem:[#allocation2 + $0x38] sm:$0xff] %vm672, %v1520
      %1553 = vst.msk [vmem:[#allocation2 + $0x40] sm:$0xff] %vm672, %v1521
      %1554 = vst.msk [vmem:[#allocation2 + $0x48] sm:$0xff] %vm672, %v1522
      %1555 = vst.msk [vmem:[#allocation2 + $0x50] sm:$0xff] %vm672, %v1523
      %1556 = vst.msk [vmem:[#allocation2 + $0x58] sm:$0xff] %vm672, %v1524
      %1557 = vst.msk [vmem:[#allocation2 + $0x60] sm:$0xff] %vm672, %v1525
      %1558 = vst.msk [vmem:[#allocation2 + $0x68] sm:$0xff] %vm672, %v1526
      %1559 = vst.msk [vmem:[#allocation2 + $0x70] sm:$0xff] %vm672, %v1527
      %1560 = vst.msk [vmem:[#allocation2 + $0x78] sm:$0xff] %vm672, %v1528
      %1561 = vst.msk [vmem:[#allocation2 + $0x80] sm:$0xff] %vm672, %v1529
      %1562 = vst.msk [vmem:[#allocation2 + $0x88] sm:$0xff] %vm672, %v1530
      %1563 = vst.msk [vmem:[#allocation2 + $0x90] sm:$0xff] %vm672, %v1531
      %1564 = vst.msk [vmem:[#allocation2 + $0x98] sm:$0xff] %vm672, %v1532
      %1565 = vst.msk [vmem:[#allocation2 + $0xa0] sm:$0xff] %vm672, %v1533
      %1566 = vst.msk [vmem:[#allocation2 + $0xa8] sm:$0xff] %vm672, %v1534
      %1567 = vst.msk [vmem:[#allocation2 + $0xb0] sm:$0xff] %vm672, %v1535
      %1568 = vst.msk [vmem:[#allocation2 + $0xb8] sm:$0xff] %vm672, %v1536
      %1569 = vst.msk [vmem:[#allocation2 + $0xc0] sm:$0xff] %vm672, %v1537
      %1570 = vst.msk [vmem:[#allocation2 + $0xc8] sm:$0xff] %vm672, %v1538
      %1571 = vst.msk [vmem:[#allocation2 + $0xd0] sm:$0xff] %vm672, %v1539
      %1572 = vst.msk [vmem:[#allocation2 + $0xd8] sm:$0xff] %vm672, %v1540
      %1573 = vst.msk [vmem:[#allocation2 + $0xe0] sm:$0xff] %vm672, %v1541
      %1574 = vst.msk [vmem:[#allocation2 + $0xe8] sm:$0xff] %vm672, %v1542
      %1575 = vst.msk [vmem:[#allocation2 + $0xf0] sm:$0xff] %vm672, %v1543
      %1576 = vst.msk [vmem:[#allocation2 + $0xf8] sm:$0xff] %vm672, %v1544
      %v1577 = vld [vmem:[#allocation2] sm:$0xff]
      %v1578 = vld [vmem:[#allocation2 + $0x8] sm:$0xff]
      %v1579 = vld [vmem:[#allocation2 + $0x10] sm:$0xff]
      %v1580 = vld [vmem:[#allocation2 + $0x18] sm:$0xff]
      %v1581 = vld [vmem:[#allocation2 + $0x20] sm:$0xff]
      %v1582 = vld [vmem:[#allocation2 + $0x28] sm:$0xff]
      %v1583 = vld [vmem:[#allocation2 + $0x30] sm:$0xff]
      %v1584 = vld [vmem:[#allocation2 + $0x38] sm:$0xff]
      %v1585 = vld [vmem:[#allocation2 + $0x40] sm:$0xff]
      %v1586 = vld [vmem:[#allocation2 + $0x48] sm:$0xff]
      %v1587 = vld [vmem:[#allocation2 + $0x50] sm:$0xff]
      %v1588 = vld [vmem:[#allocation2 + $0x58] sm:$0xff]
      %v1589 = vld [vmem:[#allocation2 + $0x60] sm:$0xff]
      %v1590 = vld [vmem:[#allocation2 + $0x68] sm:$0xff]
      %v1591 = vld [vmem:[#allocation2 + $0x70] sm:$0xff]
      %v1592 = vld [vmem:[#allocation2 + $0x78] sm:$0xff]
      %v1593 = vld [vmem:[#allocation2 + $0x80] sm:$0xff]
      %v1594 = vld [vmem:[#allocation2 + $0x88] sm:$0xff]
      %v1595 = vld [vmem:[#allocation2 + $0x90] sm:$0xff]
      %v1596 = vld [vmem:[#allocation2 + $0x98] sm:$0xff]
      %v1597 = vld [vmem:[#allocation2 + $0xa0] sm:$0xff]
      %v1598 = vld [vmem:[#allocation2 + $0xa8] sm:$0xff]
      %v1599 = vld [vmem:[#allocation2 + $0xb0] sm:$0xff]
      %v1600 = vld [vmem:[#allocation2 + $0xb8] sm:$0xff]
      %v1601 = vld [vmem:[#allocation2 + $0xc0] sm:$0xff]
      %v1602 = vld [vmem:[#allocation2 + $0xc8] sm:$0xff]
      %v1603 = vld [vmem:[#allocation2 + $0xd0] sm:$0xff]
      %v1604 = vld [vmem:[#allocation2 + $0xd8] sm:$0xff]
      %v1605 = vld [vmem:[#allocation2 + $0xe0] sm:$0xff]
      %v1606 = vld [vmem:[#allocation2 + $0xe8] sm:$0xff]
      %v1607 = vld [vmem:[#allocation2 + $0xf0] sm:$0xff]
      %v1608 = vld [vmem:[#allocation2 + $0xf8] sm:$0xff]
      %1609 = vst.msk [vmem:[%s177] sm:$0xff] %vm672, %v1577
      %1610 = vst.msk [vmem:[%s177 + $0x8] sm:$0xff] %vm672, %v1578
      %1611 = vst.msk [vmem:[%s177 + $0x10] sm:$0xff] %vm672, %v1579
      %1612 = vst.msk [vmem:[%s177 + $0x18] sm:$0xff] %vm672, %v1580
      %1613 = vst.msk [vmem:[%s177 + $0x20] sm:$0xff] %vm672, %v1581
      %1614 = vst.msk [vmem:[%s177 + $0x28] sm:$0xff] %vm672, %v1582
      %1615 = vst.msk [vmem:[%s177 + $0x30] sm:$0xff] %vm672, %v1583
      %1616 = vst.msk [vmem:[%s177 + $0x38] sm:$0xff] %vm672, %v1584
      %1617 = vst.msk [vmem:[%s177 + $0x40] sm:$0xff] %vm672, %v1585
      %1618 = vst.msk [vmem:[%s177 + $0x48] sm:$0xff] %vm672, %v1586
      %1619 = vst.msk [vmem:[%s177 + $0x50] sm:$0xff] %vm672, %v1587
      %1620 = vst.msk [vmem:[%s177 + $0x58] sm:$0xff] %vm672, %v1588
      %1621 = vst.msk [vmem:[%s177 + $0x60] sm:$0xff] %vm672, %v1589
      %1622 = vst.msk [vmem:[%s177 + $0x68] sm:$0xff] %vm672, %v1590
      %1623 = vst.msk [vmem:[%s177 + $0x70] sm:$0xff] %vm672, %v1591
      %1624 = vst.msk [vmem:[%s177 + $0x78] sm:$0xff] %vm672, %v1592
      %1625 = vst.msk [vmem:[%s177 + $0x80] sm:$0xff] %vm672, %v1593
      %1626 = vst.msk [vmem:[%s177 + $0x88] sm:$0xff] %vm672, %v1594
      %1627 = vst.msk [vmem:[%s177 + $0x90] sm:$0xff] %vm672, %v1595
      %1628 = vst.msk [vmem:[%s177 + $0x98] sm:$0xff] %vm672, %v1596
      %1629 = vst.msk [vmem:[%s177 + $0xa0] sm:$0xff] %vm672, %v1597
      %1630 = vst.msk [vmem:[%s177 + $0xa8] sm:$0xff] %vm672, %v1598
      %1631 = vst.msk [vmem:[%s177 + $0xb0] sm:$0xff] %vm672, %v1599
      %1632 = vst.msk [vmem:[%s177 + $0xb8] sm:$0xff] %vm672, %v1600
      %1633 = vst.msk [vmem:[%s177 + $0xc0] sm:$0xff] %vm672, %v1601
      %1634 = vst.msk [vmem:[%s177 + $0xc8] sm:$0xff] %vm672, %v1602
      %1635 = vst.msk [vmem:[%s177 + $0xd0] sm:$0xff] %vm672, %v1603
      %1636 = vst.msk [vmem:[%s177 + $0xd8] sm:$0xff] %vm672, %v1604
      %1637 = vst.msk [vmem:[%s177 + $0xe0] sm:$0xff] %vm672, %v1605
      %1638 = vst.msk [vmem:[%s177 + $0xe8] sm:$0xff] %vm672, %v1606
      %1639 = vst.msk [vmem:[%s177 + $0xf0] sm:$0xff] %vm672, %v1607
      %1640 = vst.msk [vmem:[%s177 + $0xf8] sm:$0xff] %vm672, %v1608
      %v1641 = vsel %vm672, %v1577, 0.0
      %v1642 = vsel %vm672, %v1578, 0.0
      %v1643 = vadd.f32 %v1641, %v1642
      %v1644 = vsel %vm672, %v1579, 0.0
      %v1645 = vadd.f32 %v1643, %v1644
      %v1646 = vsel %vm672, %v1580, 0.0
      %v1647 = vadd.f32 %v1645, %v1646
      %v1648 = vsel %vm672, %v1581, 0.0
      %v1649 = vadd.f32 %v1647, %v1648
      %v1650 = vsel %vm672, %v1582, 0.0
      %v1651 = vadd.f32 %v1649, %v1650
      %v1652 = vsel %vm672, %v1583, 0.0
      %v1653 = vadd.f32 %v1651, %v1652
      %v1654 = vsel %vm672, %v1584, 0.0
      %v1655 = vadd.f32 %v1653, %v1654
      %v1656 = vsel %vm672, %v1585, 0.0
      %v1657 = vadd.f32 %v1655, %v1656
      %v1658 = vsel %vm672, %v1586, 0.0
      %v1659 = vadd.f32 %v1657, %v1658
      %v1660 = vsel %vm672, %v1587, 0.0
      %v1661 = vadd.f32 %v1659, %v1660
      %v1662 = vsel %vm672, %v1588, 0.0
      %v1663 = vadd.f32 %v1661, %v1662
      %v1664 = vsel %vm672, %v1589, 0.0
      %v1665 = vadd.f32 %v1663, %v1664
      %v1666 = vsel %vm672, %v1590, 0.0
      %v1667 = vadd.f32 %v1665, %v1666
      %v1668 = vsel %vm672, %v1591, 0.0
      %v1669 = vadd.f32 %v1667, %v1668
      %v1670 = vsel %vm672, %v1592, 0.0
      %v1671 = vadd.f32 %v1669, %v1670
      %v1672 = vsel %vm672, %v1593, 0.0
      %v1673 = vadd.f32 %v1671, %v1672
      %v1674 = vsel %vm672, %v1594, 0.0
      %v1675 = vadd.f32 %v1673, %v1674
      %v1676 = vsel %vm672, %v1595, 0.0
      %v1677 = vadd.f32 %v1675, %v1676
      %v1678 = vsel %vm672, %v1596, 0.0
      %v1679 = vadd.f32 %v1677, %v1678
      %v1680 = vsel %vm672, %v1597, 0.0
      %v1681 = vadd.f32 %v1679, %v1680
      %v1682 = vsel %vm672, %v1598, 0.0
      %v1683 = vadd.f32 %v1681, %v1682
      %v1684 = vsel %vm672, %v1599, 0.0
      %v1685 = vadd.f32 %v1683, %v1684
      %v1686 = vsel %vm672, %v1600, 0.0
      %v1687 = vadd.f32 %v1685, %v1686
      %v1688 = vsel %vm672, %v1601, 0.0
      %v1689 = vadd.f32 %v1687, %v1688
      %v1690 = vsel %vm672, %v1602, 0.0
      %v1691 = vadd.f32 %v1689, %v1690
      %v1692 = vsel %vm672, %v1603, 0.0
      %v1693 = vadd.f32 %v1691, %v1692
      %v1694 = vsel %vm672, %v1604, 0.0
      %v1695 = vadd.f32 %v1693, %v1694
      %v1696 = vsel %vm672, %v1605, 0.0
      %v1697 = vadd.f32 %v1695, %v1696
      %v1698 = vsel %vm672, %v1606, 0.0
      %v1699 = vadd.f32 %v1697, %v1698
      %v1700 = vsel %vm672, %v1607, 0.0
      %v1701 = vadd.f32 %v1699, %v1700
      %v1702 = vsel %vm672, %v1608, 0.0
      %v1703 = vadd.f32 %v1701, %v1702
      %v1704 = vrot.slane %v1703, 4
      %v1705 = vadd.f32 %v1703, %v1704
      %v1706 = vrot.slane %v1705, 2
      %v1707 = vadd.f32 %v1705, %v1706
      %v1708 = vrot.slane %v1707, 1
      %v1709 = vadd.f32 %v1707, %v1708
      %v1710 = vmul.f32 %v1709, 0.00390625
      %v1711 = vsub.f32 %v1577, %v1710
      %v1712 = vsub.f32 %v1578, %v1710
      %v1713 = vsub.f32 %v1579, %v1710
      %v1714 = vsub.f32 %v1580, %v1710
      %v1715 = vsub.f32 %v1581, %v1710
      %v1716 = vsub.f32 %v1582, %v1710
      %v1717 = vsub.f32 %v1583, %v1710
      %v1718 = vsub.f32 %v1584, %v1710
      %v1719 = vsub.f32 %v1585, %v1710
      %v1720 = vsub.f32 %v1586, %v1710
      %v1721 = vsub.f32 %v1587, %v1710
      %v1722 = vsub.f32 %v1588, %v1710
      %v1723 = vsub.f32 %v1589, %v1710
      %v1724 = vsub.f32 %v1590, %v1710
      %v1725 = vsub.f32 %v1591, %v1710
      %v1726 = vsub.f32 %v1592, %v1710
      %v1727 = vsub.f32 %v1593, %v1710
      %v1728 = vsub.f32 %v1594, %v1710
      %v1729 = vsub.f32 %v1595, %v1710
      %v1730 = vsub.f32 %v1596, %v1710
      %v1731 = vsub.f32 %v1597, %v1710
      %v1732 = vsub.f32 %v1598, %v1710
      %v1733 = vsub.f32 %v1599, %v1710
      %v1734 = vsub.f32 %v1600, %v1710
      %v1735 = vsub.f32 %v1601, %v1710
      %v1736 = vsub.f32 %v1602, %v1710
      %v1737 = vsub.f32 %v1603, %v1710
      %v1738 = vsub.f32 %v1604, %v1710
      %v1739 = vsub.f32 %v1605, %v1710
      %v1740 = vsub.f32 %v1606, %v1710
      %v1741 = vsub.f32 %v1607, %v1710
      %v1742 = vsub.f32 %v1608, %v1710
      %v1743 = vmul.f32 %v1711, %v1711
      %v1744 = vmul.f32 %v1712, %v1712
      %v1745 = vmul.f32 %v1713, %v1713
      %v1746 = vmul.f32 %v1714, %v1714
      %v1747 = vmul.f32 %v1715, %v1715
      %v1748 = vmul.f32 %v1716, %v1716
      %v1749 = vmul.f32 %v1717, %v1717
      %v1750 = vmul.f32 %v1718, %v1718
      %v1751 = vmul.f32 %v1719, %v1719
      %v1752 = vmul.f32 %v1720, %v1720
      %v1753 = vmul.f32 %v1721, %v1721
      %v1754 = vmul.f32 %v1722, %v1722
      %v1755 = vmul.f32 %v1723, %v1723
      %v1756 = vmul.f32 %v1724, %v1724
      %v1757 = vmul.f32 %v1725, %v1725
      %v1758 = vmul.f32 %v1726, %v1726
      %v1759 = vmul.f32 %v1727, %v1727
      %v1760 = vmul.f32 %v1728, %v1728
      %v1761 = vmul.f32 %v1729, %v1729
      %v1762 = vmul.f32 %v1730, %v1730
      %v1763 = vmul.f32 %v1731, %v1731
      %v1764 = vmul.f32 %v1732, %v1732
      %v1765 = vmul.f32 %v1733, %v1733
      %v1766 = vmul.f32 %v1734, %v1734
      %v1767 = vmul.f32 %v1735, %v1735
      %v1768 = vmul.f32 %v1736, %v1736
      %v1769 = vmul.f32 %v1737, %v1737
      %v1770 = vmul.f32 %v1738, %v1738
      %v1771 = vmul.f32 %v1739, %v1739
      %v1772 = vmul.f32 %v1740, %v1740
      %v1773 = vmul.f32 %v1741, %v1741
      %v1774 = vmul.f32 %v1742, %v1742
      %v1775 = vsel %vm672, %v1743, 0.0
      %v1776 = vsel %vm672, %v1744, 0.0
      %v1777 = vadd.f32 %v1775, %v1776
      %v1778 = vsel %vm672, %v1745, 0.0
      %v1779 = vadd.f32 %v1777, %v1778
      %v1780 = vsel %vm672, %v1746, 0.0
      %v1781 = vadd.f32 %v1779, %v1780
      %v1782 = vsel %vm672, %v1747, 0.0
      %v1783 = vadd.f32 %v1781, %v1782
      %v1784 = vsel %vm672, %v1748, 0.0
      %v1785 = vadd.f32 %v1783, %v1784
      %v1786 = vsel %vm672, %v1749, 0.0
      %v1787 = vadd.f32 %v1785, %v1786
      %v1788 = vsel %vm672, %v1750, 0.0
      %v1789 = vadd.f32 %v1787, %v1788
      %v1790 = vsel %vm672, %v1751, 0.0
      %v1791 = vadd.f32 %v1789, %v1790
      %v1792 = vsel %vm672, %v1752, 0.0
      %v1793 = vadd.f32 %v1791, %v1792
      %v1794 = vsel %vm672, %v1753, 0.0
      %v1795 = vadd.f32 %v1793, %v1794
      %v1796 = vsel %vm672, %v1754, 0.0
      %v1797 = vadd.f32 %v1795, %v1796
      %v1798 = vsel %vm672, %v1755, 0.0
      %v1799 = vadd.f32 %v1797, %v1798
      %v1800 = vsel %vm672, %v1756, 0.0
      %v1801 = vadd.f32 %v1799, %v1800
      %v1802 = vsel %vm672, %v1757, 0.0
      %v1803 = vadd.f32 %v1801, %v1802
      %v1804 = vsel %vm672, %v1758, 0.0
      %v1805 = vadd.f32 %v1803, %v1804
      %v1806 = vsel %vm672, %v1759, 0.0
      %v1807 = vadd.f32 %v1805, %v1806
      %v1808 = vsel %vm672, %v1760, 0.0
      %v1809 = vadd.f32 %v1807, %v1808
      %v1810 = vsel %vm672, %v1761, 0.0
      %v1811 = vadd.f32 %v1809, %v1810
      %v1812 = vsel %vm672, %v1762, 0.0
      %v1813 = vadd.f32 %v1811, %v1812
      %v1814 = vsel %vm672, %v1763, 0.0
      %v1815 = vadd.f32 %v1813, %v1814
      %v1816 = vsel %vm672, %v1764, 0.0
      %v1817 = vadd.f32 %v1815, %v1816
      %v1818 = vsel %vm672, %v1765, 0.0
      %v1819 = vadd.f32 %v1817, %v1818
      %v1820 = vsel %vm672, %v1766, 0.0
      %v1821 = vadd.f32 %v1819, %v1820
      %v1822 = vsel %vm672, %v1767, 0.0
      %v1823 = vadd.f32 %v1821, %v1822
      %v1824 = vsel %vm672, %v1768, 0.0
      %v1825 = vadd.f32 %v1823, %v1824
      %v1826 = vsel %vm672, %v1769, 0.0
      %v1827 = vadd.f32 %v1825, %v1826
      %v1828 = vsel %vm672, %v1770, 0.0
      %v1829 = vadd.f32 %v1827, %v1828
      %v1830 = vsel %vm672, %v1771, 0.0
      %v1831 = vadd.f32 %v1829, %v1830
      %v1832 = vsel %vm672, %v1772, 0.0
      %v1833 = vadd.f32 %v1831, %v1832
      %v1834 = vsel %vm672, %v1773, 0.0
      %v1835 = vadd.f32 %v1833, %v1834
      %v1836 = vsel %vm672, %v1774, 0.0
      %v1837 = vadd.f32 %v1835, %v1836
      %v1838 = vrot.slane %v1837, 4
      %v1839 = vadd.f32 %v1837, %v1838
      %v1840 = vrot.slane %v1839, 2
      %v1841 = vadd.f32 %v1839, %v1840
      %v1842 = vrot.slane %v1841, 1
      %v1843 = vadd.f32 %v1841, %v1842
      %vm1844 = vcmask 1040384
      %v1845 = vsel %vm1844, %v1709, %v1843
      %vm1846 = vcmask 25600
      %1847 = vst.msk [vmem:[%s182] sm:$0x3] %vm1846, %v1845
      %s1848 = smul.u32 32, %s15
      %p1849 = scmp.lt.s32.totalorder %s1848, 63
      %s1850 = scalar_select %p1849, %s1848, 63
      %s1851 = smul.addr %s1850, 8
      %s1852 = scalar_lea.vmem %s2, %s1851
      %p1853 = scmp.lt.s32.totalorder %s15, 1
      %s1854 = scalar_select %p1853, %s15, 1
      %s1855 = smul.addr %s1854, 2
      %s1856 = scalar_lea.vmem %s3, %s1855
      // Predicated region
      $region29: #{basic_block_forward.3} parent=27 // pred_check
        %p1857 = pneg %p80
      $region30: #{basic_block_forward.3} parent=27 // pred_check_branch
        %1859 = sbr.rel (%p1857) target = $region32
      $region31: #{basic_block_forward.3} parent=27 // pred_region
        %s1860 = smul.u32 32, %s15
      $region32: #{basic_block_forward.3} parent=27 // pred_fallthru
        _
      // Predicated region
      $region33: #{basic_block_forward.3} parent=27 // pred_check
        %p1861 = pneg %p106
      $region34: #{basic_block_forward.3} parent=27 // pred_check_branch
        %1863 = sbr.rel (%p1861) target = $region36
      $region35: #{basic_block_forward.3} parent=27 // pred_region
        _
      $region36: #{basic_block_forward.3} parent=27 // pred_fallthru
        _
    $region28: #{basic_block_forward.3} parent=5 // pred_fallthru
      _
    %p1864 = scmp.le.s32.totalorder 2, %s10
    // Predicated region
    $region37: #{basic_block_forward.3} parent=5 // pred_check
      %p1865 = pneg %p1864
    $region38: #{basic_block_forward.3} parent=5 // pred_check_branch
      %1867 = sbr.rel (%p1865) target = $region40
    $region39: #{basic_block_forward.3} parent=5 // pred_region
      %s1868 = ssub.s32 %s10, 2
      // Predicated region
      $region41: #{basic_block_forward.3} parent=39 // pred_check
        %p1869 = pneg %p86
      $region42: #{basic_block_forward.3} parent=39 // pred_check_branch
        %1871 = sbr.rel (%p1869) target = $region44
      $region43: #{basic_block_forward.3} parent=39 // pred_region
        %s1872 = smul.u32 32, %s16
        %p1873 = scmp.lt.s32.totalorder %s1872, 63
        %s1874 = scalar_select %p1873, %s1872, 63
        %s1875 = smul.addr %s1874, 8
        %s1876 = scalar_lea.vmem %s2, %s1875
      $region44: #{basic_block_forward.3} parent=39 // pred_fallthru
        _
      // Predicated region
      $region45: #{basic_block_forward.3} parent=39 // pred_check
        %p1877 = pneg %p112
      $region46: #{basic_block_forward.3} parent=39 // pred_check_branch
        %1879 = sbr.rel (%p1877) target = $region48
      $region47: #{basic_block_forward.3} parent=39 // pred_region
        %p1880 = scmp.lt.s32.totalorder %s16, 1
        %s1881 = scalar_select %p1880, %s16, 1
        %s1882 = smul.addr %s1881, 2
        %s1883 = scalar_lea.vmem %s3, %s1882
      $region48: #{basic_block_forward.3} parent=39 // pred_fallthru
        _
    $region40: #{basic_block_forward.3} parent=5 // pred_fallthru
      _
  $region6: #{basic_block_forward.3} parent=0 // loop_footer
    %s14 = sadd.s32 1, %s10
  $region7: #{basic_block_forward.3} parent=0 // loop_footer_branch
    %9 = sbr.rel target = $region3
  $region8: #{basic_block_forward.3} parent=0 // loop_exit
    _

// kernel: basic_block_forward.4
$region0: #{basic_block_forward.4}
  #allocation0 [shape = 'u32[]', space=smem, size = 0x4, offset = 0x4, fixed_abs, tag = 'smem constant byte address 0x4 - core index']
  #allocation1 [shape = 'u32[144,128]{1,0:T(1,128)}', space=vmem, size = 0x12000, scoped, tag = 'internal scratch']
  #allocation2 [shape = 'bf16[1,18,18,4]{3,2,1,0:T(8,128)(2,1)}', space=vmem, size = 0x1b000, scoped, tag = 'scratch operand']
  #allocation3 [shape = 'f32[256,4]{1,0:T(8,128)}', space=vmem, size = 0x20000, scoped, tag = 'scratch operand']
  %s0 = inlined_call_operand.vmem [shape: f32[512,4], index: 0, kind: input, shape index: {}]
  %s1 = inlined_call_operand.vmem [shape: f32[1,4], index: 1, kind: input, shape index: {}]
  %s2 = inlined_call_operand.vmem [shape: f32[1,4], index: 2, kind: input, shape index: {}]
  %s3 = inlined_call_operand.vmem [shape: bf16[3,12,4], index: 3, kind: input, shape index: {}]
  %s4 = inlined_call_operand.vmem [shape: f32[512,4], index: 4, kind: output, shape index: {0}]
  %s5 = inlined_call_operand.vmem [shape: f32[2,2,4], index: 5, kind: output, shape index: {1}]
  %6 = xla_tuple %s4, %s5
  %s7 = sld [smem:[#allocation0]]
  $region57: #{basic_block_forward.4} parent=0
    _
  %s9 = ssub.s32 1, %s7
  %s10 = scalar_select 0, %s9, %s7
  loop: start=0, step=1, limit=4
  $region2: #{basic_block_forward.4} parent=0 // loop_pre_header
    _
  $region3: #{basic_block_forward.4} parent=0 // loop_header
    %s12 = sphi 0, %s16
    %p13 = scmp.ge.s32.totalorder %s12, 4
    %s22 = sphi 0, %s24
    %s25 = sphi 0, %s22
    %s26 = sphi 0, %s25
    %s42 = sphi 0, %s26
    %s46 = sphi 0, %s46
    %s48 = sphi 0, %s46
    %s49 = sphi 0, %s48
    %s63 = sphi 0, %s49
    %s67 = sphi 0, %s67
    %s69 = sphi 0, %s67
    %s70 = sphi 0, %s69
    %s84 = sphi 0, %s70
    %s88 = sphi 0, %s88
    %s90 = sphi 0, %s88
    %s91 = sphi 0, %s90
    %s105 = sphi 0, %s91
    %s111 = sphi 0, %s113
    %s114 = sphi 0, %s111
    %s115 = sphi 0, %s114
    %s131 = sphi 0, %s115
    %s137 = sphi 0, %s139
    %s140 = sphi 0, %s137
    %s141 = sphi 0, %s140
    %s157 = sphi 0, %s141
  $region4: #{basic_block_forward.4} parent=0 // loop_header_branch
    %15 = sbr.rel (%p13) target = $region8
  $region5: #{basic_block_forward.4} parent=0 // loop_body
    %s17 = ssub.s32 %s12, 1
    %s18 = ssub.s32 %s12, 2
    %s19 = sadd.s32 %s12, 1
    %s20 = ssub.s32 %s12, %s19
    %p21 = scmp.eq.s32.totalorder %s20, 0
    %s23 = sadd.s32 %s22, 1
    %s24 = scalar_select %p21, %s22, %s23
    %p27 = pneg %p21
    %p28 = scmp.eq.s32.totalorder %s12, 1
    %p29 = por %p27, %p28
    %p30 = scmp.ne.s32.totalorder %s22, %s25
    %p31 = scmp.eq.s32.totalorder %s12, 0
    %p32 = por %p30, %p31
    %p33 = scmp.ne.s32.totalorder %s22, %s25
    %p34 = scmp.eq.s32.totalorder %s17, 1
    %p35 = por %p33, %p34
    %p36 = scmp.ne.s32.totalorder %s25, %s26
    %p37 = scmp.eq.s32.totalorder %s17, 0
    %p38 = por %p36, %p37
    %p39 = scmp.ne.s32.totalorder %s25, %s26
    %p40 = scmp.eq.s32.totalorder %s18, 1
    %p41 = por %p39, %p40
    %p43 = scmp.ne.s32.totalorder %s26, %s42
    %p44 = scmp.eq.s32.totalorder %s18, 0
    %p45 = por %p43, %p44
    %s47 = sadd.s32 %s46, 1
    %p50 = scmp.eq.s32.totalorder %s12, 1
    %p51 = scmp.ne.s32.totalorder %s46, %s48
    %p52 = scmp.eq.s32.totalorder %s12, 0
    %p53 = por %p51, %p52
    %p54 = scmp.ne.s32.totalorder %s46, %s48
    %p55 = scmp.eq.s32.totalorder %s17, 1
    %p56 = por %p54, %p55
    %p57 = scmp.ne.s32.totalorder %s48, %s49
    %p58 = scmp.eq.s32.totalorder %s17, 0
    %p59 = por %p57, %p58
    %p60 = scmp.ne.s32.totalorder %s48, %s49
    %p61 = scmp.eq.s32.totalorder %s18, 1
    %p62 = por %p60, %p61
    %p64 = scmp.ne.s32.totalorder %s49, %s63
    %p65 = scmp.eq.s32.totalorder %s18, 0
    %p66 = por %p64, %p65
    %s68 = sadd.s32 %s67, 1
    %p71 = scmp.eq.s32.totalorder %s12, 1
    %p72 = scmp.ne.s32.totalorder %s67, %s69
    %p73 = scmp.eq.s32.totalorder %s12, 0
    %p74 = por %p72, %p73
    %p75 = scmp.ne.s32.totalorder %s67, %s69
    %p76 = scmp.eq.s32.totalorder %s17, 1
    %p77 = por %p75, %p76
    %p78 = scmp.ne.s32.totalorder %s69, %s70
    %p79 = scmp.eq.s32.totalorder %s17, 0
    %p80 = por %p78, %p79
    %p81 = scmp.ne.s32.totalorder %s69, %s70
    %p82 = scmp.eq.s32.totalorder %s18, 1
    %p83 = por %p81, %p82
    %p85 = scmp.ne.s32.totalorder %s70, %s84
    %p86 = scmp.eq.s32.totalorder %s18, 0
    %p87 = por %p85, %p86
    %s89 = sadd.s32 %s88, 1
    %p92 = scmp.eq.s32.totalorder %s12, 1
    %p93 = scmp.ne.s32.totalorder %s88, %s90
    %p94 = scmp.eq.s32.totalorder %s12, 0
    %p95 = por %p93, %p94
    %p96 = scmp.ne.s32.totalorder %s88, %s90
    %p97 = scmp.eq.s32.totalorder %s17, 1
    %p98 = por %p96, %p97
    %p99 = scmp.ne.s32.totalorder %s90, %s91
    %p100 = scmp.eq.s32.totalorder %s17, 0
    %p101 = por %p99, %p100
    %p102 = scmp.ne.s32.totalorder %s90, %s91
    %p103 = scmp.eq.s32.totalorder %s18, 1
    %p104 = por %p102, %p103
    %p106 = scmp.ne.s32.totalorder %s91, %s105
    %p107 = scmp.eq.s32.totalorder %s18, 0
    %p108 = por %p106, %p107
    %s109 = ssub.s32 %s12, %s19
    %p110 = scmp.eq.s32.totalorder %s109, 0
    %s112 = sadd.s32 %s111, 1
    %s113 = scalar_select %p110, %s111, %s112
    %p116 = pneg %p110
    %p117 = scmp.eq.s32.totalorder %s12, 1
    %p118 = por %p116, %p117
    %p119 = scmp.ne.s32.totalorder %s111, %s114
    %p120 = scmp.eq.s32.totalorder %s12, 0
    %p121 = por %p119, %p120
    %p122 = scmp.ne.s32.totalorder %s111, %s114
    %p123 = scmp.eq.s32.totalorder %s17, 1
    %p124 = por %p122, %p123
    %p125 = scmp.ne.s32.totalorder %s114, %s115
    %p126 = scmp.eq.s32.totalorder %s17, 0
    %p127 = por %p125, %p126
    %p128 = scmp.ne.s32.totalorder %s114, %s115
    %p129 = scmp.eq.s32.totalorder %s18, 1
    %p130 = por %p128, %p129
    %p132 = scmp.ne.s32.totalorder %s115, %s131
    %p133 = scmp.eq.s32.totalorder %s18, 0
    %p134 = por %p132, %p133
    %s135 = ssub.s32 %s12, %s19
    %p136 = scmp.eq.s32.totalorder %s135, 0
    %s138 = sadd.s32 %s137, 1
    %s139 = scalar_select %p136, %s137, %s138
    %p142 = pneg %p136
    %p143 = scmp.eq.s32.totalorder %s12, 1
    %p144 = por %p142, %p143
    %p145 = scmp.ne.s32.totalorder %s137, %s140
    %p146 = scmp.eq.s32.totalorder %s12, 0
    %p147 = por %p145, %p146
    %p148 = scmp.ne.s32.totalorder %s137, %s140
    %p149 = scmp.eq.s32.totalorder %s17, 1
    %p150 = por %p148, %p149
    %p151 = scmp.ne.s32.totalorder %s140, %s141
    %p152 = scmp.eq.s32.totalorder %s17, 0
    %p153 = por %p151, %p152
    %p154 = scmp.ne.s32.totalorder %s140, %s141
    %p155 = scmp.eq.s32.totalorder %s18, 1
    %p156 = por %p154, %p155
    %p158 = scmp.ne.s32.totalorder %s141, %s157
    %p159 = scmp.eq.s32.totalorder %s18, 0
    %p160 = por %p158, %p159
    %p161 = scmp.le.s32.totalorder 1, %s12
    %p162 = scmp.lt.s32.totalorder %s12, 3
    %p163 = pnand %p161, %p162
    %p164 = pneg %p163
    // Predicated region
    $region9: #{basic_block_forward.4} parent=5 // pred_check
      _
    $region10: #{basic_block_forward.4} parent=5 // pred_check_branch
      %166 = sbr.rel (%p163) target = $region12
    $region11: #{basic_block_forward.4} parent=5 // pred_region
      %s167 = ssub.s32 %s12, 1
      // Predicated region
      $region13: #{basic_block_forward.4} parent=11 // pred_check
        %p168 = pneg %p59
      $region14: #{basic_block_forward.4} parent=11 // pred_check_branch
        %170 = sbr.rel (%p168) target = $region16
      $region15: #{basic_block_forward.4} parent=11 // pred_region
        _
      $region16: #{basic_block_forward.4} parent=11 // pred_fallthru
        _
      // Predicated region
      $region17: #{basic_block_forward.4} parent=11 // pred_check
        %p171 = pneg %p80
      $region18: #{basic_block_forward.4} parent=11 // pred_check_branch
        %173 = sbr.rel (%p171) target = $region20
      $region19: #{basic_block_forward.4} parent=11 // pred_region
        _
      $region20: #{basic_block_forward.4} parent=11 // pred_fallthru
        _
      // Predicated region
      $region21: #{basic_block_forward.4} parent=11 // pred_check
        %p174 = pneg %p101
      $region22: #{basic_block_forward.4} parent=11 // pred_check_branch
        %176 = sbr.rel (%p174) target = $region24
      $region23: #{basic_block_forward.4} parent=11 // pred_region
        _
      $region24: #{basic_block_forward.4} parent=11 // pred_fallthru
        _
    $region12: #{basic_block_forward.4} parent=5 // pred_fallthru
      _
    %p177 = scmp.lt.s32.totalorder %s12, 2
    // Predicated region
    $region25: #{basic_block_forward.4} parent=5 // pred_check
      %p178 = pneg %p177
    $region26: #{basic_block_forward.4} parent=5 // pred_check_branch
      %180 = sbr.rel (%p178) target = $region28
    $region27: #{basic_block_forward.4} parent=5 // pred_region
      // Predicated region
      $region29: #{basic_block_forward.4} parent=27 // pred_check
        %p181 = pneg %p32
      $region30: #{basic_block_forward.4} parent=27 // pred_check_branch
        %183 = sbr.rel (%p181) target = $region32
      $region31: #{basic_block_forward.4} parent=27 // pred_region
        %s184 = smul.u32 32, %s12
        %p185 = scmp.lt.s32.totalorder %s184, 63
        %s186 = scalar_select %p185, %s184, 63
        %s187 = smul.addr %s186, 8
        %s188 = scalar_lea.vmem %s0, %s187
        %s189 = smul.u32 32, %s12
      $region32: #{basic_block_forward.4} parent=27 // pred_fallthru
        _
    $region28: #{basic_block_forward.4} parent=5 // pred_fallthru
      _
    %p190 = scmp.le.s32.totalorder 1, %s12
    %p191 = scmp.lt.s32.totalorder %s12, 3
    %p192 = pnand %p190, %p191
    %p193 = pneg %p192
    // Predicated region
    $region33: #{basic_block_forward.4} parent=5 // pred_check
      _
    $region34: #{basic_block_forward.4} parent=5 // pred_check_branch
      %195 = sbr.rel (%p192) target = $region36
    $region35: #{basic_block_forward.4} parent=5 // pred_region
      %s196 = ssub.s32 %s12, 1
      %s197 = smul.u32 32, %s17
      %p198 = scmp.lt.s32.totalorder %s197, 63
      %s199 = scalar_select %p198, %s197, 63
      %s200 = smul.addr %s199, 8
      %s201 = scalar_lea.vmem %s0, %s200
      %p202 = pneg %p38
      %p203 = pneg %p35
      %p204 = pneg %p59
      %p205 = pneg %p56
      %p206 = pneg %p80
      %p207 = pneg %p77
      %p208 = pneg %p101
      %p209 = pneg %p98
      %p210 = pneg %p127
      %p211 = pneg %p124
      %s212 = smul.u32 32, %s17
      %p213 = scmp.lt.s32.totalorder %s212, 63
      %s214 = scalar_select %p213, %s212, 63
      %s215 = smul.addr %s214, 8
      %s216 = scalar_lea.vmem %s4, %s215
      %p217 = pneg %p153
      %p218 = pneg %p150
      %p219 = scmp.lt.s32.totalorder %s17, 1
      %s220 = scalar_select %p219, %s17, 1
      %s221 = smul.addr %s220, 2
      %s222 = scalar_lea.vmem %s5, %s221
      %s223 = smul.u32 32, %s17
      %p224 = scmp.lt.s32.totalorder %s223, 63
      %s225 = scalar_select %p224, %s223, 63
      %s226 = smul.addr %s225, 8
      %s227 = scalar_lea.vmem %s0, %s226
      %s228 = smul.u32 32, %s17
      %s229 = smul.u32 32, %s17
      %p230 = scmp.lt.s32.totalorder %s229, 63
      %s231 = scalar_select %p230, %s229, 63
      %s232 = smul.addr %s231, 8
      %s233 = scalar_lea.vmem %s4, %s232
      %s234 = smul.u32 32, %s17
      %p235 = scmp.lt.s32.totalorder %s17, 1
      %s236 = scalar_select %p235, %s17, 1
      %s237 = smul.addr %s236, 2
      %s238 = scalar_lea.vmem %s5, %s237
      %v240 = vld [vmem:[%s227] sm:$0xff]
      %v241 = vld [vmem:[%s227 + $0x8] sm:$0xff]
      %v242 = vld [vmem:[%s227 + $0x10] sm:$0xff]
      %v243 = vld [vmem:[%s227 + $0x18] sm:$0xff]
      %v244 = vld [vmem:[%s227 + $0x20] sm:$0xff]
      %v245 = vld [vmem:[%s227 + $0x28] sm:$0xff]
      %v246 = vld [vmem:[%s227 + $0x30] sm:$0xff]
      %v247 = vld [vmem:[%s227 + $0x38] sm:$0xff]
      %v248 = vld [vmem:[%s227 + $0x40] sm:$0xff]
      %v249 = vld [vmem:[%s227 + $0x48] sm:$0xff]
      %v250 = vld [vmem:[%s227 + $0x50] sm:$0xff]
      %v251 = vld [vmem:[%s227 + $0x58] sm:$0xff]
      %v252 = vld [vmem:[%s227 + $0x60] sm:$0xff]
      %v253 = vld [vmem:[%s227 + $0x68] sm:$0xff]
      %v254 = vld [vmem:[%s227 + $0x70] sm:$0xff]
      %v255 = vld [vmem:[%s227 + $0x78] sm:$0xff]
      %v256 = vld [vmem:[%s227 + $0x80] sm:$0xff]
      %v257 = vld [vmem:[%s227 + $0x88] sm:$0xff]
      %v258 = vld [vmem:[%s227 + $0x90] sm:$0xff]
      %v259 = vld [vmem:[%s227 + $0x98] sm:$0xff]
      %v260 = vld [vmem:[%s227 + $0xa0] sm:$0xff]
      %v261 = vld [vmem:[%s227 + $0xa8] sm:$0xff]
      %v262 = vld [vmem:[%s227 + $0xb0] sm:$0xff]
      %v263 = vld [vmem:[%s227 + $0xb8] sm:$0xff]
      %v264 = vld [vmem:[%s227 + $0xc0] sm:$0xff]
      %v265 = vld [vmem:[%s227 + $0xc8] sm:$0xff]
      %v266 = vld [vmem:[%s227 + $0xd0] sm:$0xff]
      %v267 = vld [vmem:[%s227 + $0xd8] sm:$0xff]
      %v268 = vld [vmem:[%s227 + $0xe0] sm:$0xff]
      %v269 = vld [vmem:[%s227 + $0xe8] sm:$0xff]
      %v270 = vld [vmem:[%s227 + $0xf0] sm:$0xff]
      %v271 = vld [vmem:[%s227 + $0xf8] sm:$0xff]
      %v272 = vld [vmem:[%s1] sm:$0x1]
      %v274 = vlaneseq
      %v275 = vshrl.u32 %v274, 7
      %v276 = vsub.s32 0, %v275
      %v277 = vrot.slane %v272, %v276
      %v279 = vmul.f32 %v240, %v277
      %v280 = vmul.f32 %v241, %v277
      %v281 = vmul.f32 %v242, %v277
      %v282 = vmul.f32 %v243, %v277
      %v283 = vmul.f32 %v244, %v277
      %v284 = vmul.f32 %v245, %v277
      %v285 = vmul.f32 %v246, %v277
      %v286 = vmul.f32 %v247, %v277
      %v287 = vmul.f32 %v248, %v277
      %v288 = vmul.f32 %v249, %v277
      %v289 = vmul.f32 %v250, %v277
      %v290 = vmul.f32 %v251, %v277
      %v291 = vmul.f32 %v252, %v277
      %v292 = vmul.f32 %v253, %v277
      %v293 = vmul.f32 %v254, %v277
      %v294 = vmul.f32 %v255, %v277
      %v295 = vmul.f32 %v256, %v277
      %v296 = vmul.f32 %v257, %v277
      %v297 = vmul.f32 %v258, %v277
      %v298 = vmul.f32 %v259, %v277
      %v299 = vmul.f32 %v260, %v277
      %v300 = vmul.f32 %v261, %v277
      %v301 = vmul.f32 %v262, %v277
      %v302 = vmul.f32 %v263, %v277
      %v303 = vmul.f32 %v264, %v277
      %v304 = vmul.f32 %v265, %v277
      %v305 = vmul.f32 %v266, %v277
      %v306 = vmul.f32 %v267, %v277
      %v307 = vmul.f32 %v268, %v277
      %v308 = vmul.f32 %v269, %v277
      %v309 = vmul.f32 %v270, %v277
      %v310 = vmul.f32 %v271, %v277
      %v311 = vld [vmem:[%s2] sm:$0x1]
      %v313 = vlaneseq
      %v314 = vshrl.u32 %v313, 7
      %v315 = vsub.s32 0, %v314
      %v316 = vrot.slane %v311, %v315
      %v318 = vadd.f32 %v279, %v316
      %v319 = vadd.f32 %v280, %v316
      %v320 = vadd.f32 %v281, %v316
      %v321 = vadd.f32 %v282, %v316
      %v322 = vadd.f32 %v283, %v316
      %v323 = vadd.f32 %v284, %v316
      %v324 = vadd.f32 %v285, %v316
      %v325 = vadd.f32 %v286, %v316
      %v326 = vadd.f32 %v287, %v316
      %v327 = vadd.f32 %v288, %v316
      %v328 = vadd.f32 %v289, %v316
      %v329 = vadd.f32 %v290, %v316
      %v330 = vadd.f32 %v291, %v316
      %v331 = vadd.f32 %v292, %v316
      %v332 = vadd.f32 %v293, %v316
      %v333 = vadd.f32 %v294, %v316
      %v334 = vadd.f32 %v295, %v316
      %v335 = vadd.f32 %v296, %v316
      %v336 = vadd.f32 %v297, %v316
      %v337 = vadd.f32 %v298, %v316
      %v338 = vadd.f32 %v299, %v316
      %v339 = vadd.f32 %v300, %v316
      %v340 = vadd.f32 %v301, %v316
      %v341 = vadd.f32 %v302, %v316
      %v342 = vadd.f32 %v303, %v316
      %v343 = vadd.f32 %v304, %v316
      %v344 = vadd.f32 %v305, %v316
      %v345 = vadd.f32 %v306, %v316
      %v346 = vadd.f32 %v307, %v316
      %v347 = vadd.f32 %v308, %v316
      %v348 = vadd.f32 %v309, %v316
      %v349 = vadd.f32 %v310, %v316
      %v350 = vmax.f32 %v318, 0.0
      %v351 = vmax.f32 %v319, 0.0
      %v352 = vmax.f32 %v320, 0.0
      %v353 = vmax.f32 %v321, 0.0
      %v354 = vmax.f32 %v322, 0.0
      %v355 = vmax.f32 %v323, 0.0
      %v356 = vmax.f32 %v324, 0.0
      %v357 = vmax.f32 %v325, 0.0
      %v358 = vmax.f32 %v326, 0.0
      %v359 = vmax.f32 %v327, 0.0
      %v360 = vmax.f32 %v328, 0.0
      %v361 = vmax.f32 %v329, 0.0
      %v362 = vmax.f32 %v330, 0.0
      %v363 = vmax.f32 %v331, 0.0
      %v364 = vmax.f32 %v332, 0.0
      %v365 = vmax.f32 %v333, 0.0
      %v366 = vmax.f32 %v334, 0.0
      %v367 = vmax.f32 %v335, 0.0
      %v368 = vmax.f32 %v336, 0.0
      %v369 = vmax.f32 %v337, 0.0
      %v370 = vmax.f32 %v338, 0.0
      %v371 = vmax.f32 %v339, 0.0
      %v372 = vmax.f32 %v340, 0.0
      %v373 = vmax.f32 %v341, 0.0
      %v374 = vmax.f32 %v342, 0.0
      %v375 = vmax.f32 %v343, 0.0
      %v376 = vmax.f32 %v344, 0.0
      %v377 = vmax.f32 %v345, 0.0
      %v378 = vmax.f32 %v346, 0.0
      %v379 = vmax.f32 %v347, 0.0
      %v380 = vmax.f32 %v348, 0.0
      %v381 = vmax.f32 %v349, 0.0
      %vm382 = vcmask 27648
      %383 = vst.msk [vmem:[#allocation2] sm:$0xf] %vm382, 0
      %384 = vst.msk [vmem:[#allocation2 + $0x4] sm:$0xf] %vm382, 0
      %vm385 = vcmask 24576
      %386 = vst.msk [vmem:[#allocation2 + $0x8] sm:$0x1] %vm385, 0
      %s387 = scalar_lea.vmem [#allocation2], 204
      %388 = vst.msk [vmem:[%s387] sm:$0xf] %vm382, 0
      %389 = vst.msk [vmem:[%s387 + $0x4] sm:$0xf] %vm382, 0
      %390 = vst.msk [vmem:[%s387 + $0x8] sm:$0x1] %vm385, 0
      %s391 = scalar_lea.vmem [#allocation2], 12
      %vm392 = vcmask 24576
      %vm393 = vsmask.f32 256
      %vm394 = vmand %vm392, %vm393
      %v395 = vld [vmem:[%s391] sm:$0x1]
      %v396 = vsel %vm394, 0, %v395
      %397 = vst [vmem:[%s391] sm:$0x1] %v396
      %v398 = vld [vmem:[%s391 + $0xc] sm:$0x1]
      %v399 = vsel %vm394, 0, %v398
      %400 = vst [vmem:[%s391 + $0xc] sm:$0x1] %v399
      %v401 = vld [vmem:[%s391 + $0x18] sm:$0x1]
      %v402 = vsel %vm394, 0, %v401
      %403 = vst [vmem:[%s391 + $0x18] sm:$0x1] %v402
      %v404 = vld [vmem:[%s391 + $0x24] sm:$0x1]
      %v405 = vsel %vm394, 0, %v404
      %406 = vst [vmem:[%s391 + $0x24] sm:$0x1] %v405
      %v407 = vld [vmem:[%s391 + $0x30] sm:$0x1]
      %v408 = vsel %vm394, 0, %v407
      %409 = vst [vmem:[%s391 + $0x30] sm:$0x1] %v408
      %v410 = vld [vmem:[%s391 + $0x3c] sm:$0x1]
      %v411 = vsel %vm394, 0, %v410
      %412 = vst [vmem:[%s391 + $0x3c] sm:$0x1] %v411
      %v413 = vld [vmem:[%s391 + $0x48] sm:$0x1]
      %v414 = vsel %vm394, 0, %v413
      %415 = vst [vmem:[%s391 + $0x48] sm:$0x1] %v414
      %v416 = vld [vmem:[%s391 + $0x54] sm:$0x1]
      %v417 = vsel %vm394, 0, %v416
      %418 = vst [vmem:[%s391 + $0x54] sm:$0x1] %v417
      %v419 = vld [vmem:[%s391 + $0x60] sm:$0x1]
      %v420 = vsel %vm394, 0, %v419
      %421 = vst [vmem:[%s391 + $0x60] sm:$0x1] %v420
      %v422 = vld [vmem:[%s391 + $0x6c] sm:$0x1]
      %v423 = vsel %vm394, 0, %v422
      %424 = vst [vmem:[%s391 + $0x6c] sm:$0x1] %v423
      %v425 = vld [vmem:[%s391 + $0x78] sm:$0x1]
      %v426 = vsel %vm394, 0, %v425
      %427 = vst [vmem:[%s391 + $0x78] sm:$0x1] %v426
      %v428 = vld [vmem:[%s391 + $0x84] sm:$0x1]
      %v429 = vsel %vm394, 0, %v428
      %430 = vst [vmem:[%s391 + $0x84] sm:$0x1] %v429
      %v431 = vld [vmem:[%s391 + $0x90] sm:$0x1]
      %v432 = vsel %vm394, 0, %v431
      %433 = vst [vmem:[%s391 + $0x90] sm:$0x1] %v432
      %v434 = vld [vmem:[%s391 + $0x9c] sm:$0x1]
      %v435 = vsel %vm394, 0, %v434
      %436 = vst [vmem:[%s391 + $0x9c] sm:$0x1] %v435
      %v437 = vld [vmem:[%s391 + $0xa8] sm:$0x1]
      %v438 = vsel %vm394, 0, %v437
      %439 = vst [vmem:[%s391 + $0xa8] sm:$0x1] %v438
      %v440 = vld [vmem:[%s391 + $0xb4] sm:$0x1]
      %v441 = vsel %vm394, 0, %v440
      %442 = vst [vmem:[%s391 + $0xb4] sm:$0x1] %v441
      %vm443 = vsmask.f32 7938
      %vm444 = vmand %vm392, %vm443
      %v445 = vld [vmem:[%s391 + $0x8] sm:$0x1]
      %v446 = vsel %vm444, 0, %v445
      %447 = vst [vmem:[%s391 + $0x8] sm:$0x1] %v446
      %v448 = vld [vmem:[%s391 + $0x14] sm:$0x1]
      %v449 = vsel %vm444, 0, %v448
      %450 = vst [vmem:[%s391 + $0x14] sm:$0x1] %v449
      %v451 = vld [vmem:[%s391 + $0x20] sm:$0x1]
      %v452 = vsel %vm444, 0, %v451
      %453 = vst [vmem:[%s391 + $0x20] sm:$0x1] %v452
      %v454 = vld [vmem:[%s391 + $0x2c] sm:$0x1]
      %v455 = vsel %vm444, 0, %v454
      %456 = vst [vmem:[%s391 + $0x2c] sm:$0x1] %v455
      %v457 = vld [vmem:[%s391 + $0x38] sm:$0x1]
      %v458 = vsel %vm444, 0, %v457
      %459 = vst [vmem:[%s391 + $0x38] sm:$0x1] %v458
      %v460 = vld [vmem:[%s391 + $0x44] sm:$0x1]
      %v461 = vsel %vm444, 0, %v460
      %462 = vst [vmem:[%s391 + $0x44] sm:$0x1] %v461
      %v463 = vld [vmem:[%s391 + $0x50] sm:$0x1]
      %v464 = vsel %vm444, 0, %v463
      %465 = vst [vmem:[%s391 + $0x50] sm:$0x1] %v464
      %v466 = vld [vmem:[%s391 + $0x5c] sm:$0x1]
      %v467 = vsel %vm444, 0, %v466
      %468 = vst [vmem:[%s391 + $0x5c] sm:$0x1] %v467
      %v469 = vld [vmem:[%s391 + $0x68] sm:$0x1]
      %v470 = vsel %vm444, 0, %v469
      %471 = vst [vmem:[%s391 + $0x68] sm:$0x1] %v470
      %v472 = vld [vmem:[%s391 + $0x74] sm:$0x1]
      %v473 = vsel %vm444, 0, %v472
      %474 = vst [vmem:[%s391 + $0x74] sm:$0x1] %v473
      %v475 = vld [vmem:[%s391 + $0x80] sm:$0x1]
      %v476 = vsel %vm444, 0, %v475
      %477 = vst [vmem:[%s391 + $0x80] sm:$0x1] %v476
      %v478 = vld [vmem:[%s391 + $0x8c] sm:$0x1]
      %v479 = vsel %vm444, 0, %v478
      %480 = vst [vmem:[%s391 + $0x8c] sm:$0x1] %v479
      %v481 = vld [vmem:[%s391 + $0x98] sm:$0x1]
      %v482 = vsel %vm444, 0, %v481
      %483 = vst [vmem:[%s391 + $0x98] sm:$0x1] %v482
      %v484 = vld [vmem:[%s391 + $0xa4] sm:$0x1]
      %v485 = vsel %vm444, 0, %v484
      %486 = vst [vmem:[%s391 + $0xa4] sm:$0x1] %v485
      %v487 = vld [vmem:[%s391 + $0xb0] sm:$0x1]
      %v488 = vsel %vm444, 0, %v487
      %489 = vst [vmem:[%s391 + $0xb0] sm:$0x1] %v488
      %v490 = vld [vmem:[%s391 + $0xbc] sm:$0x1]
      %v491 = vsel %vm444, 0, %v490
      %492 = vst [vmem:[%s391 + $0xbc] sm:$0x1] %v491
      %v493 = vpack.c.bf16 %v351, %v350
      %v494 = vpack.c.bf16 %v353, %v352
      %v495 = vpack.c.bf16 %v355, %v354
      %v496 = vpack.c.bf16 %v357, %v356
      %v497 = vpack.c.bf16 %v359, %v358
      %v498 = vpack.c.bf16 %v361, %v360
      %v499 = vpack.c.bf16 %v363, %v362
      %v500 = vpack.c.bf16 %v365, %v364
      %v501 = vpack.c.bf16 %v367, %v366
      %v502 = vpack.c.bf16 %v369, %v368
      %v503 = vpack.c.bf16 %v371, %v370
      %v504 = vpack.c.bf16 %v373, %v372
      %v505 = vpack.c.bf16 %v375, %v374
      %v506 = vpack.c.bf16 %v377, %v376
      %v507 = vpack.c.bf16 %v379, %v378
      %v508 = vpack.c.bf16 %v381, %v380
      %v525 = vunpack.c.l.b16 %v493
      %v526 = vunpack.c.h.b16 %v493
      %v527 = vunpack.c.l.b16 %v494
      %v528 = vunpack.c.h.b16 %v494
      %v529 = vunpack.c.l.b16 %v495
      %v530 = vunpack.c.h.b16 %v495
      %v531 = vunpack.c.l.b16 %v496
      %v532 = vunpack.c.h.b16 %v496
      %v533 = vunpack.c.l.b16 %v497
      %v534 = vunpack.c.h.b16 %v497
      %v535 = vunpack.c.l.b16 %v498
      %v536 = vunpack.c.h.b16 %v498
      %v537 = vunpack.c.l.b16 %v499
      %v538 = vunpack.c.h.b16 %v499
      %v539 = vunpack.c.l.b16 %v500
      %v540 = vunpack.c.h.b16 %v500
      %v541 = vunpack.c.l.b16 %v501
      %v542 = vunpack.c.h.b16 %v501
      %v543 = vunpack.c.l.b16 %v502
      %v544 = vunpack.c.h.b16 %v502
      %v545 = vunpack.c.l.b16 %v503
      %v546 = vunpack.c.h.b16 %v503
      %v547 = vunpack.c.l.b16 %v504
      %v548 = vunpack.c.h.b16 %v504
      %v549 = vunpack.c.l.b16 %v505
      %v550 = vunpack.c.h.b16 %v505
      %v551 = vunpack.c.l.b16 %v506
      %v552 = vunpack.c.h.b16 %v506
      %v553 = vunpack.c.l.b16 %v507
      %v554 = vunpack.c.h.b16 %v507
      %v555 = vunpack.c.l.b16 %v508
      %v556 = vunpack.c.h.b16 %v508
      %v557 = vpack.c.b16 %v525, %v525
      %v558 = vpack.c.b16 %v526, %v526
      %v559 = vpack.c.b16 %v527, %v527
      %v560 = vpack.c.b16 %v528, %v528
      %v561 = vpack.c.b16 %v529, %v529
      %v562 = vpack.c.b16 %v530, %v530
      %v563 = vpack.c.b16 %v531, %v531
      %v564 = vpack.c.b16 %v532, %v532
      %v565 = vpack.c.b16 %v533, %v533
      %v566 = vpack.c.b16 %v534, %v534
      %v567 = vpack.c.b16 %v535, %v535
      %v568 = vpack.c.b16 %v536, %v536
      %v569 = vpack.c.b16 %v537, %v537
      %v570 = vpack.c.b16 %v538, %v538
      %v571 = vpack.c.b16 %v539, %v539
      %v572 = vpack.c.b16 %v540, %v540
      %v573 = vpack.c.b16 %v541, %v541
      %v574 = vpack.c.b16 %v542, %v542
      %v575 = vpack.c.b16 %v543, %v543
      %v576 = vpack.c.b16 %v544, %v544
      %v577 = vpack.c.b16 %v545, %v545
      %v578 = vpack.c.b16 %v546, %v546
      %v579 = vpack.c.b16 %v547, %v547
      %v580 = vpack.c.b16 %v548, %v548
      %v581 = vpack.c.b16 %v549, %v549
      %v582 = vpack.c.b16 %v550, %v550
      %v583 = vpack.c.b16 %v551, %v551
      %v584 = vpack.c.b16 %v552, %v552
      %v585 = vpack.c.b16 %v553, %v553
      %v586 = vpack.c.b16 %v554, %v554
      %v587 = vpack.c.b16 %v555, %v555
      %v588 = vpack.c.b16 %v556, %v556
      %vm589 = vsmask.f32 4368
      %vm590 = vmor %vm393, %vm589
      %v592 = vshrl.u32 %v557, 16
      %v594 = vrot.slane %v592, 7
      %v595 = vshll.u32 %v557, 16
      %v597 = vor.u32 %v594, %v595
      %v598 = vrot.slane %v594, 4
      %v600 = vshrl.u32 %v558, 16
      %v602 = vrot.slane %v600, 7
      %v603 = vshll.u32 %v558, 16
      %v605 = vor.u32 %v602, %v603
      %v606 = vsel %vm590, %v598, %v605
      %v607 = vrot.slane %v602, 4
      %v609 = vshrl.u32 %v559, 16
      %v611 = vrot.slane %v609, 7
      %v612 = vshll.u32 %v559, 16
      %v614 = vor.u32 %v611, %v612
      %v615 = vrot.slane %v611, 4
      %v617 = vshrl.u32 %v560, 16
      %v619 = vrot.slane %v617, 7
      %v620 = vshll.u32 %v560, 16
      %v622 = vor.u32 %v619, %v620
      %v623 = vsel %vm590, %v615, %v622
      %v624 = vrot.slane %v619, 4
      %v626 = vshrl.u32 %v561, 16
      %v628 = vrot.slane %v626, 7
      %v629 = vshll.u32 %v561, 16
      %v631 = vor.u32 %v628, %v629
      %v632 = vrot.slane %v628, 4
      %v634 = vshrl.u32 %v562, 16
      %v636 = vrot.slane %v634, 7
      %v637 = vshll.u32 %v562, 16
      %v639 = vor.u32 %v636, %v637
      %v640 = vsel %vm590, %v632, %v639
      %v641 = vrot.slane %v636, 4
      %v643 = vshrl.u32 %v563, 16
      %v645 = vrot.slane %v643, 7
      %v646 = vshll.u32 %v563, 16
      %v648 = vor.u32 %v645, %v646
      %v649 = vrot.slane %v645, 4
      %v651 = vshrl.u32 %v564, 16
      %v653 = vrot.slane %v651, 7
      %v654 = vshll.u32 %v564, 16
      %v656 = vor.u32 %v653, %v654
      %v657 = vsel %vm590, %v649, %v656
      %v658 = vrot.slane %v653, 4
      %v660 = vshrl.u32 %v565, 16
      %v662 = vrot.slane %v660, 7
      %v663 = vshll.u32 %v565, 16
      %v665 = vor.u32 %v662, %v663
      %v666 = vrot.slane %v662, 4
      %v668 = vshrl.u32 %v566, 16
      %v670 = vrot.slane %v668, 7
      %v671 = vshll.u32 %v566, 16
      %v673 = vor.u32 %v670, %v671
      %v674 = vsel %vm590, %v666, %v673
      %v675 = vrot.slane %v670, 4
      %v677 = vshrl.u32 %v567, 16
      %v679 = vrot.slane %v677, 7
      %v680 = vshll.u32 %v567, 16
      %v682 = vor.u32 %v679, %v680
      %v683 = vrot.slane %v679, 4
      %v685 = vshrl.u32 %v568, 16
      %v687 = vrot.slane %v685, 7
      %v688 = vshll.u32 %v568, 16
      %v690 = vor.u32 %v687, %v688
      %v691 = vsel %vm590, %v683, %v690
      %v692 = vrot.slane %v687, 4
      %v694 = vshrl.u32 %v569, 16
      %v696 = vrot.slane %v694, 7
      %v697 = vshll.u32 %v569, 16
      %v699 = vor.u32 %v696, %v697
      %v700 = vrot.slane %v696, 4
      %v702 = vshrl.u32 %v570, 16
      %v704 = vrot.slane %v702, 7
      %v705 = vshll.u32 %v570, 16
      %v707 = vor.u32 %v704, %v705
      %v708 = vsel %vm590, %v700, %v707
      %v709 = vrot.slane %v704, 4
      %v711 = vshrl.u32 %v571, 16
      %v713 = vrot.slane %v711, 7
      %v714 = vshll.u32 %v571, 16
      %v716 = vor.u32 %v713, %v714
      %v717 = vrot.slane %v713, 4
      %v719 = vshrl.u32 %v572, 16
      %v721 = vrot.slane %v719, 7
      %v722 = vshll.u32 %v572, 16
      %v724 = vor.u32 %v721, %v722
      %v725 = vsel %vm590, %v717, %v724
      %v726 = vrot.slane %v721, 4
      %v728 = vshrl.u32 %v573, 16
      %v730 = vrot.slane %v728, 7
      %v731 = vshll.u32 %v573, 16
      %v733 = vor.u32 %v730, %v731
      %v734 = vrot.slane %v730, 4
      %v736 = vshrl.u32 %v574, 16
      %v738 = vrot.slane %v736, 7
      %v739 = vshll.u32 %v574, 16
      %v741 = vor.u32 %v738, %v739
      %v742 = vsel %vm590, %v734, %v741
      %v743 = vrot.slane %v738, 4
      %v745 = vshrl.u32 %v575, 16
      %v747 = vrot.slane %v745, 7
      %v748 = vshll.u32 %v575, 16
      %v750 = vor.u32 %v747, %v748
      %v751 = vrot.slane %v747, 4
      %v753 = vshrl.u32 %v576, 16
      %v755 = vrot.slane %v753, 7
      %v756 = vshll.u32 %v576, 16
      %v758 = vor.u32 %v755, %v756
      %v759 = vsel %vm590, %v751, %v758
      %v760 = vrot.slane %v755, 4
      %v762 = vshrl.u32 %v577, 16
      %v764 = vrot.slane %v762, 7
      %v765 = vshll.u32 %v577, 16
      %v767 = vor.u32 %v764, %v765
      %v768 = vrot.slane %v764, 4
      %v770 = vshrl.u32 %v578, 16
      %v772 = vrot.slane %v770, 7
      %v773 = vshll.u32 %v578, 16
      %v775 = vor.u32 %v772, %v773
      %v776 = vsel %vm590, %v768, %v775
      %v777 = vrot.slane %v772, 4
      %v779 = vshrl.u32 %v579, 16
      %v781 = vrot.slane %v779, 7
      %v782 = vshll.u32 %v579, 16
      %v784 = vor.u32 %v781, %v782
      %v785 = vrot.slane %v781, 4
      %v787 = vshrl.u32 %v580, 16
      %v789 = vrot.slane %v787, 7
      %v790 = vshll.u32 %v580, 16
      %v792 = vor.u32 %v789, %v790
      %v793 = vsel %vm590, %v785, %v792
      %v794 = vrot.slane %v789, 4
      %v796 = vshrl.u32 %v581, 16
      %v798 = vrot.slane %v796, 7
      %v799 = vshll.u32 %v581, 16
      %v801 = vor.u32 %v798, %v799
      %v802 = vrot.slane %v798, 4
      %v804 = vshrl.u32 %v582, 16
      %v806 = vrot.slane %v804, 7
      %v807 = vshll.u32 %v582, 16
      %v809 = vor.u32 %v806, %v807
      %v810 = vsel %vm590, %v802, %v809
      %v811 = vrot.slane %v806, 4
      %v813 = vshrl.u32 %v583, 16
      %v815 = vrot.slane %v813, 7
      %v816 = vshll.u32 %v583, 16
      %v818 = vor.u32 %v815, %v816
      %v819 = vrot.slane %v815, 4
      %v821 = vshrl.u32 %v584, 16
      %v823 = vrot.slane %v821, 7
      %v824 = vshll.u32 %v584, 16
      %v826 = vor.u32 %v823, %v824
      %v827 = vsel %vm590, %v819, %v826
      %v828 = vrot.slane %v823, 4
      %v830 = vshrl.u32 %v585, 16
      %v832 = vrot.slane %v830, 7
      %v833 = vshll.u32 %v585, 16
      %v835 = vor.u32 %v832, %v833
      %v836 = vrot.slane %v832, 4
      %v838 = vshrl.u32 %v586, 16
      %v840 = vrot.slane %v838, 7
      %v841 = vshll.u32 %v586, 16
      %v843 = vor.u32 %v840, %v841
      %v844 = vsel %vm590, %v836, %v843
      %v845 = vrot.slane %v840, 4
      %v847 = vshrl.u32 %v587, 16
      %v849 = vrot.slane %v847, 7
      %v850 = vshll.u32 %v587, 16
      %v852 = vor.u32 %v849, %v850
      %v853 = vrot.slane %v849, 4
      %v855 = vshrl.u32 %v588, 16
      %v857 = vrot.slane %v855, 7
      %v858 = vshll.u32 %v588, 16
      %v860 = vor.u32 %v857, %v858
      %v861 = vsel %vm590, %v853, %v860
      %v862 = vrot.slane %v857, 4
      %vm911 = vcmask 27648
      %vm912 = vmand %vm911, %vm443
      %v913 = vld [vmem:[%s391] sm:$0xf]
      %v914 = vsel %vm912, %v597, %v913
      %915 = vst [vmem:[%s391] sm:$0xf] %v914
      %916 = vst.msk [vmem:[%s391 + $0x4] sm:$0xf] %vm382, %v606
      %v917 = vld [vmem:[%s391 + $0x8] sm:$0x1]
      %v918 = vsel %vm394, %v607, %v917
      %919 = vst [vmem:[%s391 + $0x8] sm:$0x1] %v918
      %v920 = vld [vmem:[%s391 + $0xc] sm:$0xf]
      %v921 = vsel %vm912, %v614, %v920
      %922 = vst [vmem:[%s391 + $0xc] sm:$0xf] %v921
      %923 = vst.msk [vmem:[%s391 + $0x10] sm:$0xf] %vm382, %v623
      %v924 = vld [vmem:[%s391 + $0x14] sm:$0x1]
      %v925 = vsel %vm394, %v624, %v924
      %926 = vst [vmem:[%s391 + $0x14] sm:$0x1] %v925
      %v927 = vld [vmem:[%s391 + $0x18] sm:$0xf]
      %v928 = vsel %vm912, %v631, %v927
      %929 = vst [vmem:[%s391 + $0x18] sm:$0xf] %v928
      %930 = vst.msk [vmem:[%s391 + $0x1c] sm:$0xf] %vm382, %v640
      %v931 = vld [vmem:[%s391 + $0x20] sm:$0x1]
      %v932 = vsel %vm394, %v641, %v931
      %933 = vst [vmem:[%s391 + $0x20] sm:$0x1] %v932
      %v934 = vld [vmem:[%s391 + $0x24] sm:$0xf]
      %v935 = vsel %vm912, %v648, %v934
      %936 = vst [vmem:[%s391 + $0x24] sm:$0xf] %v935
      %937 = vst.msk [vmem:[%s391 + $0x28] sm:$0xf] %vm382, %v657
      %v938 = vld [vmem:[%s391 + $0x2c] sm:$0x1]
      %v939 = vsel %vm394, %v658, %v938
      %940 = vst [vmem:[%s391 + $0x2c] sm:$0x1] %v939
      %v941 = vld [vmem:[%s391 + $0x30] sm:$0xf]
      %v942 = vsel %vm912, %v665, %v941
      %943 = vst [vmem:[%s391 + $0x30] sm:$0xf] %v942
      %944 = vst.msk [vmem:[%s391 + $0x34] sm:$0xf] %vm382, %v674
      %v945 = vld [vmem:[%s391 + $0x38] sm:$0x1]
      %v946 = vsel %vm394, %v675, %v945
      %947 = vst [vmem:[%s391 + $0x38] sm:$0x1] %v946
      %v948 = vld [vmem:[%s391 + $0x3c] sm:$0xf]
      %v949 = vsel %vm912, %v682, %v948
      %950 = vst [vmem:[%s391 + $0x3c] sm:$0xf] %v949
      %951 = vst.msk [vmem:[%s391 + $0x40] sm:$0xf] %vm382, %v691
      %v952 = vld [vmem:[%s391 + $0x44] sm:$0x1]
      %v953 = vsel %vm394, %v692, %v952
      %954 = vst [vmem:[%s391 + $0x44] sm:$0x1] %v953
      %v955 = vld [vmem:[%s391 + $0x48] sm:$0xf]
      %v956 = vsel %vm912, %v699, %v955
      %957 = vst [vmem:[%s391 + $0x48] sm:$0xf] %v956
      %958 = vst.msk [vmem:[%s391 + $0x4c] sm:$0xf] %vm382, %v708
      %v959 = vld [vmem:[%s391 + $0x50] sm:$0x1]
      %v960 = vsel %vm394, %v709, %v959
      %961 = vst [vmem:[%s391 + $0x50] sm:$0x1] %v960
      %v962 = vld [vmem:[%s391 + $0x54] sm:$0xf]
      %v963 = vsel %vm912, %v716, %v962
      %964 = vst [vmem:[%s391 + $0x54] sm:$0xf] %v963
      %965 = vst.msk [vmem:[%s391 + $0x58] sm:$0xf] %vm382, %v725
      %v966 = vld [vmem:[%s391 + $0x5c] sm:$0x1]
      %v967 = vsel %vm394, %v726, %v966
      %968 = vst [vmem:[%s391 + $0x5c] sm:$0x1] %v967
      %v969 = vld [vmem:[%s391 + $0x60] sm:$0xf]
      %v970 = vsel %vm912, %v733, %v969
      %971 = vst [vmem:[%s391 + $0x60] sm:$0xf] %v970
      %972 = vst.msk [vmem:[%s391 + $0x64] sm:$0xf] %vm382, %v742
      %v973 = vld [vmem:[%s391 + $0x68] sm:$0x1]
      %v974 = vsel %vm394, %v743, %v973
      %975 = vst [vmem:[%s391 + $0x68] sm:$0x1] %v974
      %v976 = vld [vmem:[%s391 + $0x6c] sm:$0xf]
      %v977 = vsel %vm912, %v750, %v976
      %978 = vst [vmem:[%s391 + $0x6c] sm:$0xf] %v977
      %979 = vst.msk [vmem:[%s391 + $0x70] sm:$0xf] %vm382, %v759
      %v980 = vld [vmem:[%s391 + $0x74] sm:$0x1]
      %v981 = vsel %vm394, %v760, %v980
      %982 = vst [vmem:[%s391 + $0x74] sm:$0x1] %v981
      %v983 = vld [vmem:[%s391 + $0x78] sm:$0xf]
      %v984 = vsel %vm912, %v767, %v983
      %985 = vst [vmem:[%s391 + $0x78] sm:$0xf] %v984
      %986 = vst.msk [vmem:[%s391 + $0x7c] sm:$0xf] %vm382, %v776
      %v987 = vld [vmem:[%s391 + $0x80] sm:$0x1]
      %v988 = vsel %vm394, %v777, %v987
      %989 = vst [vmem:[%s391 + $0x80] sm:$0x1] %v988
      %v990 = vld [vmem:[%s391 + $0x84] sm:$0xf]
      %v991 = vsel %vm912, %v784, %v990
      %992 = vst [vmem:[%s391 + $0x84] sm:$0xf] %v991
      %993 = vst.msk [vmem:[%s391 + $0x88] sm:$0xf] %vm382, %v793
      %v994 = vld [vmem:[%s391 + $0x8c] sm:$0x1]
      %v995 = vsel %vm394, %v794, %v994
      %996 = vst [vmem:[%s391 + $0x8c] sm:$0x1] %v995
      %v997 = vld [vmem:[%s391 + $0x90] sm:$0xf]
      %v998 = vsel %vm912, %v801, %v997
      %999 = vst [vmem:[%s391 + $0x90] sm:$0xf] %v998
      %1000 = vst.msk [vmem:[%s391 + $0x94] sm:$0xf] %vm382, %v810
      %v1001 = vld [vmem:[%s391 + $0x98] sm:$0x1]
      %v1002 = vsel %vm394, %v811, %v1001
      %1003 = vst [vmem:[%s391 + $0x98] sm:$0x1] %v1002
      %v1004 = vld [vmem:[%s391 + $0x9c] sm:$0xf]
      %v1005 = vsel %vm912, %v818, %v1004
      %1006 = vst [vmem:[%s391 + $0x9c] sm:$0xf] %v1005
      %1007 = vst.msk [vmem:[%s391 + $0xa0] sm:$0xf] %vm382, %v827
      %v1008 = vld [vmem:[%s391 + $0xa4] sm:$0x1]
      %v1009 = vsel %vm394, %v828, %v1008
      %1010 = vst [vmem:[%s391 + $0xa4] sm:$0x1] %v1009
      %v1011 = vld [vmem:[%s391 + $0xa8] sm:$0xf]
      %v1012 = vsel %vm912, %v835, %v1011
      %1013 = vst [vmem:[%s391 + $0xa8] sm:$0xf] %v1012
      %1014 = vst.msk [vmem:[%s391 + $0xac] sm:$0xf] %vm382, %v844
      %v1015 = vld [vmem:[%s391 + $0xb0] sm:$0x1]
      %v1016 = vsel %vm394, %v845, %v1015
      %1017 = vst [vmem:[%s391 + $0xb0] sm:$0x1] %v1016
      %v1018 = vld [vmem:[%s391 + $0xb4] sm:$0xf]
      %v1019 = vsel %vm912, %v852, %v1018
      %1020 = vst [vmem:[%s391 + $0xb4] sm:$0xf] %v1019
      %1021 = vst.msk [vmem:[%s391 + $0xb8] sm:$0xf] %vm382, %v861
      %v1022 = vld [vmem:[%s391 + $0xbc] sm:$0x1]
      %v1023 = vsel %vm394, %v862, %v1022
      %1024 = vst [vmem:[%s391 + $0xbc] sm:$0x1] %v1023
      %v1025 = vld [vmem:[#allocation2] sm:$0xf]
      %v1026 = vld [vmem:[#allocation2 + $0x4] sm:$0xf]
      %v1027 = vld [vmem:[#allocation2 + $0x8] sm:$0x1]
      %v1028 = vld [vmem:[#allocation2 + $0xc] sm:$0xf]
      %v1029 = vld [vmem:[#allocation2 + $0x10] sm:$0xf]
      %v1030 = vld [vmem:[#allocation2 + $0x14] sm:$0x1]
      %v1031 = vld [vmem:[#allocation2 + $0x18] sm:$0xf]
      %v1032 = vld [vmem:[#allocation2 + $0x1c] sm:$0xf]
      %v1033 = vld [vmem:[#allocation2 + $0x20] sm:$0x1]
      %v1034 = vld [vmem:[#allocation2 + $0x24] sm:$0xf]
      %v1035 = vld [vmem:[#allocation2 + $0x28] sm:$0xf]
      %v1036 = vld [vmem:[#allocation2 + $0x2c] sm:$0x1]
      %v1037 = vld [vmem:[#allocation2 + $0x30] sm:$0xf]
      %v1038 = vld [vmem:[#allocation2 + $0x34] sm:$0xf]
      %v1039 = vld [vmem:[#allocation2 + $0x38] sm:$0x1]
      %v1040 = vld [vmem:[#allocation2 + $0x3c] sm:$0xf]
      %v1041 = vld [vmem:[#allocation2 + $0x40] sm:$0xf]
      %v1042 = vld [vmem:[#allocation2 + $0x44] sm:$0x1]
      %v1043 = vld [vmem:[#allocation2 + $0x48] sm:$0xf]
      %v1044 = vld [vmem:[#allocation2 + $0x4c] sm:$0xf]
      %v1045 = vld [vmem:[#allocation2 + $0x50] sm:$0x1]
      %v1046 = vld [vmem:[#allocation2 + $0x54] sm:$0xf]
      %v1047 = vld [vmem:[#allocation2 + $0x58] sm:$0xf]
      %v1048 = vld [vmem:[#allocation2 + $0x5c] sm:$0x1]
      %v1049 = vld [vmem:[#allocation2 + $0x60] sm:$0xf]
      %v1050 = vld [vmem:[#allocation2 + $0x64] sm:$0xf]
      %v1051 = vld [vmem:[#allocation2 + $0x68] sm:$0x1]
      %v1052 = vld [vmem:[#allocation2 + $0x6c] sm:$0xf]
      %v1053 = vld [vmem:[#allocation2 + $0x70] sm:$0xf]
      %v1054 = vld [vmem:[#allocation2 + $0x74] sm:$0x1]
      %v1055 = vld [vmem:[#allocation2 + $0x78] sm:$0xf]
      %v1056 = vld [vmem:[#allocation2 + $0x7c] sm:$0xf]
      %v1057 = vld [vmem:[#allocation2 + $0x80] sm:$0x1]
      %v1058 = vld [vmem:[#allocation2 + $0x84] sm:$0xf]
      %v1059 = vld [vmem:[#allocation2 + $0x88] sm:$0xf]
      %v1060 = vld [vmem:[#allocation2 + $0x8c] sm:$0x1]
      %v1061 = vld [vmem:[#allocation2 + $0x90] sm:$0xf]
      %v1062 = vld [vmem:[#allocation2 + $0x94] sm:$0xf]
      %v1063 = vld [vmem:[#allocation2 + $0x98] sm:$0x1]
      %v1064 = vld [vmem:[#allocation2 + $0x9c] sm:$0xf]
      %v1065 = vld [vmem:[#allocation2 + $0xa0] sm:$0xf]
      %v1066 = vld [vmem:[#allocation2 + $0xa4] sm:$0x1]
      %v1067 = vld [vmem:[#allocation2 + $0xa8] sm:$0xf]
      %v1068 = vld [vmem:[#allocation2 + $0xac] sm:$0xf]
      %v1069 = vld [vmem:[#allocation2 + $0xb0] sm:$0x1]
      %v1070 = vld [vmem:[#allocation2 + $0xb4] sm:$0xf]
      %v1071 = vld [vmem:[#allocation2 + $0xb8] sm:$0xf]
      %v1072 = vld [vmem:[#allocation2 + $0xbc] sm:$0x1]
      %v1073 = vld [vmem:[#allocation2 + $0xc0] sm:$0xf]
      %v1074 = vld [vmem:[#allocation2 + $0xc4] sm:$0xf]
      %v1075 = vld [vmem:[#allocation2 + $0xc8] sm:$0x1]
      %v1076 = vld [vmem:[#allocation2 + $0xcc] sm:$0xf]
      %v1077 = vld [vmem:[#allocation2 + $0xd0] sm:$0xf]
      %v1078 = vld [vmem:[#allocation2 + $0xd4] sm:$0x1]
      %v1111 = vunpack.c.l.b16 %v1025
      %v1112 = vunpack.c.l.b16 %v1026
      %v1113 = vunpack.c.l.b16 %v1028
      %v1114 = vunpack.c.l.b16 %v1029
      %v1115 = vunpack.c.l.b16 %v1031
      %v1116 = vunpack.c.l.b16 %v1032
      %v1117 = vunpack.c.l.b16 %v1034
      %v1118 = vunpack.c.l.b16 %v1035
      %v1119 = vunpack.c.l.b16 %v1037
      %v1120 = vunpack.c.l.b16 %v1038
      %v1121 = vunpack.c.l.b16 %v1040
      %v1122 = vunpack.c.l.b16 %v1041
      %v1123 = vunpack.c.l.b16 %v1043
      %v1124 = vunpack.c.l.b16 %v1044
      %v1125 = vunpack.c.l.b16 %v1046
      %v1126 = vunpack.c.l.b16 %v1047
      %v1127 = vunpack.c.l.b16 %v1049
      %v1128 = vunpack.c.l.b16 %v1050
      %v1129 = vunpack.c.l.b16 %v1052
      %v1130 = vunpack.c.l.b16 %v1053
      %v1131 = vunpack.c.l.b16 %v1055
      %v1132 = vunpack.c.l.b16 %v1056
      %v1133 = vunpack.c.l.b16 %v1058
      %v1134 = vunpack.c.l.b16 %v1059
      %v1135 = vunpack.c.l.b16 %v1061
      %v1136 = vunpack.c.l.b16 %v1062
      %v1137 = vunpack.c.l.b16 %v1064
      %v1138 = vunpack.c.l.b16 %v1065
      %v1139 = vunpack.c.l.b16 %v1067
      %v1140 = vunpack.c.l.b16 %v1068
      %v1141 = vunpack.c.l.b16 %v1070
      %v1142 = vunpack.c.l.b16 %v1071
      %v1143 = vpack.c.b16 %v1112, %v1111
      %v1144 = vpack.c.b16 %v1114, %v1113
      %v1145 = vpack.c.b16 %v1116, %v1115
      %v1146 = vpack.c.b16 %v1118, %v1117
      %v1147 = vpack.c.b16 %v1120, %v1119
      %v1148 = vpack.c.b16 %v1122, %v1121
      %v1149 = vpack.c.b16 %v1124, %v1123
      %v1150 = vpack.c.b16 %v1126, %v1125
      %v1151 = vpack.c.b16 %v1128, %v1127
      %v1152 = vpack.c.b16 %v1130, %v1129
      %v1153 = vpack.c.b16 %v1132, %v1131
      %v1154 = vpack.c.b16 %v1134, %v1133
      %v1155 = vpack.c.b16 %v1136, %v1135
      %v1156 = vpack.c.b16 %v1138, %v1137
      %v1157 = vpack.c.b16 %v1140, %v1139
      %v1158 = vpack.c.b16 %v1142, %v1141
      %v1175 = vunpack.c.l.b16 %v1027
      %v1176 = vunpack.c.l.b16 %v1030
      %v1177 = vunpack.c.l.b16 %v1033
      %v1178 = vunpack.c.l.b16 %v1036
      %v1179 = vunpack.c.l.b16 %v1039
      %v1180 = vunpack.c.l.b16 %v1042
      %v1181 = vunpack.c.l.b16 %v1045
      %v1182 = vunpack.c.l.b16 %v1048
      %v1183 = vunpack.c.l.b16 %v1051
      %v1184 = vunpack.c.l.b16 %v1054
      %v1185 = vunpack.c.l.b16 %v1057
      %v1186 = vunpack.c.l.b16 %v1060
      %v1187 = vunpack.c.l.b16 %v1063
      %v1188 = vunpack.c.l.b16 %v1066
      %v1189 = vunpack.c.l.b16 %v1069
      %v1190 = vunpack.c.l.b16 %v1072
      %v1191 = vpack.c.b16 %v1175, %v1175
      %v1192 = vpack.c.b16 %v1176, %v1176
      %v1193 = vpack.c.b16 %v1177, %v1177
      %v1194 = vpack.c.b16 %v1178, %v1178
      %v1195 = vpack.c.b16 %v1179, %v1179
      %v1196 = vpack.c.b16 %v1180, %v1180
      %v1197 = vpack.c.b16 %v1181, %v1181
      %v1198 = vpack.c.b16 %v1182, %v1182
      %v1199 = vpack.c.b16 %v1183, %v1183
      %v1200 = vpack.c.b16 %v1184, %v1184
      %v1201 = vpack.c.b16 %v1185, %v1185
      %v1202 = vpack.c.b16 %v1186, %v1186
      %v1203 = vpack.c.b16 %v1187, %v1187
      %v1204 = vpack.c.b16 %v1188, %v1188
      %v1205 = vpack.c.b16 %v1189, %v1189
      %v1206 = vpack.c.b16 %v1190, %v1190
      %vm1207 = vsmask.f32 7424
      %v1209 = vshrl.u32 %v1143, 16
      %v1211 = vshll.u32 %v1143, 16
      %v1213 = vrot.slane %v1211, 1
      %v1214 = vor.u32 %v1209, %v1213
      %v1216 = vshll.u32 %v1191, 16
      %v1218 = vrot.slane %v1216, 1
      %v1219 = vsel %vm1207, %v1214, %v1218
      %v1221 = vshrl.u32 %v1144, 16
      %v1223 = vshll.u32 %v1144, 16
      %v1225 = vrot.slane %v1223, 1
      %v1226 = vor.u32 %v1221, %v1225
      %v1228 = vshll.u32 %v1192, 16
      %v1230 = vrot.slane %v1228, 1
      %v1231 = vsel %vm1207, %v1226, %v1230
      %v1233 = vshrl.u32 %v1145, 16
      %v1235 = vshll.u32 %v1145, 16
      %v1237 = vrot.slane %v1235, 1
      %v1238 = vor.u32 %v1233, %v1237
      %v1240 = vshll.u32 %v1193, 16
      %v1242 = vrot.slane %v1240, 1
      %v1243 = vsel %vm1207, %v1238, %v1242
      %v1245 = vshrl.u32 %v1146, 16
      %v1247 = vshll.u32 %v1146, 16
      %v1249 = vrot.slane %v1247, 1
      %v1250 = vor.u32 %v1245, %v1249
      %v1252 = vshll.u32 %v1194, 16
      %v1254 = vrot.slane %v1252, 1
      %v1255 = vsel %vm1207, %v1250, %v1254
      %v1257 = vshrl.u32 %v1147, 16
      %v1259 = vshll.u32 %v1147, 16
      %v1261 = vrot.slane %v1259, 1
      %v1262 = vor.u32 %v1257, %v1261
      %v1264 = vshll.u32 %v1195, 16
      %v1266 = vrot.slane %v1264, 1
      %v1267 = vsel %vm1207, %v1262, %v1266
      %v1269 = vshrl.u32 %v1148, 16
      %v1271 = vshll.u32 %v1148, 16
      %v1273 = vrot.slane %v1271, 1
      %v1274 = vor.u32 %v1269, %v1273
      %v1276 = vshll.u32 %v1196, 16
      %v1278 = vrot.slane %v1276, 1
      %v1279 = vsel %vm1207, %v1274, %v1278
      %v1281 = vshrl.u32 %v1149, 16
      %v1283 = vshll.u32 %v1149, 16
      %v1285 = vrot.slane %v1283, 1
      %v1286 = vor.u32 %v1281, %v1285
      %v1288 = vshll.u32 %v1197, 16
      %v1290 = vrot.slane %v1288, 1
      %v1291 = vsel %vm1207, %v1286, %v1290
      %v1293 = vshrl.u32 %v1150, 16
      %v1295 = vshll.u32 %v1150, 16
      %v1297 = vrot.slane %v1295, 1
      %v1298 = vor.u32 %v1293, %v1297
      %v1300 = vshll.u32 %v1198, 16
      %v1302 = vrot.slane %v1300, 1
      %v1303 = vsel %vm1207, %v1298, %v1302
      %v1305 = vshrl.u32 %v1151, 16
      %v1307 = vshll.u32 %v1151, 16
      %v1309 = vrot.slane %v1307, 1
      %v1310 = vor.u32 %v1305, %v1309
      %v1312 = vshll.u32 %v1199, 16
      %v1314 = vrot.slane %v1312, 1
      %v1315 = vsel %vm1207, %v1310, %v1314
      %v1317 = vshrl.u32 %v1152, 16
      %v1319 = vshll.u32 %v1152, 16
      %v1321 = vrot.slane %v1319, 1
      %v1322 = vor.u32 %v1317, %v1321
      %v1324 = vshll.u32 %v1200, 16
      %v1326 = vrot.slane %v1324, 1
      %v1327 = vsel %vm1207, %v1322, %v1326
      %v1329 = vshrl.u32 %v1153, 16
      %v1331 = vshll.u32 %v1153, 16
      %v1333 = vrot.slane %v1331, 1
      %v1334 = vor.u32 %v1329, %v1333
      %v1336 = vshll.u32 %v1201, 16
      %v1338 = vrot.slane %v1336, 1
      %v1339 = vsel %vm1207, %v1334, %v1338
      %v1341 = vshrl.u32 %v1154, 16
      %v1343 = vshll.u32 %v1154, 16
      %v1345 = vrot.slane %v1343, 1
      %v1346 = vor.u32 %v1341, %v1345
      %v1348 = vshll.u32 %v1202, 16
      %v1350 = vrot.slane %v1348, 1
      %v1351 = vsel %vm1207, %v1346, %v1350
      %v1353 = vshrl.u32 %v1155, 16
      %v1355 = vshll.u32 %v1155, 16
      %v1357 = vrot.slane %v1355, 1
      %v1358 = vor.u32 %v1353, %v1357
      %v1360 = vshll.u32 %v1203, 16
      %v1362 = vrot.slane %v1360, 1
      %v1363 = vsel %vm1207, %v1358, %v1362
      %v1365 = vshrl.u32 %v1156, 16
      %v1367 = vshll.u32 %v1156, 16
      %v1369 = vrot.slane %v1367, 1
      %v1370 = vor.u32 %v1365, %v1369
      %v1372 = vshll.u32 %v1204, 16
      %v1374 = vrot.slane %v1372, 1
      %v1375 = vsel %vm1207, %v1370, %v1374
      %v1377 = vshrl.u32 %v1157, 16
      %v1379 = vshll.u32 %v1157, 16
      %v1381 = vrot.slane %v1379, 1
      %v1382 = vor.u32 %v1377, %v1381
      %v1384 = vshll.u32 %v1205, 16
      %v1386 = vrot.slane %v1384, 1
      %v1387 = vsel %vm1207, %v1382, %v1386
      %v1389 = vshrl.u32 %v1158, 16
      %v1391 = vshll.u32 %v1158, 16
      %v1393 = vrot.slane %v1391, 1
      %v1394 = vor.u32 %v1389, %v1393
      %v1396 = vshll.u32 %v1206, 16
      %v1398 = vrot.slane %v1396, 1
      %v1399 = vsel %vm1207, %v1394, %v1398
      %1400 = vrot.lane.b32.xlu0 %v1219, 4
      %v1401 = vpop.permute.xlu0 %1400
      %1402 = vrot.lane.b32.xlu0 %v1231, 4
      %v1403 = vpop.permute.xlu0 %1402
      %1404 = vrot.lane.b32.xlu0 %v1243, 4
      %v1405 = vpop.permute.xlu0 %1404
      %1406 = vrot.lane.b32.xlu0 %v1255, 4
      %v1407 = vpop.permute.xlu0 %1406
      %1408 = vrot.lane.b32.xlu0 %v1267, 4
      %v1409 = vpop.permute.xlu0 %1408
      %1410 = vrot.lane.b32.xlu0 %v1279, 4
      %v1411 = vpop.permute.xlu0 %1410
      %1412 = vrot.lane.b32.xlu0 %v1291, 4
      %v1413 = vpop.permute.xlu0 %1412
      %1414 = vrot.lane.b32.xlu0 %v1303, 4
      %v1415 = vpop.permute.xlu0 %1414
      %1416 = vrot.lane.b32.xlu0 %v1315, 4
      %v1417 = vpop.permute.xlu0 %1416
      %1418 = vrot.lane.b32.xlu0 %v1327, 4
      %v1419 = vpop.permute.xlu0 %1418
      %1420 = vrot.lane.b32.xlu0 %v1339, 4
      %v1421 = vpop.permute.xlu0 %1420
      %1422 = vrot.lane.b32.xlu0 %v1351, 4
      %v1423 = vpop.permute.xlu0 %1422
      %1424 = vrot.lane.b32.xlu0 %v1363, 4
      %v1425 = vpop.permute.xlu0 %1424
      %1426 = vrot.lane.b32.xlu0 %v1375, 4
      %v1427 = vpop.permute.xlu0 %1426
      %1428 = vrot.lane.b32.xlu0 %v1387, 4
      %v1429 = vpop.permute.xlu0 %1428
      %1430 = vrot.lane.b32.xlu0 %v1399, 4
      %v1431 = vpop.permute.xlu0 %1430
      %vm1432 = vcmask 1046528
      %v1433 = vrot.slane %v1143, 1
      %v1434 = vrot.slane %v1191, 1
      %v1435 = vsel %vm1432, %v1433, %v1434
      %v1436 = vrot.slane %v1144, 1
      %v1437 = vrot.slane %v1192, 1
      %v1438 = vsel %vm1432, %v1436, %v1437
      %v1439 = vrot.slane %v1145, 1
      %v1440 = vrot.slane %v1193, 1
      %v1441 = vsel %vm1432, %v1439, %v1440
      %v1442 = vrot.slane %v1146, 1
      %v1443 = vrot.slane %v1194, 1
      %v1444 = vsel %vm1432, %v1442, %v1443
      %v1445 = vrot.slane %v1147, 1
      %v1446 = vrot.slane %v1195, 1
      %v1447 = vsel %vm1432, %v1445, %v1446
      %v1448 = vrot.slane %v1148, 1
      %v1449 = vrot.slane %v1196, 1
      %v1450 = vsel %vm1432, %v1448, %v1449
      %v1451 = vrot.slane %v1149, 1
      %v1452 = vrot.slane %v1197, 1
      %v1453 = vsel %vm1432, %v1451, %v1452
      %v1454 = vrot.slane %v1150, 1
      %v1455 = vrot.slane %v1198, 1
      %v1456 = vsel %vm1432, %v1454, %v1455
      %v1457 = vrot.slane %v1151, 1
      %v1458 = vrot.slane %v1199, 1
      %v1459 = vsel %vm1432, %v1457, %v1458
      %v1460 = vrot.slane %v1152, 1
      %v1461 = vrot.slane %v1200, 1
      %v1462 = vsel %vm1432, %v1460, %v1461
      %v1463 = vrot.slane %v1153, 1
      %v1464 = vrot.slane %v1201, 1
      %v1465 = vsel %vm1432, %v1463, %v1464
      %v1466 = vrot.slane %v1154, 1
      %v1467 = vrot.slane %v1202, 1
      %v1468 = vsel %vm1432, %v1466, %v1467
      %v1469 = vrot.slane %v1155, 1
      %v1470 = vrot.slane %v1203, 1
      %v1471 = vsel %vm1432, %v1469, %v1470
      %v1472 = vrot.slane %v1156, 1
      %v1473 = vrot.slane %v1204, 1
      %v1474 = vsel %vm1432, %v1472, %v1473
      %v1475 = vrot.slane %v1157, 1
      %v1476 = vrot.slane %v1205, 1
      %v1477 = vsel %vm1432, %v1475, %v1476
      %v1478 = vrot.slane %v1158, 1
      %v1479 = vrot.slane %v1206, 1
      %v1480 = vsel %vm1432, %v1478, %v1479
      %1481 = vrot.lane.b32.xlu0 %v1435, 8
      %v1482 = vpop.permute.xlu0 %1481
      %1483 = vrot.lane.b32.xlu0 %v1438, 8
      %v1484 = vpop.permute.xlu0 %1483
      %1485 = vrot.lane.b32.xlu0 %v1441, 8
      %v1486 = vpop.permute.xlu0 %1485
      %1487 = vrot.lane.b32.xlu0 %v1444, 8
      %v1488 = vpop.permute.xlu0 %1487
      %1489 = vrot.lane.b32.xlu0 %v1447, 8
      %v1490 = vpop.permute.xlu0 %1489
      %1491 = vrot.lane.b32.xlu0 %v1450, 8
      %v1492 = vpop.permute.xlu0 %1491
      %1493 = vrot.lane.b32.xlu0 %v1453, 8
      %v1494 = vpop.permute.xlu0 %1493
      %1495 = vrot.lane.b32.xlu0 %v1456, 8
      %v1496 = vpop.permute.xlu0 %1495
      %1497 = vrot.lane.b32.xlu0 %v1459, 8
      %v1498 = vpop.permute.xlu0 %1497
      %1499 = vrot.lane.b32.xlu0 %v1462, 8
      %v1500 = vpop.permute.xlu0 %1499
      %1501 = vrot.lane.b32.xlu0 %v1465, 8
      %v1502 = vpop.permute.xlu0 %1501
      %1503 = vrot.lane.b32.xlu0 %v1468, 8
      %v1504 = vpop.permute.xlu0 %1503
      %1505 = vrot.lane.b32.xlu0 %v1471, 8
      %v1506 = vpop.permute.xlu0 %1505
      %1507 = vrot.lane.b32.xlu0 %v1474, 8
      %v1508 = vpop.permute.xlu0 %1507
      %1509 = vrot.lane.b32.xlu0 %v1477, 8
      %v1510 = vpop.permute.xlu0 %1509
      %1511 = vrot.lane.b32.xlu0 %v1480, 8
      %v1512 = vpop.permute.xlu0 %1511
      %vm1513 = vcmask 31744
      %v1515 = vsel %vm1513, %v1143, %v1401
      %v1517 = vsel %vm1513, %v1144, %v1403
      %v1519 = vsel %vm1513, %v1145, %v1405
      %v1521 = vsel %vm1513, %v1146, %v1407
      %v1523 = vsel %vm1513, %v1147, %v1409
      %v1525 = vsel %vm1513, %v1148, %v1411
      %v1527 = vsel %vm1513, %v1149, %v1413
      %v1529 = vsel %vm1513, %v1150, %v1415
      %v1531 = vsel %vm1513, %v1151, %v1417
      %v1533 = vsel %vm1513, %v1152, %v1419
      %v1535 = vsel %vm1513, %v1153, %v1421
      %v1537 = vsel %vm1513, %v1154, %v1423
      %v1539 = vsel %vm1513, %v1155, %v1425
      %v1541 = vsel %vm1513, %v1156, %v1427
      %v1543 = vsel %vm1513, %v1157, %v1429
      %v1545 = vsel %vm1513, %v1158, %v1431
      %vm1546 = vcmask 64512
      %v1548 = vsel %vm1546, %v1515, %v1482
      %v1550 = vsel %vm1546, %v1517, %v1484
      %v1552 = vsel %vm1546, %v1519, %v1486
      %v1554 = vsel %vm1546, %v1521, %v1488
      %v1556 = vsel %vm1546, %v1523, %v1490
      %v1558 = vsel %vm1546, %v1525, %v1492
      %v1560 = vsel %vm1546, %v1527, %v1494
      %v1562 = vsel %vm1546, %v1529, %v1496
      %v1564 = vsel %vm1546, %v1531, %v1498
      %v1566 = vsel %vm1546, %v1533, %v1500
      %v1568 = vsel %vm1546, %v1535, %v1502
      %v1570 = vsel %vm1546, %v1537, %v1504
      %v1572 = vsel %vm1546, %v1539, %v1506
      %v1574 = vsel %vm1546, %v1541, %v1508
      %v1576 = vsel %vm1546, %v1543, %v1510
      %v1578 = vsel %vm1546, %v1545, %v1512
      %v1579 = vld [vmem:[%s3] sm:$0xf]
      %v1580 = vld [vmem:[%s3 + $0x4] sm:$0x3]
      %v1583 = vunpack.c.l.b16 %v1579
      %v1584 = vunpack.c.l.b16 %v1580
      %v1585 = vpack.c.b16 %v1584, %v1583
      %vm1586 = vcmask 97280
      %v1587 = vsel %vm1586, %v1548, 0
      %v1589 = vsel %vm1586, %v1550, 0
      %v1591 = vsel %vm1586, %v1552, 0
      %v1593 = vsel %vm1586, %v1554, 0
      %v1595 = vsel %vm1586, %v1556, 0
      %v1597 = vsel %vm1586, %v1558, 0
      %v1599 = vsel %vm1586, %v1560, 0
      %v1601 = vsel %vm1586, %v1562, 0
      %v1603 = vsel %vm1586, %v1564, 0
      %v1605 = vsel %vm1586, %v1566, 0
      %v1607 = vsel %vm1586, %v1568, 0
      %v1609 = vsel %vm1586, %v1570, 0
      %v1611 = vsel %vm1586, %v1572, 0
      %v1613 = vsel %vm1586, %v1574, 0
      %v1615 = vsel %vm1586, %v1576, 0
      %v1617 = vsel %vm1586, %v1578, 0
      %vm1619 = vcmask 1045504
      %v1621 = vsel %vm1619, %v1585, 0
      %1623 = vmatprep.subr.bf16.mxu0 0
      %1624 = vmatpush1.bf16.msra.mxu0 %v1621
      %1625 = vmatprep.subr.bf16.mxu0 0
      %1626 = vmatpush1.bf16.msra.mxu0 0
      %1627 = vmatprep.subr.bf16.mxu0 0
      %1628 = vmatpush1.bf16.msra.mxu0 0
      %1629 = vmatprep.subr.bf16.mxu0 0
      %1630 = vmatpush1.bf16.msra.mxu0 0
      %1631 = vmatprep.subr.bf16.mxu0 0
      %1632 = vmatpush1.bf16.msra.mxu0 0
      %1633 = vmatprep.subr.bf16.mxu0 0
      %1634 = vmatpush1.bf16.msra.mxu0 0
      %1635 = vmatprep.subr.bf16.mxu0 0
      %1636 = vmatpush1.bf16.msra.mxu0 0
      %1637 = vmatprep.subr.bf16.mxu0 0
      %1638 = vmatpush1.bf16.msra.mxu0 0
      %1639 = vmatprep.subr.bf16.mxu0 0
      %1640 = vmatpush1.bf16.msra.mxu0 0
      %1641 = vmatprep.subr.bf16.mxu0 0
      %1642 = vmatpush1.bf16.msra.mxu0 0
      %1643 = vmatprep.subr.bf16.mxu0 0
      %1644 = vmatpush1.bf16.msra.mxu0 0
      %1645 = vmatprep.subr.bf16.mxu0 0
      %1646 = vmatpush1.bf16.msra.mxu0 0
      %1647 = vmatprep.subr.bf16.mxu0 0
      %1648 = vmatpush1.bf16.msra.mxu0 0
      %1649 = vmatprep.subr.bf16.mxu0 0
      %1650 = vmatpush1.bf16.msra.mxu0 0
      %1651 = vmatprep.subr.bf16.mxu0 0
      %1652 = vmatpush1.bf16.msra.mxu0 0
      %1653 = vmatprep.subr.bf16.mxu0 0
      %1654 = vmatpush1.bf16.msra.mxu0 0
      %1655 = vmatprep.mubr.bf16.mxu0 0
      %1656 = vmatmul.mubr.bf16.gmra.mrb[0].mxu0 %v1587
      %v1657 = vpop.f32.mrb[0].mxu0
      %v1658 = vadd.f32 0.0, %v1657
      %v1659 = vpop.f32.mrb[0].mxu0
      %v1660 = vpop.f32.mrb[0].mxu0
      %v1661 = vadd.f32 0.0, %v1660
      %v1662 = vpop.f32.mrb[0].mxu0
      %1663 = vmatprep.mubr.bf16.mxu0 0
      %1664 = vmatmul.mubr.bf16.gmra.mrb[0].mxu0 %v1589
      %v1665 = vpop.f32.mrb[0].mxu0
      %v1666 = vadd.f32 0.0, %v1665
      %v1667 = vpop.f32.mrb[0].mxu0
      %v1668 = vpop.f32.mrb[0].mxu0
      %v1669 = vadd.f32 0.0, %v1668
      %v1670 = vpop.f32.mrb[0].mxu0
      %1671 = vmatprep.mubr.bf16.mxu0 0
      %1672 = vmatmul.mubr.bf16.gmra.mrb[0].mxu0 %v1591
      %v1673 = vpop.f32.mrb[0].mxu0
      %v1674 = vadd.f32 0.0, %v1673
      %v1675 = vpop.f32.mrb[0].mxu0
      %v1676 = vpop.f32.mrb[0].mxu0
      %v1677 = vadd.f32 0.0, %v1676
      %v1678 = vpop.f32.mrb[0].mxu0
      %1679 = vmatprep.mubr.bf16.mxu0 0
      %1680 = vmatmul.mubr.bf16.gmra.mrb[0].mxu0 %v1593
      %v1681 = vpop.f32.mrb[0].mxu0
      %v1682 = vadd.f32 0.0, %v1681
      %v1683 = vpop.f32.mrb[0].mxu0
      %v1684 = vpop.f32.mrb[0].mxu0
      %v1685 = vadd.f32 0.0, %v1684
      %v1686 = vpop.f32.mrb[0].mxu0
      %1687 = vmatprep.mubr.bf16.mxu0 0
      %1688 = vmatmul.mubr.bf16.gmra.mrb[0].mxu0 %v1595
      %v1689 = vpop.f32.mrb[0].mxu0
      %v1690 = vadd.f32 0.0, %v1689
      %v1691 = vpop.f32.mrb[0].mxu0
      %v1692 = vpop.f32.mrb[0].mxu0
      %v1693 = vadd.f32 0.0, %v1692
      %v1694 = vpop.f32.mrb[0].mxu0
      %1695 = vmatprep.mubr.bf16.mxu0 0
      %1696 = vmatmul.mubr.bf16.gmra.mrb[0].mxu0 %v1597
      %v1697 = vpop.f32.mrb[0].mxu0
      %v1698 = vadd.f32 0.0, %v1697
      %v1699 = vpop.f32.mrb[0].mxu0
      %v1700 = vpop.f32.mrb[0].mxu0
      %v1701 = vadd.f32 0.0, %v1700
      %v1702 = vpop.f32.mrb[0].mxu0
      %1703 = vmatprep.mubr.bf16.mxu0 0
      %1704 = vmatmul.mubr.bf16.gmra.mrb[0].mxu0 %v1599
      %v1705 = vpop.f32.mrb[0].mxu0
      %v1706 = vadd.f32 0.0, %v1705
      %v1707 = vpop.f32.mrb[0].mxu0
      %v1708 = vpop.f32.mrb[0].mxu0
      %v1709 = vadd.f32 0.0, %v1708
      %v1710 = vpop.f32.mrb[0].mxu0
      %1711 = vmatprep.mubr.bf16.mxu0 0
      %1712 = vmatmul.mubr.bf16.gmra.mrb[0].mxu0 %v1601
      %v1713 = vpop.f32.mrb[0].mxu0
      %v1714 = vadd.f32 0.0, %v1713
      %v1715 = vpop.f32.mrb[0].mxu0
      %v1716 = vpop.f32.mrb[0].mxu0
      %v1717 = vadd.f32 0.0, %v1716
      %v1718 = vpop.f32.mrb[0].mxu0
      %1719 = vmatprep.mubr.bf16.mxu0 0
      %1720 = vmatmul.mubr.bf16.gmra.mrb[0].mxu0 %v1603
      %v1721 = vpop.f32.mrb[0].mxu0
      %v1722 = vadd.f32 0.0, %v1721
      %v1723 = vpop.f32.mrb[0].mxu0
      %v1724 = vpop.f32.mrb[0].mxu0
      %v1725 = vadd.f32 0.0, %v1724
      %v1726 = vpop.f32.mrb[0].mxu0
      %1727 = vmatprep.mubr.bf16.mxu0 0
      %1728 = vmatmul.mubr.bf16.gmra.mrb[0].mxu0 %v1605
      %v1729 = vpop.f32.mrb[0].mxu0
      %v1730 = vadd.f32 0.0, %v1729
      %v1731 = vpop.f32.mrb[0].mxu0
      %v1732 = vpop.f32.mrb[0].mxu0
      %v1733 = vadd.f32 0.0, %v1732
      %v1734 = vpop.f32.mrb[0].mxu0
      %1735 = vmatprep.mubr.bf16.mxu0 0
      %1736 = vmatmul.mubr.bf16.gmra.mrb[0].mxu0 %v1607
      %v1737 = vpop.f32.mrb[0].mxu0
      %v1738 = vadd.f32 0.0, %v1737
      %v1739 = vpop.f32.mrb[0].mxu0
      %v1740 = vpop.f32.mrb[0].mxu0
      %v1741 = vadd.f32 0.0, %v1740
      %v1742 = vpop.f32.mrb[0].mxu0
      %1743 = vmatprep.mubr.bf16.mxu0 0
      %1744 = vmatmul.mubr.bf16.gmra.mrb[0].mxu0 %v1609
      %v1745 = vpop.f32.mrb[0].mxu0
      %v1746 = vadd.f32 0.0, %v1745
      %v1747 = vpop.f32.mrb[0].mxu0
      %v1748 = vpop.f32.mrb[0].mxu0
      %v1749 = vadd.f32 0.0, %v1748
      %v1750 = vpop.f32.mrb[0].mxu0
      %1751 = vmatprep.mubr.bf16.mxu0 0
      %1752 = vmatmul.mubr.bf16.gmra.mrb[0].mxu0 %v1611
      %v1753 = vpop.f32.mrb[0].mxu0
      %v1754 = vadd.f32 0.0, %v1753
      %v1755 = vpop.f32.mrb[0].mxu0
      %v1756 = vpop.f32.mrb[0].mxu0
      %v1757 = vadd.f32 0.0, %v1756
      %v1758 = vpop.f32.mrb[0].mxu0
      %1759 = vmatprep.mubr.bf16.mxu0 0
      %1760 = vmatmul.mubr.bf16.gmra.mrb[0].mxu0 %v1613
      %v1761 = vpop.f32.mrb[0].mxu0
      %v1762 = vadd.f32 0.0, %v1761
      %v1763 = vpop.f32.mrb[0].mxu0
      %v1764 = vpop.f32.mrb[0].mxu0
      %v1765 = vadd.f32 0.0, %v1764
      %v1766 = vpop.f32.mrb[0].mxu0
      %1767 = vmatprep.mubr.bf16.mxu0 0
      %1768 = vmatmul.mubr.bf16.gmra.mrb[0].mxu0 %v1615
      %v1769 = vpop.f32.mrb[0].mxu0
      %v1770 = vadd.f32 0.0, %v1769
      %v1771 = vpop.f32.mrb[0].mxu0
      %v1772 = vpop.f32.mrb[0].mxu0
      %v1773 = vadd.f32 0.0, %v1772
      %v1774 = vpop.f32.mrb[0].mxu0
      %1775 = vmatprep.mubr.bf16.mxu0 0
      %1776 = vmatmul.mubr.bf16.gmra.mrb[0].mxu0 %v1617
      %v1777 = vpop.f32.mrb[0].mxu0
      %v1778 = vadd.f32 0.0, %v1777
      %v1779 = vpop.f32.mrb[0].mxu0
      %v1780 = vpop.f32.mrb[0].mxu0
      %v1781 = vadd.f32 0.0, %v1780
      %v1782 = vpop.f32.mrb[0].mxu0
      %1783 = vdwg.mxu0
      %1784 = vst.msk [vmem:[#allocation3] sm:$0xff] %vm1513, %v1658
      %1785 = vst.msk [vmem:[#allocation3 + $0x8] sm:$0xff] %vm1513, %v1661
      %1786 = vst.msk [vmem:[#allocation3 + $0x10] sm:$0xff] %vm1513, %v1666
      %1787 = vst.msk [vmem:[#allocation3 + $0x18] sm:$0xff] %vm1513, %v1669
      %1788 = vst.msk [vmem:[#allocation3 + $0x20] sm:$0xff] %vm1513, %v1674
      %1789 = vst.msk [vmem:[#allocation3 + $0x28] sm:$0xff] %vm1513, %v1677
      %1790 = vst.msk [vmem:[#allocation3 + $0x30] sm:$0xff] %vm1513, %v1682
      %1791 = vst.msk [vmem:[#allocation3 + $0x38] sm:$0xff] %vm1513, %v1685
      %1792 = vst.msk [vmem:[#allocation3 + $0x40] sm:$0xff] %vm1513, %v1690
      %1793 = vst.msk [vmem:[#allocation3 + $0x48] sm:$0xff] %vm1513, %v1693
      %1794 = vst.msk [vmem:[#allocation3 + $0x50] sm:$0xff] %vm1513, %v1698
      %1795 = vst.msk [vmem:[#allocation3 + $0x58] sm:$0xff] %vm1513, %v1701
      %1796 = vst.msk [vmem:[#allocation3 + $0x60] sm:$0xff] %vm1513, %v1706
      %1797 = vst.msk [vmem:[#allocation3 + $0x68] sm:$0xff] %vm1513, %v1709
      %1798 = vst.msk [vmem:[#allocation3 + $0x70] sm:$0xff] %vm1513, %v1714
      %1799 = vst.msk [vmem:[#allocation3 + $0x78] sm:$0xff] %vm1513, %v1717
      %1800 = vst.msk [vmem:[#allocation3 + $0x80] sm:$0xff] %vm1513, %v1722
      %1801 = vst.msk [vmem:[#allocation3 + $0x88] sm:$0xff] %vm1513, %v1725
      %1802 = vst.msk [vmem:[#allocation3 + $0x90] sm:$0xff] %vm1513, %v1730
      %1803 = vst.msk [vmem:[#allocation3 + $0x98] sm:$0xff] %vm1513, %v1733
      %1804 = vst.msk [vmem:[#allocation3 + $0xa0] sm:$0xff] %vm1513, %v1738
      %1805 = vst.msk [vmem:[#allocation3 + $0xa8] sm:$0xff] %vm1513, %v1741
      %1806 = vst.msk [vmem:[#allocation3 + $0xb0] sm:$0xff] %vm1513, %v1746
      %1807 = vst.msk [vmem:[#allocation3 + $0xb8] sm:$0xff] %vm1513, %v1749
      %1808 = vst.msk [vmem:[#allocation3 + $0xc0] sm:$0xff] %vm1513, %v1754
      %1809 = vst.msk [vmem:[#allocation3 + $0xc8] sm:$0xff] %vm1513, %v1757
      %1810 = vst.msk [vmem:[#allocation3 + $0xd0] sm:$0xff] %vm1513, %v1762
      %1811 = vst.msk [vmem:[#allocation3 + $0xd8] sm:$0xff] %vm1513, %v1765
      %1812 = vst.msk [vmem:[#allocation3 + $0xe0] sm:$0xff] %vm1513, %v1770
      %1813 = vst.msk [vmem:[#allocation3 + $0xe8] sm:$0xff] %vm1513, %v1773
      %1814 = vst.msk [vmem:[#allocation3 + $0xf0] sm:$0xff] %vm1513, %v1778
      %1815 = vst.msk [vmem:[#allocation3 + $0xf8] sm:$0xff] %vm1513, %v1781
      %v1818 = vunpack.c.l.b16 %v1073
      %v1819 = vunpack.c.l.b16 %v1074
      %v1820 = vpack.c.b16 %v1819, %v1818
      %v1822 = vunpack.c.l.b16 %v1075
      %v1823 = vpack.c.b16 %v1822, %v1822
      %v1825 = vshrl.u32 %v1820, 16
      %v1827 = vshll.u32 %v1820, 16
      %v1829 = vrot.slane %v1827, 1
      %v1830 = vor.u32 %v1825, %v1829
      %v1832 = vshll.u32 %v1823, 16
      %v1834 = vrot.slane %v1832, 1
      %v1835 = vsel %vm1207, %v1830, %v1834
      %1836 = vrot.lane.b32.xlu0 %v1835, 4
      %v1837 = vpop.permute.xlu0 %1836
      %v1838 = vrot.slane %v1820, 1
      %v1839 = vrot.slane %v1823, 1
      %v1840 = vsel %vm1432, %v1838, %v1839
      %1841 = vrot.lane.b32.xlu0 %v1840, 8
      %v1842 = vpop.permute.xlu0 %1841
      %v1844 = vsel %vm1513, %v1820, %v1837
      %v1846 = vsel %vm1546, %v1844, %v1842
      %s1847 = scalar_lea.vmem %s3, 8
      %v1848 = vld [vmem:[%s1847] sm:$0xf]
      %v1849 = vld [vmem:[%s1847 + $0x4] sm:$0x3]
      %v1852 = vunpack.c.l.b16 %v1848
      %v1853 = vunpack.c.l.b16 %v1849
      %v1854 = vpack.c.b16 %v1853, %v1852
      %v1855 = vsel %vm1586, %v1846, 0
      %v1858 = vsel %vm1619, %v1854, 0
      %1860 = vmatprep.subr.bf16.mxu0 0
      %1861 = vmatpush1.bf16.msra.mxu0 %v1858
      %1862 = vmatprep.subr.bf16.mxu0 0
      %1863 = vmatpush1.bf16.msra.mxu0 0
      %1864 = vmatprep.subr.bf16.mxu0 0
      %1865 = vmatpush1.bf16.msra.mxu0 0
      %1866 = vmatprep.subr.bf16.mxu0 0
      %1867 = vmatpush1.bf16.msra.mxu0 0
      %1868 = vmatprep.subr.bf16.mxu0 0
      %1869 = vmatpush1.bf16.msra.mxu0 0
      %1870 = vmatprep.subr.bf16.mxu0 0
      %1871 = vmatpush1.bf16.msra.mxu0 0
      %1872 = vmatprep.subr.bf16.mxu0 0
      %1873 = vmatpush1.bf16.msra.mxu0 0
      %1874 = vmatprep.subr.bf16.mxu0 0
      %1875 = vmatpush1.bf16.msra.mxu0 0
      %1876 = vmatprep.subr.bf16.mxu0 0
      %1877 = vmatpush1.bf16.msra.mxu0 0
      %1878 = vmatprep.subr.bf16.mxu0 0
      %1879 = vmatpush1.bf16.msra.mxu0 0
      %1880 = vmatprep.subr.bf16.mxu0 0
      %1881 = vmatpush1.bf16.msra.mxu0 0
      %1882 = vmatprep.subr.bf16.mxu0 0
      %1883 = vmatpush1.bf16.msra.mxu0 0
      %1884 = vmatprep.subr.bf16.mxu0 0
      %1885 = vmatpush1.bf16.msra.mxu0 0
      %1886 = vmatprep.subr.bf16.mxu0 0
      %1887 = vmatpush1.bf16.msra.mxu0 0
      %1888 = vmatprep.subr.bf16.mxu0 0
      %1889 = vmatpush1.bf16.msra.mxu0 0
      %1890 = vmatprep.subr.bf16.mxu0 0
      %1891 = vmatpush1.bf16.msra.mxu0 0
      %1892 = vmatprep.mubr.bf16.mxu0 0
      %1893 = vmatmul.mubr.bf16.gmra.mrb[0].mxu0 %v1589
      %v1894 = vpop.f32.mrb[0].mxu0
      %v1895 = vadd.f32 0.0, %v1894
      %v1896 = vpop.f32.mrb[0].mxu0
      %v1897 = vpop.f32.mrb[0].mxu0
      %v1898 = vadd.f32 0.0, %v1897
      %v1899 = vpop.f32.mrb[0].mxu0
      %1900 = vmatprep.mubr.bf16.mxu0 0
      %1901 = vmatmul.mubr.bf16.gmra.mrb[0].mxu0 %v1591
      %v1902 = vpop.f32.mrb[0].mxu0
      %v1903 = vadd.f32 0.0, %v1902
      %v1904 = vpop.f32.mrb[0].mxu0
      %v1905 = vpop.f32.mrb[0].mxu0
      %v1906 = vadd.f32 0.0, %v1905
      %v1907 = vpop.f32.mrb[0].mxu0
      %1908 = vmatprep.mubr.bf16.mxu0 0
      %1909 = vmatmul.mubr.bf16.gmra.mrb[0].mxu0 %v1593
      %v1910 = vpop.f32.mrb[0].mxu0
      %v1911 = vadd.f32 0.0, %v1910
      %v1912 = vpop.f32.mrb[0].mxu0
      %v1913 = vpop.f32.mrb[0].mxu0
      %v1914 = vadd.f32 0.0, %v1913
      %v1915 = vpop.f32.mrb[0].mxu0
      %1916 = vmatprep.mubr.bf16.mxu0 0
      %1917 = vmatmul.mubr.bf16.gmra.mrb[0].mxu0 %v1595
      %v1918 = vpop.f32.mrb[0].mxu0
      %v1919 = vadd.f32 0.0, %v1918
      %v1920 = vpop.f32.mrb[0].mxu0
      %v1921 = vpop.f32.mrb[0].mxu0
      %v1922 = vadd.f32 0.0, %v1921
      %v1923 = vpop.f32.mrb[0].mxu0
      %1924 = vmatprep.mubr.bf16.mxu0 0
      %1925 = vmatmul.mubr.bf16.gmra.mrb[0].mxu0 %v1597
      %v1926 = vpop.f32.mrb[0].mxu0
      %v1927 = vadd.f32 0.0, %v1926
      %v1928 = vpop.f32.mrb[0].mxu0
      %v1929 = vpop.f32.mrb[0].mxu0
      %v1930 = vadd.f32 0.0, %v1929
      %v1931 = vpop.f32.mrb[0].mxu0
      %1932 = vmatprep.mubr.bf16.mxu0 0
      %1933 = vmatmul.mubr.bf16.gmra.mrb[0].mxu0 %v1599
      %v1934 = vpop.f32.mrb[0].mxu0
      %v1935 = vadd.f32 0.0, %v1934
      %v1936 = vpop.f32.mrb[0].mxu0
      %v1937 = vpop.f32.mrb[0].mxu0
      %v1938 = vadd.f32 0.0, %v1937
      %v1939 = vpop.f32.mrb[0].mxu0
      %1940 = vmatprep.mubr.bf16.mxu0 0
      %1941 = vmatmul.mubr.bf16.gmra.mrb[0].mxu0 %v1601
      %v1942 = vpop.f32.mrb[0].mxu0
      %v1943 = vadd.f32 0.0, %v1942
      %v1944 = vpop.f32.mrb[0].mxu0
      %v1945 = vpop.f32.mrb[0].mxu0
      %v1946 = vadd.f32 0.0, %v1945
      %v1947 = vpop.f32.mrb[0].mxu0
      %1948 = vmatprep.mubr.bf16.mxu0 0
      %1949 = vmatmul.mubr.bf16.gmra.mrb[0].mxu0 %v1603
      %v1950 = vpop.f32.mrb[0].mxu0
      %v1951 = vadd.f32 0.0, %v1950
      %v1952 = vpop.f32.mrb[0].mxu0
      %v1953 = vpop.f32.mrb[0].mxu0
      %v1954 = vadd.f32 0.0, %v1953
      %v1955 = vpop.f32.mrb[0].mxu0
      %1956 = vmatprep.mubr.bf16.mxu0 0
      %1957 = vmatmul.mubr.bf16.gmra.mrb[0].mxu0 %v1605
      %v1958 = vpop.f32.mrb[0].mxu0
      %v1959 = vadd.f32 0.0, %v1958
      %v1960 = vpop.f32.mrb[0].mxu0
      %v1961 = vpop.f32.mrb[0].mxu0
      %v1962 = vadd.f32 0.0, %v1961
      %v1963 = vpop.f32.mrb[0].mxu0
      %1964 = vmatprep.mubr.bf16.mxu0 0
      %1965 = vmatmul.mubr.bf16.gmra.mrb[0].mxu0 %v1607
      %v1966 = vpop.f32.mrb[0].mxu0
      %v1967 = vadd.f32 0.0, %v1966
      %v1968 = vpop.f32.mrb[0].mxu0
      %v1969 = vpop.f32.mrb[0].mxu0
      %v1970 = vadd.f32 0.0, %v1969
      %v1971 = vpop.f32.mrb[0].mxu0
      %1972 = vmatprep.mubr.bf16.mxu0 0
      %1973 = vmatmul.mubr.bf16.gmra.mrb[0].mxu0 %v1609
      %v1974 = vpop.f32.mrb[0].mxu0
      %v1975 = vadd.f32 0.0, %v1974
      %v1976 = vpop.f32.mrb[0].mxu0
      %v1977 = vpop.f32.mrb[0].mxu0
      %v1978 = vadd.f32 0.0, %v1977
      %v1979 = vpop.f32.mrb[0].mxu0
      %1980 = vmatprep.mubr.bf16.mxu0 0
      %1981 = vmatmul.mubr.bf16.gmra.mrb[0].mxu0 %v1611
      %v1982 = vpop.f32.mrb[0].mxu0
      %v1983 = vadd.f32 0.0, %v1982
      %v1984 = vpop.f32.mrb[0].mxu0
      %v1985 = vpop.f32.mrb[0].mxu0
      %v1986 = vadd.f32 0.0, %v1985
      %v1987 = vpop.f32.mrb[0].mxu0
      %1988 = vmatprep.mubr.bf16.mxu0 0
      %1989 = vmatmul.mubr.bf16.gmra.mrb[0].mxu0 %v1613
      %v1990 = vpop.f32.mrb[0].mxu0
      %v1991 = vadd.f32 0.0, %v1990
      %v1992 = vpop.f32.mrb[0].mxu0
      %v1993 = vpop.f32.mrb[0].mxu0
      %v1994 = vadd.f32 0.0, %v1993
      %v1995 = vpop.f32.mrb[0].mxu0
      %1996 = vmatprep.mubr.bf16.mxu0 0
      %1997 = vmatmul.mubr.bf16.gmra.mrb[0].mxu0 %v1615
      %v1998 = vpop.f32.mrb[0].mxu0
      %v1999 = vadd.f32 0.0, %v1998
      %v2000 = vpop.f32.mrb[0].mxu0
      %v2001 = vpop.f32.mrb[0].mxu0
      %v2002 = vadd.f32 0.0, %v2001
      %v2003 = vpop.f32.mrb[0].mxu0
      %2004 = vmatprep.mubr.bf16.mxu0 0
      %2005 = vmatmul.mubr.bf16.gmra.mrb[0].mxu0 %v1617
      %v2006 = vpop.f32.mrb[0].mxu0
      %v2007 = vadd.f32 0.0, %v2006
      %v2008 = vpop.f32.mrb[0].mxu0
      %v2009 = vpop.f32.mrb[0].mxu0
      %v2010 = vadd.f32 0.0, %v2009
      %v2011 = vpop.f32.mrb[0].mxu0
      %2012 = vmatprep.mubr.bf16.mxu0 0
      %2013 = vmatmul.mubr.bf16.gmra.mrb[0].mxu0 %v1855
      %v2014 = vpop.f32.mrb[0].mxu0
      %v2015 = vadd.f32 0.0, %v2014
      %v2016 = vpop.f32.mrb[0].mxu0
      %v2017 = vpop.f32.mrb[0].mxu0
      %v2018 = vadd.f32 0.0, %v2017
      %v2019 = vpop.f32.mrb[0].mxu0
      %2020 = vdwg.mxu0
      %v2021 = vld [vmem:[#allocation3] sm:$0xff]
      %v2022 = vld [vmem:[#allocation3 + $0x8] sm:$0xff]
      %v2023 = vld [vmem:[#allocation3 + $0x10] sm:$0xff]
      %v2024 = vld [vmem:[#allocation3 + $0x18] sm:$0xff]
      %v2025 = vld [vmem:[#allocation3 + $0x20] sm:$0xff]
      %v2026 = vld [vmem:[#allocation3 + $0x28] sm:$0xff]
      %v2027 = vld [vmem:[#allocation3 + $0x30] sm:$0xff]
      %v2028 = vld [vmem:[#allocation3 + $0x38] sm:$0xff]
      %v2029 = vld [vmem:[#allocation3 + $0x40] sm:$0xff]
      %v2030 = vld [vmem:[#allocation3 + $0x48] sm:$0xff]
      %v2031 = vld [vmem:[#allocation3 + $0x50] sm:$0xff]
      %v2032 = vld [vmem:[#allocation3 + $0x58] sm:$0xff]
      %v2033 = vld [vmem:[#allocation3 + $0x60] sm:$0xff]
      %v2034 = vld [vmem:[#allocation3 + $0x68] sm:$0xff]
      %v2035 = vld [vmem:[#allocation3 + $0x70] sm:$0xff]
      %v2036 = vld [vmem:[#allocation3 + $0x78] sm:$0xff]
      %v2037 = vld [vmem:[#allocation3 + $0x80] sm:$0xff]
      %v2038 = vld [vmem:[#allocation3 + $0x88] sm:$0xff]
      %v2039 = vld [vmem:[#allocation3 + $0x90] sm:$0xff]
      %v2040 = vld [vmem:[#allocation3 + $0x98] sm:$0xff]
      %v2041 = vld [vmem:[#allocation3 + $0xa0] sm:$0xff]
      %v2042 = vld [vmem:[#allocation3 + $0xa8] sm:$0xff]
      %v2043 = vld [vmem:[#allocation3 + $0xb0] sm:$0xff]
      %v2044 = vld [vmem:[#allocation3 + $0xb8] sm:$0xff]
      %v2045 = vld [vmem:[#allocation3 + $0xc0] sm:$0xff]
      %v2046 = vld [vmem:[#allocation3 + $0xc8] sm:$0xff]
      %v2047 = vld [vmem:[#allocation3 + $0xd0] sm:$0xff]
      %v2048 = vld [vmem:[#allocation3 + $0xd8] sm:$0xff]
      %v2049 = vld [vmem:[#allocation3 + $0xe0] sm:$0xff]
      %v2050 = vld [vmem:[#allocation3 + $0xe8] sm:$0xff]
      %v2051 = vld [vmem:[#allocation3 + $0xf0] sm:$0xff]
      %v2052 = vld [vmem:[#allocation3 + $0xf8] sm:$0xff]
      %v2053 = vadd.f32 %v2021, %v1895
      %v2054 = vadd.f32 %v2022, %v1898
      %v2055 = vadd.f32 %v2023, %v1903
      %v2056 = vadd.f32 %v2024, %v1906
      %v2057 = vadd.f32 %v2025, %v1911
      %v2058 = vadd.f32 %v2026, %v1914
      %v2059 = vadd.f32 %v2027, %v1919
      %v2060 = vadd.f32 %v2028, %v1922
      %v2061 = vadd.f32 %v2029, %v1927
      %v2062 = vadd.f32 %v2030, %v1930
      %v2063 = vadd.f32 %v2031, %v1935
      %v2064 = vadd.f32 %v2032, %v1938
      %v2065 = vadd.f32 %v2033, %v1943
      %v2066 = vadd.f32 %v2034, %v1946
      %v2067 = vadd.f32 %v2035, %v1951
      %v2068 = vadd.f32 %v2036, %v1954
      %v2069 = vadd.f32 %v2037, %v1959
      %v2070 = vadd.f32 %v2038, %v1962
      %v2071 = vadd.f32 %v2039, %v1967
      %v2072 = vadd.f32 %v2040, %v1970
      %v2073 = vadd.f32 %v2041, %v1975
      %v2074 = vadd.f32 %v2042, %v1978
      %v2075 = vadd.f32 %v2043, %v1983
      %v2076 = vadd.f32 %v2044, %v1986
      %v2077 = vadd.f32 %v2045, %v1991
      %v2078 = vadd.f32 %v2046, %v1994
      %v2079 = vadd.f32 %v2047, %v1999
      %v2080 = vadd.f32 %v2048, %v2002
      %v2081 = vadd.f32 %v2049, %v2007
      %v2082 = vadd.f32 %v2050, %v2010
      %v2083 = vadd.f32 %v2051, %v2015
      %v2084 = vadd.f32 %v2052, %v2018
      %2085 = vst.msk [vmem:[#allocation3] sm:$0xff] %vm1513, %v2053
      %2086 = vst.msk [vmem:[#allocation3 + $0x8] sm:$0xff] %vm1513, %v2054
      %2087 = vst.msk [vmem:[#allocation3 + $0x10] sm:$0xff] %vm1513, %v2055
      %2088 = vst.msk [vmem:[#allocation3 + $0x18] sm:$0xff] %vm1513, %v2056
      %2089 = vst.msk [vmem:[#allocation3 + $0x20] sm:$0xff] %vm1513, %v2057
      %2090 = vst.msk [vmem:[#allocation3 + $0x28] sm:$0xff] %vm1513, %v2058
      %2091 = vst.msk [vmem:[#allocation3 + $0x30] sm:$0xff] %vm1513, %v2059
      %2092 = vst.msk [vmem:[#allocation3 + $0x38] sm:$0xff] %vm1513, %v2060
      %2093 = vst.msk [vmem:[#allocation3 + $0x40] sm:$0xff] %vm1513, %v2061
      %2094 = vst.msk [vmem:[#allocation3 + $0x48] sm:$0xff] %vm1513, %v2062
      %2095 = vst.msk [vmem:[#allocation3 + $0x50] sm:$0xff] %vm1513, %v2063
      %2096 = vst.msk [vmem:[#allocation3 + $0x58] sm:$0xff] %vm1513, %v2064
      %2097 = vst.msk [vmem:[#allocation3 + $0x60] sm:$0xff] %vm1513, %v2065
      %2098 = vst.msk [vmem:[#allocation3 + $0x68] sm:$0xff] %vm1513, %v2066
      %2099 = vst.msk [vmem:[#allocation3 + $0x70] sm:$0xff] %vm1513, %v2067
      %2100 = vst.msk [vmem:[#allocation3 + $0x78] sm:$0xff] %vm1513, %v2068
      %2101 = vst.msk [vmem:[#allocation3 + $0x80] sm:$0xff] %vm1513, %v2069
      %2102 = vst.msk [vmem:[#allocation3 + $0x88] sm:$0xff] %vm1513, %v2070
      %2103 = vst.msk [vmem:[#allocation3 + $0x90] sm:$0xff] %vm1513, %v2071
      %2104 = vst.msk [vmem:[#allocation3 + $0x98] sm:$0xff] %vm1513, %v2072
      %2105 = vst.msk [vmem:[#allocation3 + $0xa0] sm:$0xff] %vm1513, %v2073
      %2106 = vst.msk [vmem:[#allocation3 + $0xa8] sm:$0xff] %vm1513, %v2074
      %2107 = vst.msk [vmem:[#allocation3 + $0xb0] sm:$0xff] %vm1513, %v2075
      %2108 = vst.msk [vmem:[#allocation3 + $0xb8] sm:$0xff] %vm1513, %v2076
      %2109 = vst.msk [vmem:[#allocation3 + $0xc0] sm:$0xff] %vm1513, %v2077
      %2110 = vst.msk [vmem:[#allocation3 + $0xc8] sm:$0xff] %vm1513, %v2078
      %2111 = vst.msk [vmem:[#allocation3 + $0xd0] sm:$0xff] %vm1513, %v2079
      %2112 = vst.msk [vmem:[#allocation3 + $0xd8] sm:$0xff] %vm1513, %v2080
      %2113 = vst.msk [vmem:[#allocation3 + $0xe0] sm:$0xff] %vm1513, %v2081
      %2114 = vst.msk [vmem:[#allocation3 + $0xe8] sm:$0xff] %vm1513, %v2082
      %2115 = vst.msk [vmem:[#allocation3 + $0xf0] sm:$0xff] %vm1513, %v2083
      %2116 = vst.msk [vmem:[#allocation3 + $0xf8] sm:$0xff] %vm1513, %v2084
      %v2119 = vunpack.c.l.b16 %v1076
      %v2120 = vunpack.c.l.b16 %v1077
      %v2121 = vpack.c.b16 %v2120, %v2119
      %v2123 = vunpack.c.l.b16 %v1078
      %v2124 = vpack.c.b16 %v2123, %v2123
      %v2126 = vshrl.u32 %v2121, 16
      %v2128 = vshll.u32 %v2121, 16
      %v2130 = vrot.slane %v2128, 1
      %v2131 = vor.u32 %v2126, %v2130
      %v2133 = vshll.u32 %v2124, 16
      %v2135 = vrot.slane %v2133, 1
      %v2136 = vsel %vm1207, %v2131, %v2135
      %2137 = vrot.lane.b32.xlu0 %v2136, 4
      %v2138 = vpop.permute.xlu0 %2137
      %v2139 = vrot.slane %v2121, 1
      %v2140 = vrot.slane %v2124, 1
      %v2141 = vsel %vm1432, %v2139, %v2140
      %2142 = vrot.lane.b32.xlu0 %v2141, 8
      %v2143 = vpop.permute.xlu0 %2142
      %v2145 = vsel %vm1513, %v2121, %v2138
      %v2147 = vsel %vm1546, %v2145, %v2143
      %s2148 = scalar_lea.vmem %s3, 16
      %v2149 = vld [vmem:[%s2148] sm:$0xf]
      %v2150 = vld [vmem:[%s2148 + $0x4] sm:$0x3]
      %v2153 = vunpack.c.l.b16 %v2149
      %v2154 = vunpack.c.l.b16 %v2150
      %v2155 = vpack.c.b16 %v2154, %v2153
      %v2156 = vsel %vm1586, %v2147, 0
      %v2159 = vsel %vm1619, %v2155, 0
      %2161 = vmatprep.subr.bf16.mxu0 0
      %2162 = vmatpush1.bf16.msra.mxu0 %v2159
      %2163 = vmatprep.subr.bf16.mxu0 0
      %2164 = vmatpush1.bf16.msra.mxu0 0
      %2165 = vmatprep.subr.bf16.mxu0 0
      %2166 = vmatpush1.bf16.msra.mxu0 0
      %2167 = vmatprep.subr.bf16.mxu0 0
      %2168 = vmatpush1.bf16.msra.mxu0 0
      %2169 = vmatprep.subr.bf16.mxu0 0
      %2170 = vmatpush1.bf16.msra.mxu0 0
      %2171 = vmatprep.subr.bf16.mxu0 0
      %2172 = vmatpush1.bf16.msra.mxu0 0
      %2173 = vmatprep.subr.bf16.mxu0 0
      %2174 = vmatpush1.bf16.msra.mxu0 0
      %2175 = vmatprep.subr.bf16.mxu0 0
      %2176 = vmatpush1.bf16.msra.mxu0 0
      %2177 = vmatprep.subr.bf16.mxu0 0
      %2178 = vmatpush1.bf16.msra.mxu0 0
      %2179 = vmatprep.subr.bf16.mxu0 0
      %2180 = vmatpush1.bf16.msra.mxu0 0
      %2181 = vmatprep.subr.bf16.mxu0 0
      %2182 = vmatpush1.bf16.msra.mxu0 0
      %2183 = vmatprep.subr.bf16.mxu0 0
      %2184 = vmatpush1.bf16.msra.mxu0 0
      %2185 = vmatprep.subr.bf16.mxu0 0
      %2186 = vmatpush1.bf16.msra.mxu0 0
      %2187 = vmatprep.subr.bf16.mxu0 0
      %2188 = vmatpush1.bf16.msra.mxu0 0
      %2189 = vmatprep.subr.bf16.mxu0 0
      %2190 = vmatpush1.bf16.msra.mxu0 0
      %2191 = vmatprep.subr.bf16.mxu0 0
      %2192 = vmatpush1.bf16.msra.mxu0 0
      %2193 = vmatprep.mubr.bf16.mxu0 0
      %2194 = vmatmul.mubr.bf16.gmra.mrb[0].mxu0 %v1591
      %v2195 = vpop.f32.mrb[0].mxu0
      %v2196 = vadd.f32 0.0, %v2195
      %v2197 = vpop.f32.mrb[0].mxu0
      %v2198 = vpop.f32.mrb[0].mxu0
      %v2199 = vadd.f32 0.0, %v2198
      %v2200 = vpop.f32.mrb[0].mxu0
      %2201 = vmatprep.mubr.bf16.mxu0 0
      %2202 = vmatmul.mubr.bf16.gmra.mrb[0].mxu0 %v1593
      %v2203 = vpop.f32.mrb[0].mxu0
      %v2204 = vadd.f32 0.0, %v2203
      %v2205 = vpop.f32.mrb[0].mxu0
      %v2206 = vpop.f32.mrb[0].mxu0
      %v2207 = vadd.f32 0.0, %v2206
      %v2208 = vpop.f32.mrb[0].mxu0
      %2209 = vmatprep.mubr.bf16.mxu0 0
      %2210 = vmatmul.mubr.bf16.gmra.mrb[0].mxu0 %v1595
      %v2211 = vpop.f32.mrb[0].mxu0
      %v2212 = vadd.f32 0.0, %v2211
      %v2213 = vpop.f32.mrb[0].mxu0
      %v2214 = vpop.f32.mrb[0].mxu0
      %v2215 = vadd.f32 0.0, %v2214
      %v2216 = vpop.f32.mrb[0].mxu0
      %2217 = vmatprep.mubr.bf16.mxu0 0
      %2218 = vmatmul.mubr.bf16.gmra.mrb[0].mxu0 %v1597
      %v2219 = vpop.f32.mrb[0].mxu0
      %v2220 = vadd.f32 0.0, %v2219
      %v2221 = vpop.f32.mrb[0].mxu0
      %v2222 = vpop.f32.mrb[0].mxu0
      %v2223 = vadd.f32 0.0, %v2222
      %v2224 = vpop.f32.mrb[0].mxu0
      %2225 = vmatprep.mubr.bf16.mxu0 0
      %2226 = vmatmul.mubr.bf16.gmra.mrb[0].mxu0 %v1599
      %v2227 = vpop.f32.mrb[0].mxu0
      %v2228 = vadd.f32 0.0, %v2227
      %v2229 = vpop.f32.mrb[0].mxu0
      %v2230 = vpop.f32.mrb[0].mxu0
      %v2231 = vadd.f32 0.0, %v2230
      %v2232 = vpop.f32.mrb[0].mxu0
      %2233 = vmatprep.mubr.bf16.mxu0 0
      %2234 = vmatmul.mubr.bf16.gmra.mrb[0].mxu0 %v1601
      %v2235 = vpop.f32.mrb[0].mxu0
      %v2236 = vadd.f32 0.0, %v2235
      %v2237 = vpop.f32.mrb[0].mxu0
      %v2238 = vpop.f32.mrb[0].mxu0
      %v2239 = vadd.f32 0.0, %v2238
      %v2240 = vpop.f32.mrb[0].mxu0
      %2241 = vmatprep.mubr.bf16.mxu0 0
      %2242 = vmatmul.mubr.bf16.gmra.mrb[0].mxu0 %v1603
      %v2243 = vpop.f32.mrb[0].mxu0
      %v2244 = vadd.f32 0.0, %v2243
      %v2245 = vpop.f32.mrb[0].mxu0
      %v2246 = vpop.f32.mrb[0].mxu0
      %v2247 = vadd.f32 0.0, %v2246
      %v2248 = vpop.f32.mrb[0].mxu0
      %2249 = vmatprep.mubr.bf16.mxu0 0
      %2250 = vmatmul.mubr.bf16.gmra.mrb[0].mxu0 %v1605
      %v2251 = vpop.f32.mrb[0].mxu0
      %v2252 = vadd.f32 0.0, %v2251
      %v2253 = vpop.f32.mrb[0].mxu0
      %v2254 = vpop.f32.mrb[0].mxu0
      %v2255 = vadd.f32 0.0, %v2254
      %v2256 = vpop.f32.mrb[0].mxu0
      %2257 = vmatprep.mubr.bf16.mxu0 0
      %2258 = vmatmul.mubr.bf16.gmra.mrb[0].mxu0 %v1607
      %v2259 = vpop.f32.mrb[0].mxu0
      %v2260 = vadd.f32 0.0, %v2259
      %v2261 = vpop.f32.mrb[0].mxu0
      %v2262 = vpop.f32.mrb[0].mxu0
      %v2263 = vadd.f32 0.0, %v2262
      %v2264 = vpop.f32.mrb[0].mxu0
      %2265 = vmatprep.mubr.bf16.mxu0 0
      %2266 = vmatmul.mubr.bf16.gmra.mrb[0].mxu0 %v1609
      %v2267 = vpop.f32.mrb[0].mxu0
      %v2268 = vadd.f32 0.0, %v2267
      %v2269 = vpop.f32.mrb[0].mxu0
      %v2270 = vpop.f32.mrb[0].mxu0
      %v2271 = vadd.f32 0.0, %v2270
      %v2272 = vpop.f32.mrb[0].mxu0
      %2273 = vmatprep.mubr.bf16.mxu0 0
      %2274 = vmatmul.mubr.bf16.gmra.mrb[0].mxu0 %v1611
      %v2275 = vpop.f32.mrb[0].mxu0
      %v2276 = vadd.f32 0.0, %v2275
      %v2277 = vpop.f32.mrb[0].mxu0
      %v2278 = vpop.f32.mrb[0].mxu0
      %v2279 = vadd.f32 0.0, %v2278
      %v2280 = vpop.f32.mrb[0].mxu0
      %2281 = vmatprep.mubr.bf16.mxu0 0
      %2282 = vmatmul.mubr.bf16.gmra.mrb[0].mxu0 %v1613
      %v2283 = vpop.f32.mrb[0].mxu0
      %v2284 = vadd.f32 0.0, %v2283
      %v2285 = vpop.f32.mrb[0].mxu0
      %v2286 = vpop.f32.mrb[0].mxu0
      %v2287 = vadd.f32 0.0, %v2286
      %v2288 = vpop.f32.mrb[0].mxu0
      %2289 = vmatprep.mubr.bf16.mxu0 0
      %2290 = vmatmul.mubr.bf16.gmra.mrb[0].mxu0 %v1615
      %v2291 = vpop.f32.mrb[0].mxu0
      %v2292 = vadd.f32 0.0, %v2291
      %v2293 = vpop.f32.mrb[0].mxu0
      %v2294 = vpop.f32.mrb[0].mxu0
      %v2295 = vadd.f32 0.0, %v2294
      %v2296 = vpop.f32.mrb[0].mxu0
      %2297 = vmatprep.mubr.bf16.mxu0 0
      %2298 = vmatmul.mubr.bf16.gmra.mrb[0].mxu0 %v1617
      %v2299 = vpop.f32.mrb[0].mxu0
      %v2300 = vadd.f32 0.0, %v2299
      %v2301 = vpop.f32.mrb[0].mxu0
      %v2302 = vpop.f32.mrb[0].mxu0
      %v2303 = vadd.f32 0.0, %v2302
      %v2304 = vpop.f32.mrb[0].mxu0
      %2305 = vmatprep.mubr.bf16.mxu0 0
      %2306 = vmatmul.mubr.bf16.gmra.mrb[0].mxu0 %v1855
      %v2307 = vpop.f32.mrb[0].mxu0
      %v2308 = vadd.f32 0.0, %v2307
      %v2309 = vpop.f32.mrb[0].mxu0
      %v2310 = vpop.f32.mrb[0].mxu0
      %v2311 = vadd.f32 0.0, %v2310
      %v2312 = vpop.f32.mrb[0].mxu0
      %2313 = vmatprep.mubr.bf16.mxu0 0
      %2314 = vmatmul.mubr.bf16.gmra.mrb[0].mxu0 %v2156
      %v2315 = vpop.f32.mrb[0].mxu0
      %v2316 = vadd.f32 0.0, %v2315
      %v2317 = vpop.f32.mrb[0].mxu0
      %v2318 = vpop.f32.mrb[0].mxu0
      %v2319 = vadd.f32 0.0, %v2318
      %v2320 = vpop.f32.mrb[0].mxu0
      %2321 = vdwg.mxu0
      %v2322 = vld [vmem:[#allocation3] sm:$0xff]
      %v2323 = vld [vmem:[#allocation3 + $0x8] sm:$0xff]
      %v2324 = vld [vmem:[#allocation3 + $0x10] sm:$0xff]
      %v2325 = vld [vmem:[#allocation3 + $0x18] sm:$0xff]
      %v2326 = vld [vmem:[#allocation3 + $0x20] sm:$0xff]
      %v2327 = vld [vmem:[#allocation3 + $0x28] sm:$0xff]
      %v2328 = vld [vmem:[#allocation3 + $0x30] sm:$0xff]
      %v2329 = vld [vmem:[#allocation3 + $0x38] sm:$0xff]
      %v2330 = vld [vmem:[#allocation3 + $0x40] sm:$0xff]
      %v2331 = vld [vmem:[#allocation3 + $0x48] sm:$0xff]
      %v2332 = vld [vmem:[#allocation3 + $0x50] sm:$0xff]
      %v2333 = vld [vmem:[#allocation3 + $0x58] sm:$0xff]
      %v2334 = vld [vmem:[#allocation3 + $0x60] sm:$0xff]
      %v2335 = vld [vmem:[#allocation3 + $0x68] sm:$0xff]
      %v2336 = vld [vmem:[#allocation3 + $0x70] sm:$0xff]
      %v2337 = vld [vmem:[#allocation3 + $0x78] sm:$0xff]
      %v2338 = vld [vmem:[#allocation3 + $0x80] sm:$0xff]
      %v2339 = vld [vmem:[#allocation3 + $0x88] sm:$0xff]
      %v2340 = vld [vmem:[#allocation3 + $0x90] sm:$0xff]
      %v2341 = vld [vmem:[#allocation3 + $0x98] sm:$0xff]
      %v2342 = vld [vmem:[#allocation3 + $0xa0] sm:$0xff]
      %v2343 = vld [vmem:[#allocation3 + $0xa8] sm:$0xff]
      %v2344 = vld [vmem:[#allocation3 + $0xb0] sm:$0xff]
      %v2345 = vld [vmem:[#allocation3 + $0xb8] sm:$0xff]
      %v2346 = vld [vmem:[#allocation3 + $0xc0] sm:$0xff]
      %v2347 = vld [vmem:[#allocation3 + $0xc8] sm:$0xff]
      %v2348 = vld [vmem:[#allocation3 + $0xd0] sm:$0xff]
      %v2349 = vld [vmem:[#allocation3 + $0xd8] sm:$0xff]
      %v2350 = vld [vmem:[#allocation3 + $0xe0] sm:$0xff]
      %v2351 = vld [vmem:[#allocation3 + $0xe8] sm:$0xff]
      %v2352 = vld [vmem:[#allocation3 + $0xf0] sm:$0xff]
      %v2353 = vld [vmem:[#allocation3 + $0xf8] sm:$0xff]
      %v2354 = vadd.f32 %v2322, %v2196
      %v2355 = vadd.f32 %v2323, %v2199
      %v2356 = vadd.f32 %v2324, %v2204
      %v2357 = vadd.f32 %v2325, %v2207
      %v2358 = vadd.f32 %v2326, %v2212
      %v2359 = vadd.f32 %v2327, %v2215
      %v2360 = vadd.f32 %v2328, %v2220
      %v2361 = vadd.f32 %v2329, %v2223
      %v2362 = vadd.f32 %v2330, %v2228
      %v2363 = vadd.f32 %v2331, %v2231
      %v2364 = vadd.f32 %v2332, %v2236
      %v2365 = vadd.f32 %v2333, %v2239
      %v2366 = vadd.f32 %v2334, %v2244
      %v2367 = vadd.f32 %v2335, %v2247
      %v2368 = vadd.f32 %v2336, %v2252
      %v2369 = vadd.f32 %v2337, %v2255
      %v2370 = vadd.f32 %v2338, %v2260
      %v2371 = vadd.f32 %v2339, %v2263
      %v2372 = vadd.f32 %v2340, %v2268
      %v2373 = vadd.f32 %v2341, %v2271
      %v2374 = vadd.f32 %v2342, %v2276
      %v2375 = vadd.f32 %v2343, %v2279
      %v2376 = vadd.f32 %v2344, %v2284
      %v2377 = vadd.f32 %v2345, %v2287
      %v2378 = vadd.f32 %v2346, %v2292
      %v2379 = vadd.f32 %v2347, %v2295
      %v2380 = vadd.f32 %v2348, %v2300
      %v2381 = vadd.f32 %v2349, %v2303
      %v2382 = vadd.f32 %v2350, %v2308
      %v2383 = vadd.f32 %v2351, %v2311
      %v2384 = vadd.f32 %v2352, %v2316
      %v2385 = vadd.f32 %v2353, %v2319
      %2386 = vst.msk [vmem:[#allocation3] sm:$0xff] %vm1513, %v2354
      %2387 = vst.msk [vmem:[#allocation3 + $0x8] sm:$0xff] %vm1513, %v2355
      %2388 = vst.msk [vmem:[#allocation3 + $0x10] sm:$0xff] %vm1513, %v2356
      %2389 = vst.msk [vmem:[#allocation3 + $0x18] sm:$0xff] %vm1513, %v2357
      %2390 = vst.msk [vmem:[#allocation3 + $0x20] sm:$0xff] %vm1513, %v2358
      %2391 = vst.msk [vmem:[#allocation3 + $0x28] sm:$0xff] %vm1513, %v2359
      %2392 = vst.msk [vmem:[#allocation3 + $0x30] sm:$0xff] %vm1513, %v2360
      %2393 = vst.msk [vmem:[#allocation3 + $0x38] sm:$0xff] %vm1513, %v2361
      %2394 = vst.msk [vmem:[#allocation3 + $0x40] sm:$0xff] %vm1513, %v2362
      %2395 = vst.msk [vmem:[#allocation3 + $0x48] sm:$0xff] %vm1513, %v2363
      %2396 = vst.msk [vmem:[#allocation3 + $0x50] sm:$0xff] %vm1513, %v2364
      %2397 = vst.msk [vmem:[#allocation3 + $0x58] sm:$0xff] %vm1513, %v2365
      %2398 = vst.msk [vmem:[#allocation3 + $0x60] sm:$0xff] %vm1513, %v2366
      %2399 = vst.msk [vmem:[#allocation3 + $0x68] sm:$0xff] %vm1513, %v2367
      %2400 = vst.msk [vmem:[#allocation3 + $0x70] sm:$0xff] %vm1513, %v2368
      %2401 = vst.msk [vmem:[#allocation3 + $0x78] sm:$0xff] %vm1513, %v2369
      %2402 = vst.msk [vmem:[#allocation3 + $0x80] sm:$0xff] %vm1513, %v2370
      %2403 = vst.msk [vmem:[#allocation3 + $0x88] sm:$0xff] %vm1513, %v2371
      %2404 = vst.msk [vmem:[#allocation3 + $0x90] sm:$0xff] %vm1513, %v2372
      %2405 = vst.msk [vmem:[#allocation3 + $0x98] sm:$0xff] %vm1513, %v2373
      %2406 = vst.msk [vmem:[#allocation3 + $0xa0] sm:$0xff] %vm1513, %v2374
      %2407 = vst.msk [vmem:[#allocation3 + $0xa8] sm:$0xff] %vm1513, %v2375
      %2408 = vst.msk [vmem:[#allocation3 + $0xb0] sm:$0xff] %vm1513, %v2376
      %2409 = vst.msk [vmem:[#allocation3 + $0xb8] sm:$0xff] %vm1513, %v2377
      %2410 = vst.msk [vmem:[#allocation3 + $0xc0] sm:$0xff] %vm1513, %v2378
      %2411 = vst.msk [vmem:[#allocation3 + $0xc8] sm:$0xff] %vm1513, %v2379
      %2412 = vst.msk [vmem:[#allocation3 + $0xd0] sm:$0xff] %vm1513, %v2380
      %2413 = vst.msk [vmem:[#allocation3 + $0xd8] sm:$0xff] %vm1513, %v2381
      %2414 = vst.msk [vmem:[#allocation3 + $0xe0] sm:$0xff] %vm1513, %v2382
      %2415 = vst.msk [vmem:[#allocation3 + $0xe8] sm:$0xff] %vm1513, %v2383
      %2416 = vst.msk [vmem:[#allocation3 + $0xf0] sm:$0xff] %vm1513, %v2384
      %2417 = vst.msk [vmem:[#allocation3 + $0xf8] sm:$0xff] %vm1513, %v2385
      %v2418 = vld [vmem:[#allocation3] sm:$0xff]
      %v2419 = vld [vmem:[#allocation3 + $0x8] sm:$0xff]
      %v2420 = vld [vmem:[#allocation3 + $0x10] sm:$0xff]
      %v2421 = vld [vmem:[#allocation3 + $0x18] sm:$0xff]
      %v2422 = vld [vmem:[#allocation3 + $0x20] sm:$0xff]
      %v2423 = vld [vmem:[#allocation3 + $0x28] sm:$0xff]
      %v2424 = vld [vmem:[#allocation3 + $0x30] sm:$0xff]
      %v2425 = vld [vmem:[#allocation3 + $0x38] sm:$0xff]
      %v2426 = vld [vmem:[#allocation3 + $0x40] sm:$0xff]
      %v2427 = vld [vmem:[#allocation3 + $0x48] sm:$0xff]
      %v2428 = vld [vmem:[#allocation3 + $0x50] sm:$0xff]
      %v2429 = vld [vmem:[#allocation3 + $0x58] sm:$0xff]
      %v2430 = vld [vmem:[#allocation3 + $0x60] sm:$0xff]
      %v2431 = vld [vmem:[#allocation3 + $0x68] sm:$0xff]
      %v2432 = vld [vmem:[#allocation3 + $0x70] sm:$0xff]
      %v2433 = vld [vmem:[#allocation3 + $0x78] sm:$0xff]
      %v2434 = vld [vmem:[#allocation3 + $0x80] sm:$0xff]
      %v2435 = vld [vmem:[#allocation3 + $0x88] sm:$0xff]
      %v2436 = vld [vmem:[#allocation3 + $0x90] sm:$0xff]
      %v2437 = vld [vmem:[#allocation3 + $0x98] sm:$0xff]
      %v2438 = vld [vmem:[#allocation3 + $0xa0] sm:$0xff]
      %v2439 = vld [vmem:[#allocation3 + $0xa8] sm:$0xff]
      %v2440 = vld [vmem:[#allocation3 + $0xb0] sm:$0xff]
      %v2441 = vld [vmem:[#allocation3 + $0xb8] sm:$0xff]
      %v2442 = vld [vmem:[#allocation3 + $0xc0] sm:$0xff]
      %v2443 = vld [vmem:[#allocation3 + $0xc8] sm:$0xff]
      %v2444 = vld [vmem:[#allocation3 + $0xd0] sm:$0xff]
      %v2445 = vld [vmem:[#allocation3 + $0xd8] sm:$0xff]
      %v2446 = vld [vmem:[#allocation3 + $0xe0] sm:$0xff]
      %v2447 = vld [vmem:[#allocation3 + $0xe8] sm:$0xff]
      %v2448 = vld [vmem:[#allocation3 + $0xf0] sm:$0xff]
      %v2449 = vld [vmem:[#allocation3 + $0xf8] sm:$0xff]
      %2450 = vst.msk [vmem:[%s233] sm:$0xff] %vm1513, %v2418
      %2451 = vst.msk [vmem:[%s233 + $0x8] sm:$0xff] %vm1513, %v2419
      %2452 = vst.msk [vmem:[%s233 + $0x10] sm:$0xff] %vm1513, %v2420
      %2453 = vst.msk [vmem:[%s233 + $0x18] sm:$0xff] %vm1513, %v2421
      %2454 = vst.msk [vmem:[%s233 + $0x20] sm:$0xff] %vm1513, %v2422
      %2455 = vst.msk [vmem:[%s233 + $0x28] sm:$0xff] %vm1513, %v2423
      %2456 = vst.msk [vmem:[%s233 + $0x30] sm:$0xff] %vm1513, %v2424
      %2457 = vst.msk [vmem:[%s233 + $0x38] sm:$0xff] %vm1513, %v2425
      %2458 = vst.msk [vmem:[%s233 + $0x40] sm:$0xff] %vm1513, %v2426
      %2459 = vst.msk [vmem:[%s233 + $0x48] sm:$0xff] %vm1513, %v2427
      %2460 = vst.msk [vmem:[%s233 + $0x50] sm:$0xff] %vm1513, %v2428
      %2461 = vst.msk [vmem:[%s233 + $0x58] sm:$0xff] %vm1513, %v2429
      %2462 = vst.msk [vmem:[%s233 + $0x60] sm:$0xff] %vm1513, %v2430
      %2463 = vst.msk [vmem:[%s233 + $0x68] sm:$0xff] %vm1513, %v2431
      %2464 = vst.msk [vmem:[%s233 + $0x70] sm:$0xff] %vm1513, %v2432
      %2465 = vst.msk [vmem:[%s233 + $0x78] sm:$0xff] %vm1513, %v2433
      %2466 = vst.msk [vmem:[%s233 + $0x80] sm:$0xff] %vm1513, %v2434
      %2467 = vst.msk [vmem:[%s233 + $0x88] sm:$0xff] %vm1513, %v2435
      %2468 = vst.msk [vmem:[%s233 + $0x90] sm:$0xff] %vm1513, %v2436
      %2469 = vst.msk [vmem:[%s233 + $0x98] sm:$0xff] %vm1513, %v2437
      %2470 = vst.msk [vmem:[%s233 + $0xa0] sm:$0xff] %vm1513, %v2438
      %2471 = vst.msk [vmem:[%s233 + $0xa8] sm:$0xff] %vm1513, %v2439
      %2472 = vst.msk [vmem:[%s233 + $0xb0] sm:$0xff] %vm1513, %v2440
      %2473 = vst.msk [vmem:[%s233 + $0xb8] sm:$0xff] %vm1513, %v2441
      %2474 = vst.msk [vmem:[%s233 + $0xc0] sm:$0xff] %vm1513, %v2442
      %2475 = vst.msk [vmem:[%s233 + $0xc8] sm:$0xff] %vm1513, %v2443
      %2476 = vst.msk [vmem:[%s233 + $0xd0] sm:$0xff] %vm1513, %v2444
      %2477 = vst.msk [vmem:[%s233 + $0xd8] sm:$0xff] %vm1513, %v2445
      %2478 = vst.msk [vmem:[%s233 + $0xe0] sm:$0xff] %vm1513, %v2446
      %2479 = vst.msk [vmem:[%s233 + $0xe8] sm:$0xff] %vm1513, %v2447
      %2480 = vst.msk [vmem:[%s233 + $0xf0] sm:$0xff] %vm1513, %v2448
      %2481 = vst.msk [vmem:[%s233 + $0xf8] sm:$0xff] %vm1513, %v2449
      %v2482 = vsel %vm1513, %v2418, 0.0
      %v2483 = vsel %vm1513, %v2419, 0.0
      %v2484 = vadd.f32 %v2482, %v2483
      %v2485 = vsel %vm1513, %v2420, 0.0
      %v2486 = vadd.f32 %v2484, %v2485
      %v2487 = vsel %vm1513, %v2421, 0.0
      %v2488 = vadd.f32 %v2486, %v2487
      %v2489 = vsel %vm1513, %v2422, 0.0
      %v2490 = vadd.f32 %v2488, %v2489
      %v2491 = vsel %vm1513, %v2423, 0.0
      %v2492 = vadd.f32 %v2490, %v2491
      %v2493 = vsel %vm1513, %v2424, 0.0
      %v2494 = vadd.f32 %v2492, %v2493
      %v2495 = vsel %vm1513, %v2425, 0.0
      %v2496 = vadd.f32 %v2494, %v2495
      %v2497 = vsel %vm1513, %v2426, 0.0
      %v2498 = vadd.f32 %v2496, %v2497
      %v2499 = vsel %vm1513, %v2427, 0.0
      %v2500 = vadd.f32 %v2498, %v2499
      %v2501 = vsel %vm1513, %v2428, 0.0
      %v2502 = vadd.f32 %v2500, %v2501
      %v2503 = vsel %vm1513, %v2429, 0.0
      %v2504 = vadd.f32 %v2502, %v2503
      %v2505 = vsel %vm1513, %v2430, 0.0
      %v2506 = vadd.f32 %v2504, %v2505
      %v2507 = vsel %vm1513, %v2431, 0.0
      %v2508 = vadd.f32 %v2506, %v2507
      %v2509 = vsel %vm1513, %v2432, 0.0
      %v2510 = vadd.f32 %v2508, %v2509
      %v2511 = vsel %vm1513, %v2433, 0.0
      %v2512 = vadd.f32 %v2510, %v2511
      %v2513 = vsel %vm1513, %v2434, 0.0
      %v2514 = vadd.f32 %v2512, %v2513
      %v2515 = vsel %vm1513, %v2435, 0.0
      %v2516 = vadd.f32 %v2514, %v2515
      %v2517 = vsel %vm1513, %v2436, 0.0
      %v2518 = vadd.f32 %v2516, %v2517
      %v2519 = vsel %vm1513, %v2437, 0.0
      %v2520 = vadd.f32 %v2518, %v2519
      %v2521 = vsel %vm1513, %v2438, 0.0
      %v2522 = vadd.f32 %v2520, %v2521
      %v2523 = vsel %vm1513, %v2439, 0.0
      %v2524 = vadd.f32 %v2522, %v2523
      %v2525 = vsel %vm1513, %v2440, 0.0
      %v2526 = vadd.f32 %v2524, %v2525
      %v2527 = vsel %vm1513, %v2441, 0.0
      %v2528 = vadd.f32 %v2526, %v2527
      %v2529 = vsel %vm1513, %v2442, 0.0
      %v2530 = vadd.f32 %v2528, %v2529
      %v2531 = vsel %vm1513, %v2443, 0.0
      %v2532 = vadd.f32 %v2530, %v2531
      %v2533 = vsel %vm1513, %v2444, 0.0
      %v2534 = vadd.f32 %v2532, %v2533
      %v2535 = vsel %vm1513, %v2445, 0.0
      %v2536 = vadd.f32 %v2534, %v2535
      %v2537 = vsel %vm1513, %v2446, 0.0
      %v2538 = vadd.f32 %v2536, %v2537
      %v2539 = vsel %vm1513, %v2447, 0.0
      %v2540 = vadd.f32 %v2538, %v2539
      %v2541 = vsel %vm1513, %v2448, 0.0
      %v2542 = vadd.f32 %v2540, %v2541
      %v2543 = vsel %vm1513, %v2449, 0.0
      %v2544 = vadd.f32 %v2542, %v2543
      %v2545 = vrot.slane %v2544, 4
      %v2546 = vadd.f32 %v2544, %v2545
      %v2547 = vrot.slane %v2546, 2
      %v2548 = vadd.f32 %v2546, %v2547
      %v2549 = vrot.slane %v2548, 1
      %v2550 = vadd.f32 %v2548, %v2549
      %v2551 = vmul.f32 %v2550, 0.00390625
      %v2552 = vsub.f32 %v2418, %v2551
      %v2553 = vsub.f32 %v2419, %v2551
      %v2554 = vsub.f32 %v2420, %v2551
      %v2555 = vsub.f32 %v2421, %v2551
      %v2556 = vsub.f32 %v2422, %v2551
      %v2557 = vsub.f32 %v2423, %v2551
      %v2558 = vsub.f32 %v2424, %v2551
      %v2559 = vsub.f32 %v2425, %v2551
      %v2560 = vsub.f32 %v2426, %v2551
      %v2561 = vsub.f32 %v2427, %v2551
      %v2562 = vsub.f32 %v2428, %v2551
      %v2563 = vsub.f32 %v2429, %v2551
      %v2564 = vsub.f32 %v2430, %v2551
      %v2565 = vsub.f32 %v2431, %v2551
      %v2566 = vsub.f32 %v2432, %v2551
      %v2567 = vsub.f32 %v2433, %v2551
      %v2568 = vsub.f32 %v2434, %v2551
      %v2569 = vsub.f32 %v2435, %v2551
      %v2570 = vsub.f32 %v2436, %v2551
      %v2571 = vsub.f32 %v2437, %v2551
      %v2572 = vsub.f32 %v2438, %v2551
      %v2573 = vsub.f32 %v2439, %v2551
      %v2574 = vsub.f32 %v2440, %v2551
      %v2575 = vsub.f32 %v2441, %v2551
      %v2576 = vsub.f32 %v2442, %v2551
      %v2577 = vsub.f32 %v2443, %v2551
      %v2578 = vsub.f32 %v2444, %v2551
      %v2579 = vsub.f32 %v2445, %v2551
      %v2580 = vsub.f32 %v2446, %v2551
      %v2581 = vsub.f32 %v2447, %v2551
      %v2582 = vsub.f32 %v2448, %v2551
      %v2583 = vsub.f32 %v2449, %v2551
      %v2584 = vmul.f32 %v2552, %v2552
      %v2585 = vmul.f32 %v2553, %v2553
      %v2586 = vmul.f32 %v2554, %v2554
      %v2587 = vmul.f32 %v2555, %v2555
      %v2588 = vmul.f32 %v2556, %v2556
      %v2589 = vmul.f32 %v2557, %v2557
      %v2590 = vmul.f32 %v2558, %v2558
      %v2591 = vmul.f32 %v2559, %v2559
      %v2592 = vmul.f32 %v2560, %v2560
      %v2593 = vmul.f32 %v2561, %v2561
      %v2594 = vmul.f32 %v2562, %v2562
      %v2595 = vmul.f32 %v2563, %v2563
      %v2596 = vmul.f32 %v2564, %v2564
      %v2597 = vmul.f32 %v2565, %v2565
      %v2598 = vmul.f32 %v2566, %v2566
      %v2599 = vmul.f32 %v2567, %v2567
      %v2600 = vmul.f32 %v2568, %v2568
      %v2601 = vmul.f32 %v2569, %v2569
      %v2602 = vmul.f32 %v2570, %v2570
      %v2603 = vmul.f32 %v2571, %v2571
      %v2604 = vmul.f32 %v2572, %v2572
      %v2605 = vmul.f32 %v2573, %v2573
      %v2606 = vmul.f32 %v2574, %v2574
      %v2607 = vmul.f32 %v2575, %v2575
      %v2608 = vmul.f32 %v2576, %v2576
      %v2609 = vmul.f32 %v2577, %v2577
      %v2610 = vmul.f32 %v2578, %v2578
      %v2611 = vmul.f32 %v2579, %v2579
      %v2612 = vmul.f32 %v2580, %v2580
      %v2613 = vmul.f32 %v2581, %v2581
      %v2614 = vmul.f32 %v2582, %v2582
      %v2615 = vmul.f32 %v2583, %v2583
      %v2616 = vsel %vm1513, %v2584, 0.0
      %v2617 = vsel %vm1513, %v2585, 0.0
      %v2618 = vadd.f32 %v2616, %v2617
      %v2619 = vsel %vm1513, %v2586, 0.0
      %v2620 = vadd.f32 %v2618, %v2619
      %v2621 = vsel %vm1513, %v2587, 0.0
      %v2622 = vadd.f32 %v2620, %v2621
      %v2623 = vsel %vm1513, %v2588, 0.0
      %v2624 = vadd.f32 %v2622, %v2623
      %v2625 = vsel %vm1513, %v2589, 0.0
      %v2626 = vadd.f32 %v2624, %v2625
      %v2627 = vsel %vm1513, %v2590, 0.0
      %v2628 = vadd.f32 %v2626, %v2627
      %v2629 = vsel %vm1513, %v2591, 0.0
      %v2630 = vadd.f32 %v2628, %v2629
      %v2631 = vsel %vm1513, %v2592, 0.0
      %v2632 = vadd.f32 %v2630, %v2631
      %v2633 = vsel %vm1513, %v2593, 0.0
      %v2634 = vadd.f32 %v2632, %v2633
      %v2635 = vsel %vm1513, %v2594, 0.0
      %v2636 = vadd.f32 %v2634, %v2635
      %v2637 = vsel %vm1513, %v2595, 0.0
      %v2638 = vadd.f32 %v2636, %v2637
      %v2639 = vsel %vm1513, %v2596, 0.0
      %v2640 = vadd.f32 %v2638, %v2639
      %v2641 = vsel %vm1513, %v2597, 0.0
      %v2642 = vadd.f32 %v2640, %v2641
      %v2643 = vsel %vm1513, %v2598, 0.0
      %v2644 = vadd.f32 %v2642, %v2643
      %v2645 = vsel %vm1513, %v2599, 0.0
      %v2646 = vadd.f32 %v2644, %v2645
      %v2647 = vsel %vm1513, %v2600, 0.0
      %v2648 = vadd.f32 %v2646, %v2647
      %v2649 = vsel %vm1513, %v2601, 0.0
      %v2650 = vadd.f32 %v2648, %v2649
      %v2651 = vsel %vm1513, %v2602, 0.0
      %v2652 = vadd.f32 %v2650, %v2651
      %v2653 = vsel %vm1513, %v2603, 0.0
      %v2654 = vadd.f32 %v2652, %v2653
      %v2655 = vsel %vm1513, %v2604, 0.0
      %v2656 = vadd.f32 %v2654, %v2655
      %v2657 = vsel %vm1513, %v2605, 0.0
      %v2658 = vadd.f32 %v2656, %v2657
      %v2659 = vsel %vm1513, %v2606, 0.0
      %v2660 = vadd.f32 %v2658, %v2659
      %v2661 = vsel %vm1513, %v2607, 0.0
      %v2662 = vadd.f32 %v2660, %v2661
      %v2663 = vsel %vm1513, %v2608, 0.0
      %v2664 = vadd.f32 %v2662, %v2663
      %v2665 = vsel %vm1513, %v2609, 0.0
      %v2666 = vadd.f32 %v2664, %v2665
      %v2667 = vsel %vm1513, %v2610, 0.0
      %v2668 = vadd.f32 %v2666, %v2667
      %v2669 = vsel %vm1513, %v2611, 0.0
      %v2670 = vadd.f32 %v2668, %v2669
      %v2671 = vsel %vm1513, %v2612, 0.0
      %v2672 = vadd.f32 %v2670, %v2671
      %v2673 = vsel %vm1513, %v2613, 0.0
      %v2674 = vadd.f32 %v2672, %v2673
      %v2675 = vsel %vm1513, %v2614, 0.0
      %v2676 = vadd.f32 %v2674, %v2675
      %v2677 = vsel %vm1513, %v2615, 0.0
      %v2678 = vadd.f32 %v2676, %v2677
      %v2679 = vrot.slane %v2678, 4
      %v2680 = vadd.f32 %v2678, %v2679
      %v2681 = vrot.slane %v2680, 2
      %v2682 = vadd.f32 %v2680, %v2681
      %v2683 = vrot.slane %v2682, 1
      %v2684 = vadd.f32 %v2682, %v2683
      %vm2685 = vcmask 1040384
      %v2686 = vsel %vm2685, %v2550, %v2684
      %vm2687 = vcmask 25600
      %2688 = vst.msk [vmem:[%s238] sm:$0x3] %vm2687, %v2686
      %s2689 = smul.u32 32, %s17
      %p2690 = scmp.lt.s32.totalorder %s2689, 63
      %s2691 = scalar_select %p2690, %s2689, 63
      %s2692 = smul.addr %s2691, 8
      %s2693 = scalar_lea.vmem %s4, %s2692
      %p2694 = scmp.lt.s32.totalorder %s17, 1
      %s2695 = scalar_select %p2694, %s17, 1
      %s2696 = smul.addr %s2695, 2
      %s2697 = scalar_lea.vmem %s5, %s2696
      // Predicated region
      $region37: #{basic_block_forward.4} parent=35 // pred_check
        %p2698 = pneg %p124
      $region38: #{basic_block_forward.4} parent=35 // pred_check_branch
        %2700 = sbr.rel (%p2698) target = $region40
      $region39: #{basic_block_forward.4} parent=35 // pred_region
        %s2701 = smul.u32 32, %s17
      $region40: #{basic_block_forward.4} parent=35 // pred_fallthru
        _
      // Predicated region
      $region41: #{basic_block_forward.4} parent=35 // pred_check
        %p2702 = pneg %p150
      $region42: #{basic_block_forward.4} parent=35 // pred_check_branch
        %2704 = sbr.rel (%p2702) target = $region44
      $region43: #{basic_block_forward.4} parent=35 // pred_region
        _
      $region44: #{basic_block_forward.4} parent=35 // pred_fallthru
        _
    $region36: #{basic_block_forward.4} parent=5 // pred_fallthru
      _
    %p2705 = scmp.le.s32.totalorder 2, %s12
    // Predicated region
    $region45: #{basic_block_forward.4} parent=5 // pred_check
      %p2706 = pneg %p2705
    $region46: #{basic_block_forward.4} parent=5 // pred_check_branch
      %2708 = sbr.rel (%p2706) target = $region48
    $region47: #{basic_block_forward.4} parent=5 // pred_region
      %s2709 = ssub.s32 %s12, 2
      // Predicated region
      $region49: #{basic_block_forward.4} parent=47 // pred_check
        %p2710 = pneg %p130
      $region50: #{basic_block_forward.4} parent=47 // pred_check_branch
        %2712 = sbr.rel (%p2710) target = $region52
      $region51: #{basic_block_forward.4} parent=47 // pred_region
        %s2713 = smul.u32 32, %s18
        %p2714 = scmp.lt.s32.totalorder %s2713, 63
        %s2715 = scalar_select %p2714, %s2713, 63
        %s2716 = smul.addr %s2715, 8
        %s2717 = scalar_lea.vmem %s4, %s2716
      $region52: #{basic_block_forward.4} parent=47 // pred_fallthru
        _
      // Predicated region
      $region53: #{basic_block_forward.4} parent=47 // pred_check
        %p2718 = pneg %p156
      $region54: #{basic_block_forward.4} parent=47 // pred_check_branch
        %2720 = sbr.rel (%p2718) target = $region56
      $region55: #{basic_block_forward.4} parent=47 // pred_region
        %p2721 = scmp.lt.s32.totalorder %s18, 1
        %s2722 = scalar_select %p2721, %s18, 1
        %s2723 = smul.addr %s2722, 2
        %s2724 = scalar_lea.vmem %s5, %s2723
      $region56: #{basic_block_forward.4} parent=47 // pred_fallthru
        _
    $region48: #{basic_block_forward.4} parent=5 // pred_fallthru
      _
  $region6: #{basic_block_forward.4} parent=0 // loop_footer
    %s16 = sadd.s32 1, %s12
  $region7: #{basic_block_forward.4} parent=0 // loop_footer_branch
    %11 = sbr.rel target = $region3
  $region8: #{basic_block_forward.4} parent=0 // loop_exit
    _

</llo_original>
